<compile_context>
chip_gen: v7x
topology: tpu7x:2x2x1
jax: 0.10.0
libtpu: 0.0.40
codegen_flags: <defaults>
</compile_context>

<pallas_src>
import jax
import jax.numpy as jnp
from jax.experimental import pallas as pl
from jax.experimental.pallas import tpu as pltpu


def autoencoder_kernel(x_ref, w1_ref, w2_ref, w3_ref, o_ref):
    # Fused 3-layer MLP with ReLU after every matmul. bf16 operands on the MXU,
    # f32 accumulation; ReLU/compares stay in f32 (v5e VPU has no bf16 path).
    # The f32 -> bf16 cast of x happens here (in-kernel) so the wrapper never
    # makes a separate HBM pass just to cast.
    x = x_ref[...].astype(jnp.bfloat16)
    h1 = jnp.dot(x, w1_ref[...], preferred_element_type=jnp.float32)
    h1 = jnp.maximum(h1, 0.0)                                   # ReLU (f32)
    h2 = jnp.dot(h1.astype(jnp.bfloat16), w2_ref[...],
                 preferred_element_type=jnp.float32)
    h2 = jnp.maximum(h2, 0.0)                                   # ReLU (f32)
    h3 = jnp.dot(h2.astype(jnp.bfloat16), w3_ref[...],
                 preferred_element_type=jnp.float32)
    h3 = jnp.maximum(h3, 0.0)                                   # ReLU (f32)
    o_ref[...] = h3.astype(o_ref.dtype)


def _num_tensorcores_per_chip():
    """Best-effort detection of TensorCores per chip (v7x has 2, v5e/v6e have 1)."""
    try:
        d = jax.devices()[0]
        return max(1, int(getattr(d, "num_cores", 1) or 1))
    except Exception:
        return 1


def _choose_batch_tile(B, requested, num_cores=1):
    """Pick a sublane-aligned batch tile.

    Single-TC parts (v5e/v6e): just min(requested, B) rounded to a multiple of 8;
    a 1-step grid is fine — no parallelism to be gained by shrinking the tile.
    Multi-TC parts (v7x): shrink the tile (down to 64) until there are >= 4 grid
    steps per core, so the "parallel" axis shards across both cores and each core
    still has enough steps for the double-buffer pipeline to hide DMA.
    """
    if B <= 8:
        return B                       # block dim == full array dim is always legal
    bt = min(requested, (B // 8) * 8)
    bt = max(8, (bt // 8) * 8)
    if num_cores > 1:
        target_steps = 4 * num_cores
        while bt > 64 and pl.cdiv(B, bt) < target_steps:
            bt //= 2
    return bt


def prepare_params(w1, w2, w3, *, d_hid_pad=128):
    """One-time (init-path) weight preparation: 64->128 zero-pad + bf16 cast.

    w1: [1024, 64], w2: [64, 256], w3: [256, 1024] — (in, out) layout.
    Padded h1 lanes are relu(0)=0 and hit zero rows of the padded w2, so the
    math is exactly unchanged. Do this once and reuse the returned arrays.
    """
    d_in, d_hid = w1.shape
    d_mid = w2.shape[1]
    assert w2.shape[0] == d_hid and w3.shape[0] == d_mid
    w1p = jnp.zeros((d_in, d_hid_pad), dtype=jnp.bfloat16).at[:, :d_hid].set(
        w1.astype(jnp.bfloat16))
    w2p = jnp.zeros((d_hid_pad, d_mid), dtype=jnp.bfloat16).at[:d_hid, :].set(
        w2.astype(jnp.bfloat16))
    w3b = w3.astype(jnp.bfloat16)
    return w1p, w2p, w3b


def autoencoder_forward(x, w1p, w2p, w3b, *, batch_tile=256,
                        out_dtype=jnp.float32):
    """x: [B, 1024] (any float dtype, typically f32); weights from prepare_params()."""
    B, D_in = x.shape
    D_hid_pad = w1p.shape[1]     # 128 (padded)
    D_mid = w2p.shape[1]         # 256
    D_out = w3b.shape[1]         # 1024
    assert w1p.shape == (D_in, D_hid_pad)
    assert w2p.shape == (D_hid_pad, D_mid)
    assert w3b.shape == (D_mid, D_out)

    bt = _choose_batch_tile(B, batch_tile, _num_tensorcores_per_chip())
    grid = (pl.cdiv(B, bt),)     # ragged last block handled by Pallas (no jnp.pad)

    flops = 2 * B * (D_in * D_hid_pad + D_hid_pad * D_mid + D_mid * D_out)
    bytes_accessed = (
        x.size * x.dtype.itemsize
        + B * D_out * jnp.dtype(out_dtype).itemsize
        + (w1p.size + w2p.size + w3b.size) * 2
    )

    # VMEM @ bt=256, f32 in/out: ~2 MiB x (dbl-buf) + ~2 MiB out (dbl-buf) +
    # ~1.7 MiB weights + ~1.4 MiB f32 intermediates  => ~7-8 MiB, well under the
    # 32 MiB scoped default on every generation (and v7x's 64 MiB physical VMEM).
    return pl.pallas_call(
        autoencoder_kernel,
        out_shape=jax.ShapeDtypeStruct((B, D_out), out_dtype),
        grid_spec=pltpu.PrefetchScalarGridSpec(
            num_scalar_prefetch=0,
            grid=grid,
            in_specs=[
                # tile the batch dim; weights are small, keep full blocks resident
                # (constant index_map -> not re-DMA'd across grid steps)
                pl.BlockSpec((bt, D_in), lambda i: (i, 0)),
                pl.BlockSpec(w1p.shape, lambda i: (0, 0)),
                pl.BlockSpec(w2p.shape, lambda i: (0, 0)),
                pl.BlockSpec(w3b.shape, lambda i: (0, 0)),
            ],
            out_specs=pl.BlockSpec((bt, D_out), lambda i: (i, 0)),
        ),
        compiler_params=pltpu.CompilerParams(
            dimension_semantics=("parallel",),
        ),
        cost_estimate=pl.CostEstimate(
            flops=int(flops), transcendentals=0,
            bytes_accessed=int(bytes_accessed)),
    )(x, w1p, w2p, w3b)


def make_params(key, dtype=jnp.float32):
    """Deterministic synthetic weights (PyTorch Linear shapes, bias=False).

    PyTorch stores Linear weights as (out_features, in_features); we generate
    in that convention and transpose to (in, out) for the kernel.
    """
    k1, k2, k3 = jax.random.split(key, 3)

    def kaiming_uniform(k, out_f, in_f):
        bound = 1.0 / jnp.sqrt(in_f)
        w = jax.random.uniform(k, (out_f, in_f), dtype=dtype,
                               minval=-bound, maxval=bound)
        return w.T  # -> (in_f, out_f) for y = x @ W

    w1 = kaiming_uniform(k1, 64, 1024)     # layer1:    Linear(1024, 64, bias=False)
    w2 = kaiming_uniform(k2, 256, 64)      # LNL_model: Linear(64, 256, bias=False)
    w3 = kaiming_uniform(k3, 1024, 256)    # layer3:    Linear(256, 1024, bias=False)
    # TODO(synk): original module loads LNL_model weights from a checkpoint
    # (torch.load); here they are synthetic deterministic weights instead.
    return w1, w2, w3


def reference_forward(x, w1, w2, w3):
    """bf16-operand / f32-accumulation reference matching the kernel's numerics."""
    xb = x.astype(jnp.bfloat16)
    w1b, w2b, w3b = (w.astype(jnp.bfloat16) for w in (w1, w2, w3))
    h = jnp.maximum(jnp.dot(xb, w1b, preferred_element_type=jnp.float32), 0.0)
    h = jnp.maximum(jnp.dot(h.astype(jnp.bfloat16), w2b,
                            preferred_element_type=jnp.float32), 0.0)
    h = jnp.maximum(jnp.dot(h.astype(jnp.bfloat16), w3b,
                            preferred_element_type=jnp.float32), 0.0)
    return h


if __name__ == "__main__":
    key = jax.random.PRNGKey(0)
    kx, kp = jax.random.split(key)

    B = 512   # feature dims are fixed by the module (1024 -> 64 -> 256 -> 1024)
    x = jax.random.normal(kx, (B, 1024), dtype=jnp.float32)
    w1, w2, w3 = make_params(kp)

    # One-time weight prep (would live at model init / checkpoint load time).
    w1p, w2p, w3b = prepare_params(w1, w2, w3)
    w1p, w2p, w3b = jax.block_until_ready((w1p, w2p, w3b))

    out = autoencoder_forward(x, w1p, w2p, w3b, batch_tile=256)
    out = jax.block_until_ready(out)

    ref = reference_forward(x, w1, w2, w3)
    assert out.shape == (B, 1024)
    assert out.dtype == jnp.float32
    assert jnp.allclose(out.astype(jnp.float32), ref, atol=2e-2, rtol=2e-2)

    print("KERNEL_OK")
</pallas_src>

<mosaic_0001>
module attributes {stable_mosaic.version = 11 : i64} {
  func.func @autoencoder_kernel(%arg0: i32, %arg1: memref<256x1024xf32, #tpu.memory_space<vmem>>, %arg2: memref<1024x128xbf16, #tpu.memory_space<vmem>>, %arg3: memref<128x256xbf16, #tpu.memory_space<vmem>>, %arg4: memref<256x1024xbf16, #tpu.memory_space<vmem>>, %arg5: memref<256x1024xf32, #tpu.memory_space<vmem>>) attributes {dimension_semantics = [#tpu.dimension_semantics<parallel>], iteration_bounds = array<i64: 2>, scalar_prefetch = 0 : i64, scratch_operands = 0 : i64, tpu.core_type = #tpu.core_type<tc>, window_params = [{transform_indices = @transform_0, window_bounds = array<i64: 256, 1024>}, {pipeline_mode = #tpu.pipeline_mode<synchronous>, transform_indices = @transform_1, window_bounds = array<i64: 1024, 128>}, {pipeline_mode = #tpu.pipeline_mode<synchronous>, transform_indices = @transform_2, window_bounds = array<i64: 128, 256>}, {pipeline_mode = #tpu.pipeline_mode<synchronous>, transform_indices = @transform_3, window_bounds = array<i64: 256, 1024>}, {transform_indices = @transform_4, window_bounds = array<i64: 256, 1024>}]} {
    %c0 = arith.constant 0 : index
    %c0_0 = arith.constant 0 : index
    %0 = vector.load %arg1[%c0, %c0_0] : memref<256x1024xf32, #tpu.memory_space<vmem>>, vector<256x1024xf32>
    %1 = arith.truncf %0 : vector<256x1024xf32> to vector<256x1024xbf16>
    %c0_1 = arith.constant 0 : index
    %c0_2 = arith.constant 0 : index
    %2 = vector.load %arg2[%c0_1, %c0_2] : memref<1024x128xbf16, #tpu.memory_space<vmem>>, vector<1024x128xbf16>
    %cst = arith.constant dense<0.000000e+00> : vector<256x128xf32>
    %3 = tpu.matmul %1, %2, %cst {dimension_numbers = #tpu.dot_dimension_numbers<[1], [0], [0], [1], [0, 0, 1, 1], [], []>} : vector<256x1024xbf16>, vector<1024x128xbf16>, vector<256x128xf32> -> vector<256x128xf32>
    %cst_3 = arith.constant 0.000000e+00 : f32
    %4 = vector.broadcast %cst_3 : f32 to vector<256x128xf32>
    %5 = arith.maximumf %3, %4 : vector<256x128xf32>
    %6 = arith.truncf %5 : vector<256x128xf32> to vector<256x128xbf16>
    %c0_4 = arith.constant 0 : index
    %c0_5 = arith.constant 0 : index
    %7 = vector.load %arg3[%c0_4, %c0_5] : memref<128x256xbf16, #tpu.memory_space<vmem>>, vector<128x256xbf16>
    %cst_6 = arith.constant dense<0.000000e+00> : vector<256x256xf32>
    %8 = tpu.matmul %6, %7, %cst_6 {dimension_numbers = #tpu.dot_dimension_numbers<[1], [0], [0], [1], [0, 0, 1, 1], [], []>} : vector<256x128xbf16>, vector<128x256xbf16>, vector<256x256xf32> -> vector<256x256xf32>
    %cst_7 = arith.constant 0.000000e+00 : f32
    %9 = vector.broadcast %cst_7 : f32 to vector<256x256xf32>
    %10 = arith.maximumf %8, %9 : vector<256x256xf32>
    %11 = arith.truncf %10 : vector<256x256xf32> to vector<256x256xbf16>
    %c0_8 = arith.constant 0 : index
    %c0_9 = arith.constant 0 : index
    %12 = vector.load %arg4[%c0_8, %c0_9] : memref<256x1024xbf16, #tpu.memory_space<vmem>>, vector<256x1024xbf16>
    %cst_10 = arith.constant dense<0.000000e+00> : vector<256x1024xf32>
    %13 = tpu.matmul %11, %12, %cst_10 {dimension_numbers = #tpu.dot_dimension_numbers<[1], [0], [0], [1], [0, 0, 1, 1], [], []>} : vector<256x256xbf16>, vector<256x1024xbf16>, vector<256x1024xf32> -> vector<256x1024xf32>
    %cst_11 = arith.constant 0.000000e+00 : f32
    %14 = vector.broadcast %cst_11 : f32 to vector<256x1024xf32>
    %15 = arith.maximumf %13, %14 : vector<256x1024xf32>
    %c0_12 = arith.constant 0 : index
    %c0_13 = arith.constant 0 : index
    %16 = vector.load %arg5[%c0_12, %c0_13] : memref<256x1024xf32, #tpu.memory_space<vmem>>, vector<256x1024xf32>
    tpu.vector_store %arg5[%c0_12, %c0_13], %15 {strides = array<i32>} : memref<256x1024xf32, #tpu.memory_space<vmem>>, vector<256x1024xf32>,
    return
  }
  func.func @transform_0(%arg0: i32) -> (i32, i32) {
    %c0_i32 = arith.constant 0 : i32
    %c0_i32_0 = arith.constant 0 : i32
    return %arg0, %c0_i32 : i32, i32
  }
  func.func @transform_1(%arg0: i32) -> (i32, i32) {
    %c0_i32 = arith.constant 0 : i32
    %c0_i32_0 = arith.constant 0 : i32
    %c0_i32_1 = arith.constant 0 : i32
    return %c0_i32, %c0_i32_0 : i32, i32
  }
  func.func @transform_2(%arg0: i32) -> (i32, i32) {
    %c0_i32 = arith.constant 0 : i32
    %c0_i32_0 = arith.constant 0 : i32
    %c0_i32_1 = arith.constant 0 : i32
    return %c0_i32, %c0_i32_0 : i32, i32
  }
  func.func @transform_3(%arg0: i32) -> (i32, i32) {
    %c0_i32 = arith.constant 0 : i32
    %c0_i32_0 = arith.constant 0 : i32
    %c0_i32_1 = arith.constant 0 : i32
    return %c0_i32, %c0_i32_0 : i32, i32
  }
  func.func @transform_4(%arg0: i32) -> (i32, i32) {
    %c0_i32 = arith.constant 0 : i32
    %c0_i32_0 = arith.constant 0 : i32
    return %arg0, %c0_i32 : i32, i32
  }
}

</mosaic_0001>

<llo_original>
// kernel: tpu_custom_call.1
$region0: #{tpu_custom_call.1}
  #allocation0 [shape = 'u32[]', space=smem, size = 0x4, offset = 0x4, fixed_abs, tag = 'smem constant byte address 0x4 - core index']
  #allocation1 [shape = 'u32[144,128]{1,0:T(1,128)}', space=vmem, size = 0x12000, scoped, tag = 'internal scratch']
  %s0 = inlined_call_operand.hbm [shape: f32[512,1024], index: 0, kind: input, shape index: {}]
  %s1 = inlined_call_operand.hbm [shape: bf16[1024,128], index: 1, kind: input, shape index: {}]
  %s2 = inlined_call_operand.hbm [shape: bf16[128,256], index: 2, kind: input, shape index: {}]
  %s3 = inlined_call_operand.hbm [shape: bf16[256,1024], index: 3, kind: input, shape index: {}]
  %s4 = inlined_call_operand.hbm [shape: f32[512,1024], index: 4, kind: output, shape index: {}]
  %s5 = sld [smem:[#allocation0]]
  $region65: #{tpu_custom_call.1} parent=0
    _
  %s7 = ssub.s32 1, %s5
  %s8 = scalar_select 0, %s7, %s5
  $region1: #{tpu_custom_call.1} parent=0
    #allocation2 [shape = 'u8[2097152]{0}', space=vmem, size = 0x200000, scoped, tag = 'input window, operand 0']
    #allocation3 [shape = 's32[2]{0}', space=sflag, size = 0x8, scoped, tag = 'scoped memory for tpu_custom_call.1']
    #allocation4 [shape = 's32[2]{0}', space=sflag, size = 0x8, scoped, tag = 'scoped memory for tpu_custom_call.1']
    #allocation5 [shape = 'u8[262144]{0}', space=vmem, size = 0x40000, scoped, tag = 'input window, operand 1, single buffered']
    #allocation6 [shape = 's32[1]{0}', space=sflag, size = 0x4, scoped, tag = 'scoped memory for tpu_custom_call.1']
    #allocation7 [shape = 'u8[65536]{0}', space=vmem, size = 0x10000, scoped, tag = 'input window, operand 2, single buffered']
    #allocation8 [shape = 'u8[524288]{0}', space=vmem, size = 0x80000, scoped, tag = 'input window, operand 3, single buffered']
    #allocation9 [shape = 's32[1]{0}', space=sflag, size = 0x4, scoped, tag = 'scoped memory for tpu_custom_call.1']
    #allocation10 [shape = 'u8[2097152]{0}', space=vmem, size = 0x200000, scoped, tag = 'output window, operand 0']
    %9 = vsyncpa [#allocation3], 0
    %s10 = scalar_lea.sflag [#allocation3], 1
    %11 = vsyncpa %s10, 0
    %12 = vsyncpa [#allocation6], 0
    %13 = vsyncpa [#allocation9], 0
    %14 = vsyncpa [#allocation4], 0
    %s15 = scalar_lea.sflag [#allocation4], 1
    %16 = vsyncpa %s15, 0
    loop: start=0, step=1, limit=4
    $region2: #{tpu_custom_call.1} parent=1 // loop_pre_header
      _
    $region3: #{tpu_custom_call.1} parent=1 // loop_header
      %s18 = sphi 0, %s22
      %p19 = scmp.ge.s32.totalorder %s18, 4
      %s28 = sphi 0, %s30
      %s31 = sphi 0, %s28
      %s32 = sphi 0, %s31
      %s48 = sphi 0, %s32
      %s52 = sphi 0, %s52
      %s54 = sphi 0, %s52
      %s55 = sphi 0, %s54
      %s69 = sphi 0, %s55
      %s73 = sphi 0, %s73
      %s75 = sphi 0, %s73
      %s76 = sphi 0, %s75
      %s90 = sphi 0, %s76
      %s94 = sphi 0, %s94
      %s96 = sphi 0, %s94
      %s97 = sphi 0, %s96
      %s111 = sphi 0, %s97
      %s117 = sphi 0, %s119
      %s120 = sphi 0, %s117
      %s121 = sphi 0, %s120
      %s137 = sphi 0, %s121
    $region4: #{tpu_custom_call.1} parent=1 // loop_header_branch
      %21 = sbr.rel (%p19) target = $region8
    $region5: #{tpu_custom_call.1} parent=1 // loop_body
      %s23 = ssub.s32 %s18, 1
      %s24 = ssub.s32 %s18, 2
      %s25 = sadd.s32 %s18, 1
      %s26 = ssub.s32 %s18, %s25
      %p27 = scmp.eq.s32.totalorder %s26, 0
      %s29 = sadd.s32 %s28, 1
      %s30 = scalar_select %p27, %s28, %s29
      %p33 = pneg %p27
      %p34 = scmp.eq.s32.totalorder %s18, 1
      %p35 = por %p33, %p34
      %p36 = scmp.ne.s32.totalorder %s28, %s31
      %p37 = scmp.eq.s32.totalorder %s18, 0
      %p38 = por %p36, %p37
      %p39 = scmp.ne.s32.totalorder %s28, %s31
      %p40 = scmp.eq.s32.totalorder %s23, 1
      %p41 = por %p39, %p40
      %p42 = scmp.ne.s32.totalorder %s31, %s32
      %p43 = scmp.eq.s32.totalorder %s23, 0
      %p44 = por %p42, %p43
      %p45 = scmp.ne.s32.totalorder %s31, %s32
      %p46 = scmp.eq.s32.totalorder %s24, 1
      %p47 = por %p45, %p46
      %p49 = scmp.ne.s32.totalorder %s32, %s48
      %p50 = scmp.eq.s32.totalorder %s24, 0
      %p51 = por %p49, %p50
      %s53 = sadd.s32 %s52, 1
      %p56 = scmp.eq.s32.totalorder %s18, 1
      %p57 = scmp.ne.s32.totalorder %s52, %s54
      %p58 = scmp.eq.s32.totalorder %s18, 0
      %p59 = por %p57, %p58
      %p60 = scmp.ne.s32.totalorder %s52, %s54
      %p61 = scmp.eq.s32.totalorder %s23, 1
      %p62 = por %p60, %p61
      %p63 = scmp.ne.s32.totalorder %s54, %s55
      %p64 = scmp.eq.s32.totalorder %s23, 0
      %p65 = por %p63, %p64
      %p66 = scmp.ne.s32.totalorder %s54, %s55
      %p67 = scmp.eq.s32.totalorder %s24, 1
      %p68 = por %p66, %p67
      %p70 = scmp.ne.s32.totalorder %s55, %s69
      %p71 = scmp.eq.s32.totalorder %s24, 0
      %p72 = por %p70, %p71
      %s74 = sadd.s32 %s73, 1
      %p77 = scmp.eq.s32.totalorder %s18, 1
      %p78 = scmp.ne.s32.totalorder %s73, %s75
      %p79 = scmp.eq.s32.totalorder %s18, 0
      %p80 = por %p78, %p79
      %p81 = scmp.ne.s32.totalorder %s73, %s75
      %p82 = scmp.eq.s32.totalorder %s23, 1
      %p83 = por %p81, %p82
      %p84 = scmp.ne.s32.totalorder %s75, %s76
      %p85 = scmp.eq.s32.totalorder %s23, 0
      %p86 = por %p84, %p85
      %p87 = scmp.ne.s32.totalorder %s75, %s76
      %p88 = scmp.eq.s32.totalorder %s24, 1
      %p89 = por %p87, %p88
      %p91 = scmp.ne.s32.totalorder %s76, %s90
      %p92 = scmp.eq.s32.totalorder %s24, 0
      %p93 = por %p91, %p92
      %s95 = sadd.s32 %s94, 1
      %p98 = scmp.eq.s32.totalorder %s18, 1
      %p99 = scmp.ne.s32.totalorder %s94, %s96
      %p100 = scmp.eq.s32.totalorder %s18, 0
      %p101 = por %p99, %p100
      %p102 = scmp.ne.s32.totalorder %s94, %s96
      %p103 = scmp.eq.s32.totalorder %s23, 1
      %p104 = por %p102, %p103
      %p105 = scmp.ne.s32.totalorder %s96, %s97
      %p106 = scmp.eq.s32.totalorder %s23, 0
      %p107 = por %p105, %p106
      %p108 = scmp.ne.s32.totalorder %s96, %s97
      %p109 = scmp.eq.s32.totalorder %s24, 1
      %p110 = por %p108, %p109
      %p112 = scmp.ne.s32.totalorder %s97, %s111
      %p113 = scmp.eq.s32.totalorder %s24, 0
      %p114 = por %p112, %p113
      %s115 = ssub.s32 %s18, %s25
      %p116 = scmp.eq.s32.totalorder %s115, 0
      %s118 = sadd.s32 %s117, 1
      %s119 = scalar_select %p116, %s117, %s118
      %p122 = pneg %p116
      %p123 = scmp.eq.s32.totalorder %s18, 1
      %p124 = por %p122, %p123
      %p125 = scmp.ne.s32.totalorder %s117, %s120
      %p126 = scmp.eq.s32.totalorder %s18, 0
      %p127 = por %p125, %p126
      %p128 = scmp.ne.s32.totalorder %s117, %s120
      %p129 = scmp.eq.s32.totalorder %s23, 1
      %p130 = por %p128, %p129
      %p131 = scmp.ne.s32.totalorder %s120, %s121
      %p132 = scmp.eq.s32.totalorder %s23, 0
      %p133 = por %p131, %p132
      %p134 = scmp.ne.s32.totalorder %s120, %s121
      %p135 = scmp.eq.s32.totalorder %s24, 1
      %p136 = por %p134, %p135
      %p138 = scmp.ne.s32.totalorder %s121, %s137
      %p139 = scmp.eq.s32.totalorder %s24, 0
      %p140 = por %p138, %p139
      %p141 = scmp.le.s32.totalorder 1, %s18
      %p142 = scmp.lt.s32.totalorder %s18, 3
      %p143 = pnand %p141, %p142
      %p144 = pneg %p143
      // Predicated region
      $region9: #{tpu_custom_call.1} parent=5 // pred_check
        _
      $region10: #{tpu_custom_call.1} parent=5 // pred_check_branch
        %146 = sbr.rel (%p143) target = $region12
      $region11: #{tpu_custom_call.1} parent=5 // pred_region
        %s147 = ssub.s32 %s18, 1
        // Predicated region
        $region13: #{tpu_custom_call.1} parent=11 // pred_check
          %p148 = pneg %p65
        $region14: #{tpu_custom_call.1} parent=11 // pred_check_branch
          %150 = sbr.rel (%p148) target = $region16
        $region15: #{tpu_custom_call.1} parent=11 // pred_region
          %s152 = ssub.s32 8192, 8192
          %153 = vsyncadd [#allocation6], %s152
          %s154 = sshll.u32 [#allocation5], 4
          %s155 = int_to_ptr.vmem [resolvable:$true] %s154
          %160 = dma.hbm_to_vmem [thread:$0]  %s1, 8192, %s155, [#allocation6], 64, 64, 4
        $region16: #{tpu_custom_call.1} parent=11 // pred_fallthru
          _
        // Predicated region
        $region17: #{tpu_custom_call.1} parent=11 // pred_check
          %p161 = pneg %p86
        $region18: #{tpu_custom_call.1} parent=11 // pred_check_branch
          %163 = sbr.rel (%p161) target = $region20
        $region19: #{tpu_custom_call.1} parent=11 // pred_region
          %s165 = ssub.s32 2048, 2048
          %166 = vsyncadd [#allocation6], %s165
          %s167 = sshll.u32 [#allocation7], 4
          %s168 = int_to_ptr.vmem [resolvable:$true] %s167
          %173 = dma.hbm_to_vmem [thread:$0]  %s2, 2048, %s168, [#allocation6], 128, 128, 8
        $region20: #{tpu_custom_call.1} parent=11 // pred_fallthru
          _
        // Predicated region
        $region21: #{tpu_custom_call.1} parent=11 // pred_check
          %p174 = pneg %p107
        $region22: #{tpu_custom_call.1} parent=11 // pred_check_branch
          %176 = sbr.rel (%p174) target = $region24
        $region23: #{tpu_custom_call.1} parent=11 // pred_region
          %s178 = ssub.s32 16384, 16384
          %179 = vsyncadd [#allocation9], %s178
          %s180 = sshll.u32 [#allocation8], 4
          %s181 = int_to_ptr.vmem [resolvable:$true] %s180
          %186 = dma.hbm_to_vmem [thread:$0]  %s3, 16384, %s181, [#allocation9], 512, 512, 32
        $region24: #{tpu_custom_call.1} parent=11 // pred_fallthru
          _
      $region12: #{tpu_custom_call.1} parent=5 // pred_fallthru
        _
      %p187 = scmp.lt.s32.totalorder %s18, 2
      // Predicated region
      $region25: #{tpu_custom_call.1} parent=5 // pred_check
        %p188 = pneg %p187
      $region26: #{tpu_custom_call.1} parent=5 // pred_check_branch
        %190 = sbr.rel (%p188) target = $region28
      $region27: #{tpu_custom_call.1} parent=5 // pred_region
        // Predicated region
        $region29: #{tpu_custom_call.1} parent=27 // pred_check
          %p191 = pneg %p38
        $region30: #{tpu_custom_call.1} parent=27 // pred_check_branch
          %193 = sbr.rel (%p191) target = $region32
        $region31: #{tpu_custom_call.1} parent=27 // pred_region
          %s194 = sand.u32 %s28, 1
          %s195 = scalar_lea.sflag [#allocation3], %s194
          %s196 = sand.u32 %s28, 1
          %s197 = smul.addr %s196, 2048
          %s198 = scalar_lea.vmem [#allocation2], %s197
          %s199 = smul.u32 32, %s18
          %s201 = ssub.s32 32768, 32768
          %202 = vsyncadd %s195, %s201
          %s203 = smul.addr %s199, 8
          %s204 = smul.addr %s203, 128
          %s205 = scalar_lea.hbm %s0, %s204
          %s206 = sshll.u32 %s198, 4
          %s207 = int_to_ptr.vmem [resolvable:$true] %s206
          %212 = dma.hbm_to_vmem [thread:$0]  %s205, 32768, %s207, %s195, 1024, 1024, 64
        $region32: #{tpu_custom_call.1} parent=27 // pred_fallthru
          _
      $region28: #{tpu_custom_call.1} parent=5 // pred_fallthru
        _
      %p213 = scmp.le.s32.totalorder 1, %s18
      %p214 = scmp.lt.s32.totalorder %s18, 3
      %p215 = pnand %p213, %p214
      %p216 = pneg %p215
      // Predicated region
      $region33: #{tpu_custom_call.1} parent=5 // pred_check
        _
      $region34: #{tpu_custom_call.1} parent=5 // pred_check_branch
        %218 = sbr.rel (%p215) target = $region36
      $region35: #{tpu_custom_call.1} parent=5 // pred_region
        %s219 = ssub.s32 %s18, 1
        %s220 = sand.u32 %s31, 1
        %s221 = scalar_lea.sflag [#allocation3], %s220
        %s222 = sand.u32 %s31, 1
        %s223 = smul.addr %s222, 2048
        %s224 = scalar_lea.vmem [#allocation2], %s223
        // Predicated region
        $region37: #{tpu_custom_call.1} parent=35 // pred_check
          %p225 = pneg %p44
        $region38: #{tpu_custom_call.1} parent=35 // pred_check_branch
          %227 = sbr.rel (%p225) target = $region40
        $region39: #{tpu_custom_call.1} parent=35 // pred_region
          %228 = dma.done %s221, 32768
        $region40: #{tpu_custom_call.1} parent=35 // pred_fallthru
          _
        // Predicated region
        $region41: #{tpu_custom_call.1} parent=35 // pred_check
          %p229 = pneg %p65
        $region42: #{tpu_custom_call.1} parent=35 // pred_check_branch
          %231 = sbr.rel (%p229) target = $region44
        $region43: #{tpu_custom_call.1} parent=35 // pred_region
          %232 = dma.done [#allocation6], 8192
        $region44: #{tpu_custom_call.1} parent=35 // pred_fallthru
          _
        // Predicated region
        $region45: #{tpu_custom_call.1} parent=35 // pred_check
          %p233 = pneg %p86
        $region46: #{tpu_custom_call.1} parent=35 // pred_check_branch
          %235 = sbr.rel (%p233) target = $region48
        $region47: #{tpu_custom_call.1} parent=35 // pred_region
          %236 = dma.done [#allocation6], 2048
        $region48: #{tpu_custom_call.1} parent=35 // pred_fallthru
          _
        // Predicated region
        $region49: #{tpu_custom_call.1} parent=35 // pred_check
          %p237 = pneg %p107
        $region50: #{tpu_custom_call.1} parent=35 // pred_check_branch
          %239 = sbr.rel (%p237) target = $region52
        $region51: #{tpu_custom_call.1} parent=35 // pred_region
          %240 = dma.done [#allocation9], 16384
        $region52: #{tpu_custom_call.1} parent=35 // pred_fallthru
          _
        %s241 = sand.u32 %s31, 1
        %s242 = scalar_lea.sflag [#allocation3], %s241
        %s243 = sand.u32 %s31, 1
        %s244 = smul.addr %s243, 2048
        %s245 = scalar_lea.vmem [#allocation2], %s244
        %p246 = pneg %p44
        %p247 = pneg %p41
        %p248 = pneg %p65
        %p249 = pneg %p62
        %p250 = pneg %p86
        %p251 = pneg %p83
        %p252 = pneg %p107
        %p253 = pneg %p104
        %p254 = pneg %p133
        %p255 = pneg %p130
        %s256 = sand.u32 %s120, 1
        %s257 = scalar_lea.sflag [#allocation4], %s256
        %s258 = sand.u32 %s120, 1
        %s259 = smul.addr %s258, 2048
        %s260 = scalar_lea.vmem [#allocation10], %s259
        %s261 = smul.u32 32, %s23
        %s262 = smul.u32 32, %s23
        %v264 = vld [vmem:[%s224] sm:$0xff]
        %v265 = vld [vmem:[%s224 + $0x8] sm:$0xff]
        %v266 = vld [vmem:[%s224 + $0x10] sm:$0xff]
        %v267 = vld [vmem:[%s224 + $0x18] sm:$0xff]
        %v268 = vld [vmem:[%s224 + $0x20] sm:$0xff]
        %v269 = vld [vmem:[%s224 + $0x28] sm:$0xff]
        %v270 = vld [vmem:[%s224 + $0x30] sm:$0xff]
        %v271 = vld [vmem:[%s224 + $0x38] sm:$0xff]
        %v272 = vld [vmem:[%s224 + $0x40] sm:$0xff]
        %v273 = vld [vmem:[%s224 + $0x48] sm:$0xff]
        %v274 = vld [vmem:[%s224 + $0x50] sm:$0xff]
        %v275 = vld [vmem:[%s224 + $0x58] sm:$0xff]
        %v276 = vld [vmem:[%s224 + $0x60] sm:$0xff]
        %v277 = vld [vmem:[%s224 + $0x68] sm:$0xff]
        %v278 = vld [vmem:[%s224 + $0x70] sm:$0xff]
        %v279 = vld [vmem:[%s224 + $0x78] sm:$0xff]
        %v280 = vld [vmem:[%s224 + $0x80] sm:$0xff]
        %v281 = vld [vmem:[%s224 + $0x88] sm:$0xff]
        %v282 = vld [vmem:[%s224 + $0x90] sm:$0xff]
        %v283 = vld [vmem:[%s224 + $0x98] sm:$0xff]
        %v284 = vld [vmem:[%s224 + $0xa0] sm:$0xff]
        %v285 = vld [vmem:[%s224 + $0xa8] sm:$0xff]
        %v286 = vld [vmem:[%s224 + $0xb0] sm:$0xff]
        %v287 = vld [vmem:[%s224 + $0xb8] sm:$0xff]
        %v288 = vld [vmem:[%s224 + $0xc0] sm:$0xff]
        %v289 = vld [vmem:[%s224 + $0xc8] sm:$0xff]
        %v290 = vld [vmem:[%s224 + $0xd0] sm:$0xff]
        %v291 = vld [vmem:[%s224 + $0xd8] sm:$0xff]
        %v292 = vld [vmem:[%s224 + $0xe0] sm:$0xff]
        %v293 = vld [vmem:[%s224 + $0xe8] sm:$0xff]
        %v294 = vld [vmem:[%s224 + $0xf0] sm:$0xff]
        %v295 = vld [vmem:[%s224 + $0xf8] sm:$0xff]
        %v296 = vld [vmem:[%s224 + $0x100] sm:$0xff]
        %v297 = vld [vmem:[%s224 + $0x108] sm:$0xff]
        %v298 = vld [vmem:[%s224 + $0x110] sm:$0xff]
        %v299 = vld [vmem:[%s224 + $0x118] sm:$0xff]
        %v300 = vld [vmem:[%s224 + $0x120] sm:$0xff]
        %v301 = vld [vmem:[%s224 + $0x128] sm:$0xff]
        %v302 = vld [vmem:[%s224 + $0x130] sm:$0xff]
        %v303 = vld [vmem:[%s224 + $0x138] sm:$0xff]
        %v304 = vld [vmem:[%s224 + $0x140] sm:$0xff]
        %v305 = vld [vmem:[%s224 + $0x148] sm:$0xff]
        %v306 = vld [vmem:[%s224 + $0x150] sm:$0xff]
        %v307 = vld [vmem:[%s224 + $0x158] sm:$0xff]
        %v308 = vld [vmem:[%s224 + $0x160] sm:$0xff]
        %v309 = vld [vmem:[%s224 + $0x168] sm:$0xff]
        %v310 = vld [vmem:[%s224 + $0x170] sm:$0xff]
        %v311 = vld [vmem:[%s224 + $0x178] sm:$0xff]
        %v312 = vld [vmem:[%s224 + $0x180] sm:$0xff]
        %v313 = vld [vmem:[%s224 + $0x188] sm:$0xff]
        %v314 = vld [vmem:[%s224 + $0x190] sm:$0xff]
        %v315 = vld [vmem:[%s224 + $0x198] sm:$0xff]
        %v316 = vld [vmem:[%s224 + $0x1a0] sm:$0xff]
        %v317 = vld [vmem:[%s224 + $0x1a8] sm:$0xff]
        %v318 = vld [vmem:[%s224 + $0x1b0] sm:$0xff]
        %v319 = vld [vmem:[%s224 + $0x1b8] sm:$0xff]
        %v320 = vld [vmem:[%s224 + $0x1c0] sm:$0xff]
        %v321 = vld [vmem:[%s224 + $0x1c8] sm:$0xff]
        %v322 = vld [vmem:[%s224 + $0x1d0] sm:$0xff]
        %v323 = vld [vmem:[%s224 + $0x1d8] sm:$0xff]
        %v324 = vld [vmem:[%s224 + $0x1e0] sm:$0xff]
        %v325 = vld [vmem:[%s224 + $0x1e8] sm:$0xff]
        %v326 = vld [vmem:[%s224 + $0x1f0] sm:$0xff]
        %v327 = vld [vmem:[%s224 + $0x1f8] sm:$0xff]
        %v328 = vld [vmem:[%s224 + $0x200] sm:$0xff]
        %v329 = vld [vmem:[%s224 + $0x208] sm:$0xff]
        %v330 = vld [vmem:[%s224 + $0x210] sm:$0xff]
        %v331 = vld [vmem:[%s224 + $0x218] sm:$0xff]
        %v332 = vld [vmem:[%s224 + $0x220] sm:$0xff]
        %v333 = vld [vmem:[%s224 + $0x228] sm:$0xff]
        %v334 = vld [vmem:[%s224 + $0x230] sm:$0xff]
        %v335 = vld [vmem:[%s224 + $0x238] sm:$0xff]
        %v336 = vld [vmem:[%s224 + $0x240] sm:$0xff]
        %v337 = vld [vmem:[%s224 + $0x248] sm:$0xff]
        %v338 = vld [vmem:[%s224 + $0x250] sm:$0xff]
        %v339 = vld [vmem:[%s224 + $0x258] sm:$0xff]
        %v340 = vld [vmem:[%s224 + $0x260] sm:$0xff]
        %v341 = vld [vmem:[%s224 + $0x268] sm:$0xff]
        %v342 = vld [vmem:[%s224 + $0x270] sm:$0xff]
        %v343 = vld [vmem:[%s224 + $0x278] sm:$0xff]
        %v344 = vld [vmem:[%s224 + $0x280] sm:$0xff]
        %v345 = vld [vmem:[%s224 + $0x288] sm:$0xff]
        %v346 = vld [vmem:[%s224 + $0x290] sm:$0xff]
        %v347 = vld [vmem:[%s224 + $0x298] sm:$0xff]
        %v348 = vld [vmem:[%s224 + $0x2a0] sm:$0xff]
        %v349 = vld [vmem:[%s224 + $0x2a8] sm:$0xff]
        %v350 = vld [vmem:[%s224 + $0x2b0] sm:$0xff]
        %v351 = vld [vmem:[%s224 + $0x2b8] sm:$0xff]
        %v352 = vld [vmem:[%s224 + $0x2c0] sm:$0xff]
        %v353 = vld [vmem:[%s224 + $0x2c8] sm:$0xff]
        %v354 = vld [vmem:[%s224 + $0x2d0] sm:$0xff]
        %v355 = vld [vmem:[%s224 + $0x2d8] sm:$0xff]
        %v356 = vld [vmem:[%s224 + $0x2e0] sm:$0xff]
        %v357 = vld [vmem:[%s224 + $0x2e8] sm:$0xff]
        %v358 = vld [vmem:[%s224 + $0x2f0] sm:$0xff]
        %v359 = vld [vmem:[%s224 + $0x2f8] sm:$0xff]
        %v360 = vld [vmem:[%s224 + $0x300] sm:$0xff]
        %v361 = vld [vmem:[%s224 + $0x308] sm:$0xff]
        %v362 = vld [vmem:[%s224 + $0x310] sm:$0xff]
        %v363 = vld [vmem:[%s224 + $0x318] sm:$0xff]
        %v364 = vld [vmem:[%s224 + $0x320] sm:$0xff]
        %v365 = vld [vmem:[%s224 + $0x328] sm:$0xff]
        %v366 = vld [vmem:[%s224 + $0x330] sm:$0xff]
        %v367 = vld [vmem:[%s224 + $0x338] sm:$0xff]
        %v368 = vld [vmem:[%s224 + $0x340] sm:$0xff]
        %v369 = vld [vmem:[%s224 + $0x348] sm:$0xff]
        %v370 = vld [vmem:[%s224 + $0x350] sm:$0xff]
        %v371 = vld [vmem:[%s224 + $0x358] sm:$0xff]
        %v372 = vld [vmem:[%s224 + $0x360] sm:$0xff]
        %v373 = vld [vmem:[%s224 + $0x368] sm:$0xff]
        %v374 = vld [vmem:[%s224 + $0x370] sm:$0xff]
        %v375 = vld [vmem:[%s224 + $0x378] sm:$0xff]
        %v376 = vld [vmem:[%s224 + $0x380] sm:$0xff]
        %v377 = vld [vmem:[%s224 + $0x388] sm:$0xff]
        %v378 = vld [vmem:[%s224 + $0x390] sm:$0xff]
        %v379 = vld [vmem:[%s224 + $0x398] sm:$0xff]
        %v380 = vld [vmem:[%s224 + $0x3a0] sm:$0xff]
        %v381 = vld [vmem:[%s224 + $0x3a8] sm:$0xff]
        %v382 = vld [vmem:[%s224 + $0x3b0] sm:$0xff]
        %v383 = vld [vmem:[%s224 + $0x3b8] sm:$0xff]
        %v384 = vld [vmem:[%s224 + $0x3c0] sm:$0xff]
        %v385 = vld [vmem:[%s224 + $0x3c8] sm:$0xff]
        %v386 = vld [vmem:[%s224 + $0x3d0] sm:$0xff]
        %v387 = vld [vmem:[%s224 + $0x3d8] sm:$0xff]
        %v388 = vld [vmem:[%s224 + $0x3e0] sm:$0xff]
        %v389 = vld [vmem:[%s224 + $0x3e8] sm:$0xff]
        %v390 = vld [vmem:[%s224 + $0x3f0] sm:$0xff]
        %v391 = vld [vmem:[%s224 + $0x3f8] sm:$0xff]
        %v392 = vld [vmem:[%s224 + $0x400] sm:$0xff]
        %v393 = vld [vmem:[%s224 + $0x408] sm:$0xff]
        %v394 = vld [vmem:[%s224 + $0x410] sm:$0xff]
        %v395 = vld [vmem:[%s224 + $0x418] sm:$0xff]
        %v396 = vld [vmem:[%s224 + $0x420] sm:$0xff]
        %v397 = vld [vmem:[%s224 + $0x428] sm:$0xff]
        %v398 = vld [vmem:[%s224 + $0x430] sm:$0xff]
        %v399 = vld [vmem:[%s224 + $0x438] sm:$0xff]
        %v400 = vld [vmem:[%s224 + $0x440] sm:$0xff]
        %v401 = vld [vmem:[%s224 + $0x448] sm:$0xff]
        %v402 = vld [vmem:[%s224 + $0x450] sm:$0xff]
        %v403 = vld [vmem:[%s224 + $0x458] sm:$0xff]
        %v404 = vld [vmem:[%s224 + $0x460] sm:$0xff]
        %v405 = vld [vmem:[%s224 + $0x468] sm:$0xff]
        %v406 = vld [vmem:[%s224 + $0x470] sm:$0xff]
        %v407 = vld [vmem:[%s224 + $0x478] sm:$0xff]
        %v408 = vld [vmem:[%s224 + $0x480] sm:$0xff]
        %v409 = vld [vmem:[%s224 + $0x488] sm:$0xff]
        %v410 = vld [vmem:[%s224 + $0x490] sm:$0xff]
        %v411 = vld [vmem:[%s224 + $0x498] sm:$0xff]
        %v412 = vld [vmem:[%s224 + $0x4a0] sm:$0xff]
        %v413 = vld [vmem:[%s224 + $0x4a8] sm:$0xff]
        %v414 = vld [vmem:[%s224 + $0x4b0] sm:$0xff]
        %v415 = vld [vmem:[%s224 + $0x4b8] sm:$0xff]
        %v416 = vld [vmem:[%s224 + $0x4c0] sm:$0xff]
        %v417 = vld [vmem:[%s224 + $0x4c8] sm:$0xff]
        %v418 = vld [vmem:[%s224 + $0x4d0] sm:$0xff]
        %v419 = vld [vmem:[%s224 + $0x4d8] sm:$0xff]
        %v420 = vld [vmem:[%s224 + $0x4e0] sm:$0xff]
        %v421 = vld [vmem:[%s224 + $0x4e8] sm:$0xff]
        %v422 = vld [vmem:[%s224 + $0x4f0] sm:$0xff]
        %v423 = vld [vmem:[%s224 + $0x4f8] sm:$0xff]
        %v424 = vld [vmem:[%s224 + $0x500] sm:$0xff]
        %v425 = vld [vmem:[%s224 + $0x508] sm:$0xff]
        %v426 = vld [vmem:[%s224 + $0x510] sm:$0xff]
        %v427 = vld [vmem:[%s224 + $0x518] sm:$0xff]
        %v428 = vld [vmem:[%s224 + $0x520] sm:$0xff]
        %v429 = vld [vmem:[%s224 + $0x528] sm:$0xff]
        %v430 = vld [vmem:[%s224 + $0x530] sm:$0xff]
        %v431 = vld [vmem:[%s224 + $0x538] sm:$0xff]
        %v432 = vld [vmem:[%s224 + $0x540] sm:$0xff]
        %v433 = vld [vmem:[%s224 + $0x548] sm:$0xff]
        %v434 = vld [vmem:[%s224 + $0x550] sm:$0xff]
        %v435 = vld [vmem:[%s224 + $0x558] sm:$0xff]
        %v436 = vld [vmem:[%s224 + $0x560] sm:$0xff]
        %v437 = vld [vmem:[%s224 + $0x568] sm:$0xff]
        %v438 = vld [vmem:[%s224 + $0x570] sm:$0xff]
        %v439 = vld [vmem:[%s224 + $0x578] sm:$0xff]
        %v440 = vld [vmem:[%s224 + $0x580] sm:$0xff]
        %v441 = vld [vmem:[%s224 + $0x588] sm:$0xff]
        %v442 = vld [vmem:[%s224 + $0x590] sm:$0xff]
        %v443 = vld [vmem:[%s224 + $0x598] sm:$0xff]
        %v444 = vld [vmem:[%s224 + $0x5a0] sm:$0xff]
        %v445 = vld [vmem:[%s224 + $0x5a8] sm:$0xff]
        %v446 = vld [vmem:[%s224 + $0x5b0] sm:$0xff]
        %v447 = vld [vmem:[%s224 + $0x5b8] sm:$0xff]
        %v448 = vld [vmem:[%s224 + $0x5c0] sm:$0xff]
        %v449 = vld [vmem:[%s224 + $0x5c8] sm:$0xff]
        %v450 = vld [vmem:[%s224 + $0x5d0] sm:$0xff]
        %v451 = vld [vmem:[%s224 + $0x5d8] sm:$0xff]
        %v452 = vld [vmem:[%s224 + $0x5e0] sm:$0xff]
        %v453 = vld [vmem:[%s224 + $0x5e8] sm:$0xff]
        %v454 = vld [vmem:[%s224 + $0x5f0] sm:$0xff]
        %v455 = vld [vmem:[%s224 + $0x5f8] sm:$0xff]
        %v456 = vld [vmem:[%s224 + $0x600] sm:$0xff]
        %v457 = vld [vmem:[%s224 + $0x608] sm:$0xff]
        %v458 = vld [vmem:[%s224 + $0x610] sm:$0xff]
        %v459 = vld [vmem:[%s224 + $0x618] sm:$0xff]
        %v460 = vld [vmem:[%s224 + $0x620] sm:$0xff]
        %v461 = vld [vmem:[%s224 + $0x628] sm:$0xff]
        %v462 = vld [vmem:[%s224 + $0x630] sm:$0xff]
        %v463 = vld [vmem:[%s224 + $0x638] sm:$0xff]
        %v464 = vld [vmem:[%s224 + $0x640] sm:$0xff]
        %v465 = vld [vmem:[%s224 + $0x648] sm:$0xff]
        %v466 = vld [vmem:[%s224 + $0x650] sm:$0xff]
        %v467 = vld [vmem:[%s224 + $0x658] sm:$0xff]
        %v468 = vld [vmem:[%s224 + $0x660] sm:$0xff]
        %v469 = vld [vmem:[%s224 + $0x668] sm:$0xff]
        %v470 = vld [vmem:[%s224 + $0x670] sm:$0xff]
        %v471 = vld [vmem:[%s224 + $0x678] sm:$0xff]
        %v472 = vld [vmem:[%s224 + $0x680] sm:$0xff]
        %v473 = vld [vmem:[%s224 + $0x688] sm:$0xff]
        %v474 = vld [vmem:[%s224 + $0x690] sm:$0xff]
        %v475 = vld [vmem:[%s224 + $0x698] sm:$0xff]
        %v476 = vld [vmem:[%s224 + $0x6a0] sm:$0xff]
        %v477 = vld [vmem:[%s224 + $0x6a8] sm:$0xff]
        %v478 = vld [vmem:[%s224 + $0x6b0] sm:$0xff]
        %v479 = vld [vmem:[%s224 + $0x6b8] sm:$0xff]
        %v480 = vld [vmem:[%s224 + $0x6c0] sm:$0xff]
        %v481 = vld [vmem:[%s224 + $0x6c8] sm:$0xff]
        %v482 = vld [vmem:[%s224 + $0x6d0] sm:$0xff]
        %v483 = vld [vmem:[%s224 + $0x6d8] sm:$0xff]
        %v484 = vld [vmem:[%s224 + $0x6e0] sm:$0xff]
        %v485 = vld [vmem:[%s224 + $0x6e8] sm:$0xff]
        %v486 = vld [vmem:[%s224 + $0x6f0] sm:$0xff]
        %v487 = vld [vmem:[%s224 + $0x6f8] sm:$0xff]
        %v488 = vld [vmem:[%s224 + $0x700] sm:$0xff]
        %v489 = vld [vmem:[%s224 + $0x708] sm:$0xff]
        %v490 = vld [vmem:[%s224 + $0x710] sm:$0xff]
        %v491 = vld [vmem:[%s224 + $0x718] sm:$0xff]
        %v492 = vld [vmem:[%s224 + $0x720] sm:$0xff]
        %v493 = vld [vmem:[%s224 + $0x728] sm:$0xff]
        %v494 = vld [vmem:[%s224 + $0x730] sm:$0xff]
        %v495 = vld [vmem:[%s224 + $0x738] sm:$0xff]
        %v496 = vld [vmem:[%s224 + $0x740] sm:$0xff]
        %v497 = vld [vmem:[%s224 + $0x748] sm:$0xff]
        %v498 = vld [vmem:[%s224 + $0x750] sm:$0xff]
        %v499 = vld [vmem:[%s224 + $0x758] sm:$0xff]
        %v500 = vld [vmem:[%s224 + $0x760] sm:$0xff]
        %v501 = vld [vmem:[%s224 + $0x768] sm:$0xff]
        %v502 = vld [vmem:[%s224 + $0x770] sm:$0xff]
        %v503 = vld [vmem:[%s224 + $0x778] sm:$0xff]
        %v504 = vld [vmem:[%s224 + $0x780] sm:$0xff]
        %v505 = vld [vmem:[%s224 + $0x788] sm:$0xff]
        %v506 = vld [vmem:[%s224 + $0x790] sm:$0xff]
        %v507 = vld [vmem:[%s224 + $0x798] sm:$0xff]
        %v508 = vld [vmem:[%s224 + $0x7a0] sm:$0xff]
        %v509 = vld [vmem:[%s224 + $0x7a8] sm:$0xff]
        %v510 = vld [vmem:[%s224 + $0x7b0] sm:$0xff]
        %v511 = vld [vmem:[%s224 + $0x7b8] sm:$0xff]
        %v512 = vld [vmem:[%s224 + $0x7c0] sm:$0xff]
        %v513 = vld [vmem:[%s224 + $0x7c8] sm:$0xff]
        %v514 = vld [vmem:[%s224 + $0x7d0] sm:$0xff]
        %v515 = vld [vmem:[%s224 + $0x7d8] sm:$0xff]
        %v516 = vld [vmem:[%s224 + $0x7e0] sm:$0xff]
        %v517 = vld [vmem:[%s224 + $0x7e8] sm:$0xff]
        %v518 = vld [vmem:[%s224 + $0x7f0] sm:$0xff]
        %v519 = vld [vmem:[%s224 + $0x7f8] sm:$0xff]
        %v520 = vpack.c.bf16 %v272, %v264
        %v521 = vpack.c.bf16 %v273, %v265
        %v522 = vpack.c.bf16 %v274, %v266
        %v523 = vpack.c.bf16 %v275, %v267
        %v524 = vpack.c.bf16 %v276, %v268
        %v525 = vpack.c.bf16 %v277, %v269
        %v526 = vpack.c.bf16 %v278, %v270
        %v527 = vpack.c.bf16 %v279, %v271
        %v528 = vpack.c.bf16 %v288, %v280
        %v529 = vpack.c.bf16 %v289, %v281
        %v530 = vpack.c.bf16 %v290, %v282
        %v531 = vpack.c.bf16 %v291, %v283
        %v532 = vpack.c.bf16 %v292, %v284
        %v533 = vpack.c.bf16 %v293, %v285
        %v534 = vpack.c.bf16 %v294, %v286
        %v535 = vpack.c.bf16 %v295, %v287
        %v536 = vpack.c.bf16 %v304, %v296
        %v537 = vpack.c.bf16 %v305, %v297
        %v538 = vpack.c.bf16 %v306, %v298
        %v539 = vpack.c.bf16 %v307, %v299
        %v540 = vpack.c.bf16 %v308, %v300
        %v541 = vpack.c.bf16 %v309, %v301
        %v542 = vpack.c.bf16 %v310, %v302
        %v543 = vpack.c.bf16 %v311, %v303
        %v544 = vpack.c.bf16 %v320, %v312
        %v545 = vpack.c.bf16 %v321, %v313
        %v546 = vpack.c.bf16 %v322, %v314
        %v547 = vpack.c.bf16 %v323, %v315
        %v548 = vpack.c.bf16 %v324, %v316
        %v549 = vpack.c.bf16 %v325, %v317
        %v550 = vpack.c.bf16 %v326, %v318
        %v551 = vpack.c.bf16 %v327, %v319
        %v552 = vpack.c.bf16 %v336, %v328
        %v553 = vpack.c.bf16 %v337, %v329
        %v554 = vpack.c.bf16 %v338, %v330
        %v555 = vpack.c.bf16 %v339, %v331
        %v556 = vpack.c.bf16 %v340, %v332
        %v557 = vpack.c.bf16 %v341, %v333
        %v558 = vpack.c.bf16 %v342, %v334
        %v559 = vpack.c.bf16 %v343, %v335
        %v560 = vpack.c.bf16 %v352, %v344
        %v561 = vpack.c.bf16 %v353, %v345
        %v562 = vpack.c.bf16 %v354, %v346
        %v563 = vpack.c.bf16 %v355, %v347
        %v564 = vpack.c.bf16 %v356, %v348
        %v565 = vpack.c.bf16 %v357, %v349
        %v566 = vpack.c.bf16 %v358, %v350
        %v567 = vpack.c.bf16 %v359, %v351
        %v568 = vpack.c.bf16 %v368, %v360
        %v569 = vpack.c.bf16 %v369, %v361
        %v570 = vpack.c.bf16 %v370, %v362
        %v571 = vpack.c.bf16 %v371, %v363
        %v572 = vpack.c.bf16 %v372, %v364
        %v573 = vpack.c.bf16 %v373, %v365
        %v574 = vpack.c.bf16 %v374, %v366
        %v575 = vpack.c.bf16 %v375, %v367
        %v576 = vpack.c.bf16 %v384, %v376
        %v577 = vpack.c.bf16 %v385, %v377
        %v578 = vpack.c.bf16 %v386, %v378
        %v579 = vpack.c.bf16 %v387, %v379
        %v580 = vpack.c.bf16 %v388, %v380
        %v581 = vpack.c.bf16 %v389, %v381
        %v582 = vpack.c.bf16 %v390, %v382
        %v583 = vpack.c.bf16 %v391, %v383
        %v584 = vpack.c.bf16 %v400, %v392
        %v585 = vpack.c.bf16 %v401, %v393
        %v586 = vpack.c.bf16 %v402, %v394
        %v587 = vpack.c.bf16 %v403, %v395
        %v588 = vpack.c.bf16 %v404, %v396
        %v589 = vpack.c.bf16 %v405, %v397
        %v590 = vpack.c.bf16 %v406, %v398
        %v591 = vpack.c.bf16 %v407, %v399
        %v592 = vpack.c.bf16 %v416, %v408
        %v593 = vpack.c.bf16 %v417, %v409
        %v594 = vpack.c.bf16 %v418, %v410
        %v595 = vpack.c.bf16 %v419, %v411
        %v596 = vpack.c.bf16 %v420, %v412
        %v597 = vpack.c.bf16 %v421, %v413
        %v598 = vpack.c.bf16 %v422, %v414
        %v599 = vpack.c.bf16 %v423, %v415
        %v600 = vpack.c.bf16 %v432, %v424
        %v601 = vpack.c.bf16 %v433, %v425
        %v602 = vpack.c.bf16 %v434, %v426
        %v603 = vpack.c.bf16 %v435, %v427
        %v604 = vpack.c.bf16 %v436, %v428
        %v605 = vpack.c.bf16 %v437, %v429
        %v606 = vpack.c.bf16 %v438, %v430
        %v607 = vpack.c.bf16 %v439, %v431
        %v608 = vpack.c.bf16 %v448, %v440
        %v609 = vpack.c.bf16 %v449, %v441
        %v610 = vpack.c.bf16 %v450, %v442
        %v611 = vpack.c.bf16 %v451, %v443
        %v612 = vpack.c.bf16 %v452, %v444
        %v613 = vpack.c.bf16 %v453, %v445
        %v614 = vpack.c.bf16 %v454, %v446
        %v615 = vpack.c.bf16 %v455, %v447
        %v616 = vpack.c.bf16 %v464, %v456
        %v617 = vpack.c.bf16 %v465, %v457
        %v618 = vpack.c.bf16 %v466, %v458
        %v619 = vpack.c.bf16 %v467, %v459
        %v620 = vpack.c.bf16 %v468, %v460
        %v621 = vpack.c.bf16 %v469, %v461
        %v622 = vpack.c.bf16 %v470, %v462
        %v623 = vpack.c.bf16 %v471, %v463
        %v624 = vpack.c.bf16 %v480, %v472
        %v625 = vpack.c.bf16 %v481, %v473
        %v626 = vpack.c.bf16 %v482, %v474
        %v627 = vpack.c.bf16 %v483, %v475
        %v628 = vpack.c.bf16 %v484, %v476
        %v629 = vpack.c.bf16 %v485, %v477
        %v630 = vpack.c.bf16 %v486, %v478
        %v631 = vpack.c.bf16 %v487, %v479
        %v632 = vpack.c.bf16 %v496, %v488
        %v633 = vpack.c.bf16 %v497, %v489
        %v634 = vpack.c.bf16 %v498, %v490
        %v635 = vpack.c.bf16 %v499, %v491
        %v636 = vpack.c.bf16 %v500, %v492
        %v637 = vpack.c.bf16 %v501, %v493
        %v638 = vpack.c.bf16 %v502, %v494
        %v639 = vpack.c.bf16 %v503, %v495
        %v640 = vpack.c.bf16 %v512, %v504
        %v641 = vpack.c.bf16 %v513, %v505
        %v642 = vpack.c.bf16 %v514, %v506
        %v643 = vpack.c.bf16 %v515, %v507
        %v644 = vpack.c.bf16 %v516, %v508
        %v645 = vpack.c.bf16 %v517, %v509
        %v646 = vpack.c.bf16 %v518, %v510
        %v647 = vpack.c.bf16 %v519, %v511
        %v648 = vld [vmem:[#allocation5] sm:$0xf]
        %v649 = vld [vmem:[#allocation5 + $0x4] sm:$0xf]
        %v650 = vld [vmem:[#allocation5 + $0x8] sm:$0xf]
        %v651 = vld [vmem:[#allocation5 + $0xc] sm:$0xf]
        %v652 = vld [vmem:[#allocation5 + $0x10] sm:$0xf]
        %v653 = vld [vmem:[#allocation5 + $0x14] sm:$0xf]
        %v654 = vld [vmem:[#allocation5 + $0x18] sm:$0xf]
        %v655 = vld [vmem:[#allocation5 + $0x1c] sm:$0xf]
        %v656 = vld [vmem:[#allocation5 + $0x20] sm:$0xf]
        %v657 = vld [vmem:[#allocation5 + $0x24] sm:$0xf]
        %v658 = vld [vmem:[#allocation5 + $0x28] sm:$0xf]
        %v659 = vld [vmem:[#allocation5 + $0x2c] sm:$0xf]
        %v660 = vld [vmem:[#allocation5 + $0x30] sm:$0xf]
        %v661 = vld [vmem:[#allocation5 + $0x34] sm:$0xf]
        %v662 = vld [vmem:[#allocation5 + $0x38] sm:$0xf]
        %v663 = vld [vmem:[#allocation5 + $0x3c] sm:$0xf]
        %v664 = vld [vmem:[#allocation5 + $0x40] sm:$0xf]
        %v665 = vld [vmem:[#allocation5 + $0x44] sm:$0xf]
        %v666 = vld [vmem:[#allocation5 + $0x48] sm:$0xf]
        %v667 = vld [vmem:[#allocation5 + $0x4c] sm:$0xf]
        %v668 = vld [vmem:[#allocation5 + $0x50] sm:$0xf]
        %v669 = vld [vmem:[#allocation5 + $0x54] sm:$0xf]
        %v670 = vld [vmem:[#allocation5 + $0x58] sm:$0xf]
        %v671 = vld [vmem:[#allocation5 + $0x5c] sm:$0xf]
        %v672 = vld [vmem:[#allocation5 + $0x60] sm:$0xf]
        %v673 = vld [vmem:[#allocation5 + $0x64] sm:$0xf]
        %v674 = vld [vmem:[#allocation5 + $0x68] sm:$0xf]
        %v675 = vld [vmem:[#allocation5 + $0x6c] sm:$0xf]
        %v676 = vld [vmem:[#allocation5 + $0x70] sm:$0xf]
        %v677 = vld [vmem:[#allocation5 + $0x74] sm:$0xf]
        %v678 = vld [vmem:[#allocation5 + $0x78] sm:$0xf]
        %v679 = vld [vmem:[#allocation5 + $0x7c] sm:$0xf]
        %v680 = vld [vmem:[#allocation5 + $0x80] sm:$0xf]
        %v681 = vld [vmem:[#allocation5 + $0x84] sm:$0xf]
        %v682 = vld [vmem:[#allocation5 + $0x88] sm:$0xf]
        %v683 = vld [vmem:[#allocation5 + $0x8c] sm:$0xf]
        %v684 = vld [vmem:[#allocation5 + $0x90] sm:$0xf]
        %v685 = vld [vmem:[#allocation5 + $0x94] sm:$0xf]
        %v686 = vld [vmem:[#allocation5 + $0x98] sm:$0xf]
        %v687 = vld [vmem:[#allocation5 + $0x9c] sm:$0xf]
        %v688 = vld [vmem:[#allocation5 + $0xa0] sm:$0xf]
        %v689 = vld [vmem:[#allocation5 + $0xa4] sm:$0xf]
        %v690 = vld [vmem:[#allocation5 + $0xa8] sm:$0xf]
        %v691 = vld [vmem:[#allocation5 + $0xac] sm:$0xf]
        %v692 = vld [vmem:[#allocation5 + $0xb0] sm:$0xf]
        %v693 = vld [vmem:[#allocation5 + $0xb4] sm:$0xf]
        %v694 = vld [vmem:[#allocation5 + $0xb8] sm:$0xf]
        %v695 = vld [vmem:[#allocation5 + $0xbc] sm:$0xf]
        %v696 = vld [vmem:[#allocation5 + $0xc0] sm:$0xf]
        %v697 = vld [vmem:[#allocation5 + $0xc4] sm:$0xf]
        %v698 = vld [vmem:[#allocation5 + $0xc8] sm:$0xf]
        %v699 = vld [vmem:[#allocation5 + $0xcc] sm:$0xf]
        %v700 = vld [vmem:[#allocation5 + $0xd0] sm:$0xf]
        %v701 = vld [vmem:[#allocation5 + $0xd4] sm:$0xf]
        %v702 = vld [vmem:[#allocation5 + $0xd8] sm:$0xf]
        %v703 = vld [vmem:[#allocation5 + $0xdc] sm:$0xf]
        %v704 = vld [vmem:[#allocation5 + $0xe0] sm:$0xf]
        %v705 = vld [vmem:[#allocation5 + $0xe4] sm:$0xf]
        %v706 = vld [vmem:[#allocation5 + $0xe8] sm:$0xf]
        %v707 = vld [vmem:[#allocation5 + $0xec] sm:$0xf]
        %v708 = vld [vmem:[#allocation5 + $0xf0] sm:$0xf]
        %v709 = vld [vmem:[#allocation5 + $0xf4] sm:$0xf]
        %v710 = vld [vmem:[#allocation5 + $0xf8] sm:$0xf]
        %v711 = vld [vmem:[#allocation5 + $0xfc] sm:$0xf]
        %v712 = vld [vmem:[#allocation5 + $0x100] sm:$0xf]
        %v713 = vld [vmem:[#allocation5 + $0x104] sm:$0xf]
        %v714 = vld [vmem:[#allocation5 + $0x108] sm:$0xf]
        %v715 = vld [vmem:[#allocation5 + $0x10c] sm:$0xf]
        %v716 = vld [vmem:[#allocation5 + $0x110] sm:$0xf]
        %v717 = vld [vmem:[#allocation5 + $0x114] sm:$0xf]
        %v718 = vld [vmem:[#allocation5 + $0x118] sm:$0xf]
        %v719 = vld [vmem:[#allocation5 + $0x11c] sm:$0xf]
        %v720 = vld [vmem:[#allocation5 + $0x120] sm:$0xf]
        %v721 = vld [vmem:[#allocation5 + $0x124] sm:$0xf]
        %v722 = vld [vmem:[#allocation5 + $0x128] sm:$0xf]
        %v723 = vld [vmem:[#allocation5 + $0x12c] sm:$0xf]
        %v724 = vld [vmem:[#allocation5 + $0x130] sm:$0xf]
        %v725 = vld [vmem:[#allocation5 + $0x134] sm:$0xf]
        %v726 = vld [vmem:[#allocation5 + $0x138] sm:$0xf]
        %v727 = vld [vmem:[#allocation5 + $0x13c] sm:$0xf]
        %v728 = vld [vmem:[#allocation5 + $0x140] sm:$0xf]
        %v729 = vld [vmem:[#allocation5 + $0x144] sm:$0xf]
        %v730 = vld [vmem:[#allocation5 + $0x148] sm:$0xf]
        %v731 = vld [vmem:[#allocation5 + $0x14c] sm:$0xf]
        %v732 = vld [vmem:[#allocation5 + $0x150] sm:$0xf]
        %v733 = vld [vmem:[#allocation5 + $0x154] sm:$0xf]
        %v734 = vld [vmem:[#allocation5 + $0x158] sm:$0xf]
        %v735 = vld [vmem:[#allocation5 + $0x15c] sm:$0xf]
        %v736 = vld [vmem:[#allocation5 + $0x160] sm:$0xf]
        %v737 = vld [vmem:[#allocation5 + $0x164] sm:$0xf]
        %v738 = vld [vmem:[#allocation5 + $0x168] sm:$0xf]
        %v739 = vld [vmem:[#allocation5 + $0x16c] sm:$0xf]
        %v740 = vld [vmem:[#allocation5 + $0x170] sm:$0xf]
        %v741 = vld [vmem:[#allocation5 + $0x174] sm:$0xf]
        %v742 = vld [vmem:[#allocation5 + $0x178] sm:$0xf]
        %v743 = vld [vmem:[#allocation5 + $0x17c] sm:$0xf]
        %v744 = vld [vmem:[#allocation5 + $0x180] sm:$0xf]
        %v745 = vld [vmem:[#allocation5 + $0x184] sm:$0xf]
        %v746 = vld [vmem:[#allocation5 + $0x188] sm:$0xf]
        %v747 = vld [vmem:[#allocation5 + $0x18c] sm:$0xf]
        %v748 = vld [vmem:[#allocation5 + $0x190] sm:$0xf]
        %v749 = vld [vmem:[#allocation5 + $0x194] sm:$0xf]
        %v750 = vld [vmem:[#allocation5 + $0x198] sm:$0xf]
        %v751 = vld [vmem:[#allocation5 + $0x19c] sm:$0xf]
        %v752 = vld [vmem:[#allocation5 + $0x1a0] sm:$0xf]
        %v753 = vld [vmem:[#allocation5 + $0x1a4] sm:$0xf]
        %v754 = vld [vmem:[#allocation5 + $0x1a8] sm:$0xf]
        %v755 = vld [vmem:[#allocation5 + $0x1ac] sm:$0xf]
        %v756 = vld [vmem:[#allocation5 + $0x1b0] sm:$0xf]
        %v757 = vld [vmem:[#allocation5 + $0x1b4] sm:$0xf]
        %v758 = vld [vmem:[#allocation5 + $0x1b8] sm:$0xf]
        %v759 = vld [vmem:[#allocation5 + $0x1bc] sm:$0xf]
        %v760 = vld [vmem:[#allocation5 + $0x1c0] sm:$0xf]
        %v761 = vld [vmem:[#allocation5 + $0x1c4] sm:$0xf]
        %v762 = vld [vmem:[#allocation5 + $0x1c8] sm:$0xf]
        %v763 = vld [vmem:[#allocation5 + $0x1cc] sm:$0xf]
        %v764 = vld [vmem:[#allocation5 + $0x1d0] sm:$0xf]
        %v765 = vld [vmem:[#allocation5 + $0x1d4] sm:$0xf]
        %v766 = vld [vmem:[#allocation5 + $0x1d8] sm:$0xf]
        %v767 = vld [vmem:[#allocation5 + $0x1dc] sm:$0xf]
        %v768 = vld [vmem:[#allocation5 + $0x1e0] sm:$0xf]
        %v769 = vld [vmem:[#allocation5 + $0x1e4] sm:$0xf]
        %v770 = vld [vmem:[#allocation5 + $0x1e8] sm:$0xf]
        %v771 = vld [vmem:[#allocation5 + $0x1ec] sm:$0xf]
        %v772 = vld [vmem:[#allocation5 + $0x1f0] sm:$0xf]
        %v773 = vld [vmem:[#allocation5 + $0x1f4] sm:$0xf]
        %v774 = vld [vmem:[#allocation5 + $0x1f8] sm:$0xf]
        %v775 = vld [vmem:[#allocation5 + $0x1fc] sm:$0xf]
        %v904 = vunpack.c.l.b16 %v648
        %v905 = vunpack.c.l.b16 %v649
        %v906 = vunpack.c.l.b16 %v650
        %v907 = vunpack.c.l.b16 %v651
        %v908 = vunpack.c.l.b16 %v652
        %v909 = vunpack.c.l.b16 %v653
        %v910 = vunpack.c.l.b16 %v654
        %v911 = vunpack.c.l.b16 %v655
        %v912 = vunpack.c.l.b16 %v656
        %v913 = vunpack.c.l.b16 %v657
        %v914 = vunpack.c.l.b16 %v658
        %v915 = vunpack.c.l.b16 %v659
        %v916 = vunpack.c.l.b16 %v660
        %v917 = vunpack.c.l.b16 %v661
        %v918 = vunpack.c.l.b16 %v662
        %v919 = vunpack.c.l.b16 %v663
        %v920 = vunpack.c.l.b16 %v664
        %v921 = vunpack.c.l.b16 %v665
        %v922 = vunpack.c.l.b16 %v666
        %v923 = vunpack.c.l.b16 %v667
        %v924 = vunpack.c.l.b16 %v668
        %v925 = vunpack.c.l.b16 %v669
        %v926 = vunpack.c.l.b16 %v670
        %v927 = vunpack.c.l.b16 %v671
        %v928 = vunpack.c.l.b16 %v672
        %v929 = vunpack.c.l.b16 %v673
        %v930 = vunpack.c.l.b16 %v674
        %v931 = vunpack.c.l.b16 %v675
        %v932 = vunpack.c.l.b16 %v676
        %v933 = vunpack.c.l.b16 %v677
        %v934 = vunpack.c.l.b16 %v678
        %v935 = vunpack.c.l.b16 %v679
        %v936 = vunpack.c.l.b16 %v680
        %v937 = vunpack.c.l.b16 %v681
        %v938 = vunpack.c.l.b16 %v682
        %v939 = vunpack.c.l.b16 %v683
        %v940 = vunpack.c.l.b16 %v684
        %v941 = vunpack.c.l.b16 %v685
        %v942 = vunpack.c.l.b16 %v686
        %v943 = vunpack.c.l.b16 %v687
        %v944 = vunpack.c.l.b16 %v688
        %v945 = vunpack.c.l.b16 %v689
        %v946 = vunpack.c.l.b16 %v690
        %v947 = vunpack.c.l.b16 %v691
        %v948 = vunpack.c.l.b16 %v692
        %v949 = vunpack.c.l.b16 %v693
        %v950 = vunpack.c.l.b16 %v694
        %v951 = vunpack.c.l.b16 %v695
        %v952 = vunpack.c.l.b16 %v696
        %v953 = vunpack.c.l.b16 %v697
        %v954 = vunpack.c.l.b16 %v698
        %v955 = vunpack.c.l.b16 %v699
        %v956 = vunpack.c.l.b16 %v700
        %v957 = vunpack.c.l.b16 %v701
        %v958 = vunpack.c.l.b16 %v702
        %v959 = vunpack.c.l.b16 %v703
        %v960 = vunpack.c.l.b16 %v704
        %v961 = vunpack.c.l.b16 %v705
        %v962 = vunpack.c.l.b16 %v706
        %v963 = vunpack.c.l.b16 %v707
        %v964 = vunpack.c.l.b16 %v708
        %v965 = vunpack.c.l.b16 %v709
        %v966 = vunpack.c.l.b16 %v710
        %v967 = vunpack.c.l.b16 %v711
        %v968 = vunpack.c.l.b16 %v712
        %v969 = vunpack.c.l.b16 %v713
        %v970 = vunpack.c.l.b16 %v714
        %v971 = vunpack.c.l.b16 %v715
        %v972 = vunpack.c.l.b16 %v716
        %v973 = vunpack.c.l.b16 %v717
        %v974 = vunpack.c.l.b16 %v718
        %v975 = vunpack.c.l.b16 %v719
        %v976 = vunpack.c.l.b16 %v720
        %v977 = vunpack.c.l.b16 %v721
        %v978 = vunpack.c.l.b16 %v722
        %v979 = vunpack.c.l.b16 %v723
        %v980 = vunpack.c.l.b16 %v724
        %v981 = vunpack.c.l.b16 %v725
        %v982 = vunpack.c.l.b16 %v726
        %v983 = vunpack.c.l.b16 %v727
        %v984 = vunpack.c.l.b16 %v728
        %v985 = vunpack.c.l.b16 %v729
        %v986 = vunpack.c.l.b16 %v730
        %v987 = vunpack.c.l.b16 %v731
        %v988 = vunpack.c.l.b16 %v732
        %v989 = vunpack.c.l.b16 %v733
        %v990 = vunpack.c.l.b16 %v734
        %v991 = vunpack.c.l.b16 %v735
        %v992 = vunpack.c.l.b16 %v736
        %v993 = vunpack.c.l.b16 %v737
        %v994 = vunpack.c.l.b16 %v738
        %v995 = vunpack.c.l.b16 %v739
        %v996 = vunpack.c.l.b16 %v740
        %v997 = vunpack.c.l.b16 %v741
        %v998 = vunpack.c.l.b16 %v742
        %v999 = vunpack.c.l.b16 %v743
        %v1000 = vunpack.c.l.b16 %v744
        %v1001 = vunpack.c.l.b16 %v745
        %v1002 = vunpack.c.l.b16 %v746
        %v1003 = vunpack.c.l.b16 %v747
        %v1004 = vunpack.c.l.b16 %v748
        %v1005 = vunpack.c.l.b16 %v749
        %v1006 = vunpack.c.l.b16 %v750
        %v1007 = vunpack.c.l.b16 %v751
        %v1008 = vunpack.c.l.b16 %v752
        %v1009 = vunpack.c.l.b16 %v753
        %v1010 = vunpack.c.l.b16 %v754
        %v1011 = vunpack.c.l.b16 %v755
        %v1012 = vunpack.c.l.b16 %v756
        %v1013 = vunpack.c.l.b16 %v757
        %v1014 = vunpack.c.l.b16 %v758
        %v1015 = vunpack.c.l.b16 %v759
        %v1016 = vunpack.c.l.b16 %v760
        %v1017 = vunpack.c.l.b16 %v761
        %v1018 = vunpack.c.l.b16 %v762
        %v1019 = vunpack.c.l.b16 %v763
        %v1020 = vunpack.c.l.b16 %v764
        %v1021 = vunpack.c.l.b16 %v765
        %v1022 = vunpack.c.l.b16 %v766
        %v1023 = vunpack.c.l.b16 %v767
        %v1024 = vunpack.c.l.b16 %v768
        %v1025 = vunpack.c.l.b16 %v769
        %v1026 = vunpack.c.l.b16 %v770
        %v1027 = vunpack.c.l.b16 %v771
        %v1028 = vunpack.c.l.b16 %v772
        %v1029 = vunpack.c.l.b16 %v773
        %v1030 = vunpack.c.l.b16 %v774
        %v1031 = vunpack.c.l.b16 %v775
        %v1032 = vpack.c.b16 %v905, %v904
        %v1033 = vpack.c.b16 %v907, %v906
        %v1034 = vpack.c.b16 %v909, %v908
        %v1035 = vpack.c.b16 %v911, %v910
        %v1036 = vpack.c.b16 %v913, %v912
        %v1037 = vpack.c.b16 %v915, %v914
        %v1038 = vpack.c.b16 %v917, %v916
        %v1039 = vpack.c.b16 %v919, %v918
        %v1040 = vpack.c.b16 %v921, %v920
        %v1041 = vpack.c.b16 %v923, %v922
        %v1042 = vpack.c.b16 %v925, %v924
        %v1043 = vpack.c.b16 %v927, %v926
        %v1044 = vpack.c.b16 %v929, %v928
        %v1045 = vpack.c.b16 %v931, %v930
        %v1046 = vpack.c.b16 %v933, %v932
        %v1047 = vpack.c.b16 %v935, %v934
        %v1048 = vpack.c.b16 %v937, %v936
        %v1049 = vpack.c.b16 %v939, %v938
        %v1050 = vpack.c.b16 %v941, %v940
        %v1051 = vpack.c.b16 %v943, %v942
        %v1052 = vpack.c.b16 %v945, %v944
        %v1053 = vpack.c.b16 %v947, %v946
        %v1054 = vpack.c.b16 %v949, %v948
        %v1055 = vpack.c.b16 %v951, %v950
        %v1056 = vpack.c.b16 %v953, %v952
        %v1057 = vpack.c.b16 %v955, %v954
        %v1058 = vpack.c.b16 %v957, %v956
        %v1059 = vpack.c.b16 %v959, %v958
        %v1060 = vpack.c.b16 %v961, %v960
        %v1061 = vpack.c.b16 %v963, %v962
        %v1062 = vpack.c.b16 %v965, %v964
        %v1063 = vpack.c.b16 %v967, %v966
        %v1064 = vpack.c.b16 %v969, %v968
        %v1065 = vpack.c.b16 %v971, %v970
        %v1066 = vpack.c.b16 %v973, %v972
        %v1067 = vpack.c.b16 %v975, %v974
        %v1068 = vpack.c.b16 %v977, %v976
        %v1069 = vpack.c.b16 %v979, %v978
        %v1070 = vpack.c.b16 %v981, %v980
        %v1071 = vpack.c.b16 %v983, %v982
        %v1072 = vpack.c.b16 %v985, %v984
        %v1073 = vpack.c.b16 %v987, %v986
        %v1074 = vpack.c.b16 %v989, %v988
        %v1075 = vpack.c.b16 %v991, %v990
        %v1076 = vpack.c.b16 %v993, %v992
        %v1077 = vpack.c.b16 %v995, %v994
        %v1078 = vpack.c.b16 %v997, %v996
        %v1079 = vpack.c.b16 %v999, %v998
        %v1080 = vpack.c.b16 %v1001, %v1000
        %v1081 = vpack.c.b16 %v1003, %v1002
        %v1082 = vpack.c.b16 %v1005, %v1004
        %v1083 = vpack.c.b16 %v1007, %v1006
        %v1084 = vpack.c.b16 %v1009, %v1008
        %v1085 = vpack.c.b16 %v1011, %v1010
        %v1086 = vpack.c.b16 %v1013, %v1012
        %v1087 = vpack.c.b16 %v1015, %v1014
        %v1088 = vpack.c.b16 %v1017, %v1016
        %v1089 = vpack.c.b16 %v1019, %v1018
        %v1090 = vpack.c.b16 %v1021, %v1020
        %v1091 = vpack.c.b16 %v1023, %v1022
        %v1092 = vpack.c.b16 %v1025, %v1024
        %v1093 = vpack.c.b16 %v1027, %v1026
        %v1094 = vpack.c.b16 %v1029, %v1028
        %v1095 = vpack.c.b16 %v1031, %v1030
        %1160 = vmatprep.subr.bf16.mxu0 0
        %1161 = vmatpush1.bf16.msra.mxu0 %v1032
        %1162 = vmatprep.subr.bf16.mxu0 0
        %1163 = vmatpush1.bf16.msra.mxu0 %v1033
        %1164 = vmatprep.subr.bf16.mxu0 0
        %1165 = vmatpush1.bf16.msra.mxu0 %v1034
        %1166 = vmatprep.subr.bf16.mxu0 0
        %1167 = vmatpush1.bf16.msra.mxu0 %v1035
        %1168 = vmatprep.subr.bf16.mxu0 0
        %1169 = vmatpush1.bf16.msra.mxu0 %v1036
        %1170 = vmatprep.subr.bf16.mxu0 0
        %1171 = vmatpush1.bf16.msra.mxu0 %v1037
        %1172 = vmatprep.subr.bf16.mxu0 0
        %1173 = vmatpush1.bf16.msra.mxu0 %v1038
        %1174 = vmatprep.subr.bf16.mxu0 0
        %1175 = vmatpush1.bf16.msra.mxu0 %v1039
        %1176 = vmatprep.subr.bf16.mxu0 0
        %1177 = vmatpush1.bf16.msra.mxu0 %v1040
        %1178 = vmatprep.subr.bf16.mxu0 0
        %1179 = vmatpush1.bf16.msra.mxu0 %v1041
        %1180 = vmatprep.subr.bf16.mxu0 0
        %1181 = vmatpush1.bf16.msra.mxu0 %v1042
        %1182 = vmatprep.subr.bf16.mxu0 0
        %1183 = vmatpush1.bf16.msra.mxu0 %v1043
        %1184 = vmatprep.subr.bf16.mxu0 0
        %1185 = vmatpush1.bf16.msra.mxu0 %v1044
        %1186 = vmatprep.subr.bf16.mxu0 0
        %1187 = vmatpush1.bf16.msra.mxu0 %v1045
        %1188 = vmatprep.subr.bf16.mxu0 0
        %1189 = vmatpush1.bf16.msra.mxu0 %v1046
        %1190 = vmatprep.subr.bf16.mxu0 0
        %1191 = vmatpush1.bf16.msra.mxu0 %v1047
        %1192 = vmatprep.mubr.bf16.mxu0 %v521
        %1193 = vmatmul.mubr.bf16.gmra.mrb[0].mxu0 %v520
        %v1194 = vpop.f32.mrb[0].mxu0
        %v1195 = vadd.f32 0.0, %v1194
        %v1196 = vpop.f32.mrb[0].mxu0
        %v1197 = vpop.f32.mrb[0].mxu0
        %v1198 = vadd.f32 0.0, %v1197
        %v1199 = vpop.f32.mrb[0].mxu0
        %1200 = vmatprep.mubr.bf16.mxu0 %v529
        %1201 = vmatmul.mubr.bf16.gmra.mrb[0].mxu0 %v528
        %v1202 = vpop.f32.mrb[0].mxu0
        %v1203 = vadd.f32 0.0, %v1202
        %v1204 = vpop.f32.mrb[0].mxu0
        %v1205 = vpop.f32.mrb[0].mxu0
        %v1206 = vadd.f32 0.0, %v1205
        %v1207 = vpop.f32.mrb[0].mxu0
        %1208 = vmatprep.mubr.bf16.mxu0 %v537
        %1209 = vmatmul.mubr.bf16.gmra.mrb[0].mxu0 %v536
        %v1210 = vpop.f32.mrb[0].mxu0
        %v1211 = vadd.f32 0.0, %v1210
        %v1212 = vpop.f32.mrb[0].mxu0
        %v1213 = vpop.f32.mrb[0].mxu0
        %v1214 = vadd.f32 0.0, %v1213
        %v1215 = vpop.f32.mrb[0].mxu0
        %1216 = vmatprep.mubr.bf16.mxu0 %v545
        %1217 = vmatmul.mubr.bf16.gmra.mrb[0].mxu0 %v544
        %v1218 = vpop.f32.mrb[0].mxu0
        %v1219 = vadd.f32 0.0, %v1218
        %v1220 = vpop.f32.mrb[0].mxu0
        %v1221 = vpop.f32.mrb[0].mxu0
        %v1222 = vadd.f32 0.0, %v1221
        %v1223 = vpop.f32.mrb[0].mxu0
        %1224 = vmatprep.mubr.bf16.mxu0 %v553
        %1225 = vmatmul.mubr.bf16.gmra.mrb[0].mxu0 %v552
        %v1226 = vpop.f32.mrb[0].mxu0
        %v1227 = vadd.f32 0.0, %v1226
        %v1228 = vpop.f32.mrb[0].mxu0
        %v1229 = vpop.f32.mrb[0].mxu0
        %v1230 = vadd.f32 0.0, %v1229
        %v1231 = vpop.f32.mrb[0].mxu0
        %1232 = vmatprep.mubr.bf16.mxu0 %v561
        %1233 = vmatmul.mubr.bf16.gmra.mrb[0].mxu0 %v560
        %v1234 = vpop.f32.mrb[0].mxu0
        %v1235 = vadd.f32 0.0, %v1234
        %v1236 = vpop.f32.mrb[0].mxu0
        %v1237 = vpop.f32.mrb[0].mxu0
        %v1238 = vadd.f32 0.0, %v1237
        %v1239 = vpop.f32.mrb[0].mxu0
        %1240 = vmatprep.mubr.bf16.mxu0 %v569
        %1241 = vmatmul.mubr.bf16.gmra.mrb[0].mxu0 %v568
        %v1242 = vpop.f32.mrb[0].mxu0
        %v1243 = vadd.f32 0.0, %v1242
        %v1244 = vpop.f32.mrb[0].mxu0
        %v1245 = vpop.f32.mrb[0].mxu0
        %v1246 = vadd.f32 0.0, %v1245
        %v1247 = vpop.f32.mrb[0].mxu0
        %1248 = vmatprep.mubr.bf16.mxu0 %v577
        %1249 = vmatmul.mubr.bf16.gmra.mrb[0].mxu0 %v576
        %v1250 = vpop.f32.mrb[0].mxu0
        %v1251 = vadd.f32 0.0, %v1250
        %v1252 = vpop.f32.mrb[0].mxu0
        %v1253 = vpop.f32.mrb[0].mxu0
        %v1254 = vadd.f32 0.0, %v1253
        %v1255 = vpop.f32.mrb[0].mxu0
        %1256 = vmatprep.mubr.bf16.mxu0 %v585
        %1257 = vmatmul.mubr.bf16.gmra.mrb[0].mxu0 %v584
        %v1258 = vpop.f32.mrb[0].mxu0
        %v1259 = vadd.f32 0.0, %v1258
        %v1260 = vpop.f32.mrb[0].mxu0
        %v1261 = vpop.f32.mrb[0].mxu0
        %v1262 = vadd.f32 0.0, %v1261
        %v1263 = vpop.f32.mrb[0].mxu0
        %1264 = vmatprep.mubr.bf16.mxu0 %v593
        %1265 = vmatmul.mubr.bf16.gmra.mrb[0].mxu0 %v592
        %v1266 = vpop.f32.mrb[0].mxu0
        %v1267 = vadd.f32 0.0, %v1266
        %v1268 = vpop.f32.mrb[0].mxu0
        %v1269 = vpop.f32.mrb[0].mxu0
        %v1270 = vadd.f32 0.0, %v1269
        %v1271 = vpop.f32.mrb[0].mxu0
        %1272 = vmatprep.mubr.bf16.mxu0 %v601
        %1273 = vmatmul.mubr.bf16.gmra.mrb[0].mxu0 %v600
        %v1274 = vpop.f32.mrb[0].mxu0
        %v1275 = vadd.f32 0.0, %v1274
        %v1276 = vpop.f32.mrb[0].mxu0
        %v1277 = vpop.f32.mrb[0].mxu0
        %v1278 = vadd.f32 0.0, %v1277
        %v1279 = vpop.f32.mrb[0].mxu0
        %1280 = vmatprep.mubr.bf16.mxu0 %v609
        %1281 = vmatmul.mubr.bf16.gmra.mrb[0].mxu0 %v608
        %v1282 = vpop.f32.mrb[0].mxu0
        %v1283 = vadd.f32 0.0, %v1282
        %v1284 = vpop.f32.mrb[0].mxu0
        %v1285 = vpop.f32.mrb[0].mxu0
        %v1286 = vadd.f32 0.0, %v1285
        %v1287 = vpop.f32.mrb[0].mxu0
        %1288 = vmatprep.mubr.bf16.mxu0 %v617
        %1289 = vmatmul.mubr.bf16.gmra.mrb[0].mxu0 %v616
        %v1290 = vpop.f32.mrb[0].mxu0
        %v1291 = vadd.f32 0.0, %v1290
        %v1292 = vpop.f32.mrb[0].mxu0
        %v1293 = vpop.f32.mrb[0].mxu0
        %v1294 = vadd.f32 0.0, %v1293
        %v1295 = vpop.f32.mrb[0].mxu0
        %1296 = vmatprep.mubr.bf16.mxu0 %v625
        %1297 = vmatmul.mubr.bf16.gmra.mrb[0].mxu0 %v624
        %v1298 = vpop.f32.mrb[0].mxu0
        %v1299 = vadd.f32 0.0, %v1298
        %v1300 = vpop.f32.mrb[0].mxu0
        %v1301 = vpop.f32.mrb[0].mxu0
        %v1302 = vadd.f32 0.0, %v1301
        %v1303 = vpop.f32.mrb[0].mxu0
        %1304 = vmatprep.mubr.bf16.mxu0 %v633
        %1305 = vmatmul.mubr.bf16.gmra.mrb[0].mxu0 %v632
        %v1306 = vpop.f32.mrb[0].mxu0
        %v1307 = vadd.f32 0.0, %v1306
        %v1308 = vpop.f32.mrb[0].mxu0
        %v1309 = vpop.f32.mrb[0].mxu0
        %v1310 = vadd.f32 0.0, %v1309
        %v1311 = vpop.f32.mrb[0].mxu0
        %1312 = vmatprep.mubr.bf16.mxu0 %v641
        %1313 = vmatmul.mubr.bf16.gmra.mrb[0].mxu0 %v640
        %v1314 = vpop.f32.mrb[0].mxu0
        %v1315 = vadd.f32 0.0, %v1314
        %v1316 = vpop.f32.mrb[0].mxu0
        %v1317 = vpop.f32.mrb[0].mxu0
        %v1318 = vadd.f32 0.0, %v1317
        %v1319 = vpop.f32.mrb[0].mxu0
        %1320 = vdwg.mxu0
        %1321 = vmatprep.subr.bf16.mxu0 0
        %1322 = vmatpush1.bf16.msra.mxu0 %v1048
        %1323 = vmatprep.subr.bf16.mxu0 0
        %1324 = vmatpush1.bf16.msra.mxu0 %v1049
        %1325 = vmatprep.subr.bf16.mxu0 0
        %1326 = vmatpush1.bf16.msra.mxu0 %v1050
        %1327 = vmatprep.subr.bf16.mxu0 0
        %1328 = vmatpush1.bf16.msra.mxu0 %v1051
        %1329 = vmatprep.subr.bf16.mxu0 0
        %1330 = vmatpush1.bf16.msra.mxu0 %v1052
        %1331 = vmatprep.subr.bf16.mxu0 0
        %1332 = vmatpush1.bf16.msra.mxu0 %v1053
        %1333 = vmatprep.subr.bf16.mxu0 0
        %1334 = vmatpush1.bf16.msra.mxu0 %v1054
        %1335 = vmatprep.subr.bf16.mxu0 0
        %1336 = vmatpush1.bf16.msra.mxu0 %v1055
        %1337 = vmatprep.subr.bf16.mxu0 0
        %1338 = vmatpush1.bf16.msra.mxu0 %v1056
        %1339 = vmatprep.subr.bf16.mxu0 0
        %1340 = vmatpush1.bf16.msra.mxu0 %v1057
        %1341 = vmatprep.subr.bf16.mxu0 0
        %1342 = vmatpush1.bf16.msra.mxu0 %v1058
        %1343 = vmatprep.subr.bf16.mxu0 0
        %1344 = vmatpush1.bf16.msra.mxu0 %v1059
        %1345 = vmatprep.subr.bf16.mxu0 0
        %1346 = vmatpush1.bf16.msra.mxu0 %v1060
        %1347 = vmatprep.subr.bf16.mxu0 0
        %1348 = vmatpush1.bf16.msra.mxu0 %v1061
        %1349 = vmatprep.subr.bf16.mxu0 0
        %1350 = vmatpush1.bf16.msra.mxu0 %v1062
        %1351 = vmatprep.subr.bf16.mxu0 0
        %1352 = vmatpush1.bf16.msra.mxu0 %v1063
        %1353 = vmatprep.mubr.bf16.mxu0 %v523
        %1354 = vmatmul.mubr.bf16.gmra.mrb[0].mxu0 %v522
        %v1355 = vpop.f32.mrb[0].mxu0
        %v1356 = vadd.f32 %v1195, %v1355
        %v1357 = vpop.f32.mrb[0].mxu0
        %v1358 = vpop.f32.mrb[0].mxu0
        %v1359 = vadd.f32 %v1198, %v1358
        %v1360 = vpop.f32.mrb[0].mxu0
        %1361 = vmatprep.mubr.bf16.mxu0 %v531
        %1362 = vmatmul.mubr.bf16.gmra.mrb[0].mxu0 %v530
        %v1363 = vpop.f32.mrb[0].mxu0
        %v1364 = vadd.f32 %v1203, %v1363
        %v1365 = vpop.f32.mrb[0].mxu0
        %v1366 = vpop.f32.mrb[0].mxu0
        %v1367 = vadd.f32 %v1206, %v1366
        %v1368 = vpop.f32.mrb[0].mxu0
        %1369 = vmatprep.mubr.bf16.mxu0 %v539
        %1370 = vmatmul.mubr.bf16.gmra.mrb[0].mxu0 %v538
        %v1371 = vpop.f32.mrb[0].mxu0
        %v1372 = vadd.f32 %v1211, %v1371
        %v1373 = vpop.f32.mrb[0].mxu0
        %v1374 = vpop.f32.mrb[0].mxu0
        %v1375 = vadd.f32 %v1214, %v1374
        %v1376 = vpop.f32.mrb[0].mxu0
        %1377 = vmatprep.mubr.bf16.mxu0 %v547
        %1378 = vmatmul.mubr.bf16.gmra.mrb[0].mxu0 %v546
        %v1379 = vpop.f32.mrb[0].mxu0
        %v1380 = vadd.f32 %v1219, %v1379
        %v1381 = vpop.f32.mrb[0].mxu0
        %v1382 = vpop.f32.mrb[0].mxu0
        %v1383 = vadd.f32 %v1222, %v1382
        %v1384 = vpop.f32.mrb[0].mxu0
        %1385 = vmatprep.mubr.bf16.mxu0 %v555
        %1386 = vmatmul.mubr.bf16.gmra.mrb[0].mxu0 %v554
        %v1387 = vpop.f32.mrb[0].mxu0
        %v1388 = vadd.f32 %v1227, %v1387
        %v1389 = vpop.f32.mrb[0].mxu0
        %v1390 = vpop.f32.mrb[0].mxu0
        %v1391 = vadd.f32 %v1230, %v1390
        %v1392 = vpop.f32.mrb[0].mxu0
        %1393 = vmatprep.mubr.bf16.mxu0 %v563
        %1394 = vmatmul.mubr.bf16.gmra.mrb[0].mxu0 %v562
        %v1395 = vpop.f32.mrb[0].mxu0
        %v1396 = vadd.f32 %v1235, %v1395
        %v1397 = vpop.f32.mrb[0].mxu0
        %v1398 = vpop.f32.mrb[0].mxu0
        %v1399 = vadd.f32 %v1238, %v1398
        %v1400 = vpop.f32.mrb[0].mxu0
        %1401 = vmatprep.mubr.bf16.mxu0 %v571
        %1402 = vmatmul.mubr.bf16.gmra.mrb[0].mxu0 %v570
        %v1403 = vpop.f32.mrb[0].mxu0
        %v1404 = vadd.f32 %v1243, %v1403
        %v1405 = vpop.f32.mrb[0].mxu0
        %v1406 = vpop.f32.mrb[0].mxu0
        %v1407 = vadd.f32 %v1246, %v1406
        %v1408 = vpop.f32.mrb[0].mxu0
        %1409 = vmatprep.mubr.bf16.mxu0 %v579
        %1410 = vmatmul.mubr.bf16.gmra.mrb[0].mxu0 %v578
        %v1411 = vpop.f32.mrb[0].mxu0
        %v1412 = vadd.f32 %v1251, %v1411
        %v1413 = vpop.f32.mrb[0].mxu0
        %v1414 = vpop.f32.mrb[0].mxu0
        %v1415 = vadd.f32 %v1254, %v1414
        %v1416 = vpop.f32.mrb[0].mxu0
        %1417 = vmatprep.mubr.bf16.mxu0 %v587
        %1418 = vmatmul.mubr.bf16.gmra.mrb[0].mxu0 %v586
        %v1419 = vpop.f32.mrb[0].mxu0
        %v1420 = vadd.f32 %v1259, %v1419
        %v1421 = vpop.f32.mrb[0].mxu0
        %v1422 = vpop.f32.mrb[0].mxu0
        %v1423 = vadd.f32 %v1262, %v1422
        %v1424 = vpop.f32.mrb[0].mxu0
        %1425 = vmatprep.mubr.bf16.mxu0 %v595
        %1426 = vmatmul.mubr.bf16.gmra.mrb[0].mxu0 %v594
        %v1427 = vpop.f32.mrb[0].mxu0
        %v1428 = vadd.f32 %v1267, %v1427
        %v1429 = vpop.f32.mrb[0].mxu0
        %v1430 = vpop.f32.mrb[0].mxu0
        %v1431 = vadd.f32 %v1270, %v1430
        %v1432 = vpop.f32.mrb[0].mxu0
        %1433 = vmatprep.mubr.bf16.mxu0 %v603
        %1434 = vmatmul.mubr.bf16.gmra.mrb[0].mxu0 %v602
        %v1435 = vpop.f32.mrb[0].mxu0
        %v1436 = vadd.f32 %v1275, %v1435
        %v1437 = vpop.f32.mrb[0].mxu0
        %v1438 = vpop.f32.mrb[0].mxu0
        %v1439 = vadd.f32 %v1278, %v1438
        %v1440 = vpop.f32.mrb[0].mxu0
        %1441 = vmatprep.mubr.bf16.mxu0 %v611
        %1442 = vmatmul.mubr.bf16.gmra.mrb[0].mxu0 %v610
        %v1443 = vpop.f32.mrb[0].mxu0
        %v1444 = vadd.f32 %v1283, %v1443
        %v1445 = vpop.f32.mrb[0].mxu0
        %v1446 = vpop.f32.mrb[0].mxu0
        %v1447 = vadd.f32 %v1286, %v1446
        %v1448 = vpop.f32.mrb[0].mxu0
        %1449 = vmatprep.mubr.bf16.mxu0 %v619
        %1450 = vmatmul.mubr.bf16.gmra.mrb[0].mxu0 %v618
        %v1451 = vpop.f32.mrb[0].mxu0
        %v1452 = vadd.f32 %v1291, %v1451
        %v1453 = vpop.f32.mrb[0].mxu0
        %v1454 = vpop.f32.mrb[0].mxu0
        %v1455 = vadd.f32 %v1294, %v1454
        %v1456 = vpop.f32.mrb[0].mxu0
        %1457 = vmatprep.mubr.bf16.mxu0 %v627
        %1458 = vmatmul.mubr.bf16.gmra.mrb[0].mxu0 %v626
        %v1459 = vpop.f32.mrb[0].mxu0
        %v1460 = vadd.f32 %v1299, %v1459
        %v1461 = vpop.f32.mrb[0].mxu0
        %v1462 = vpop.f32.mrb[0].mxu0
        %v1463 = vadd.f32 %v1302, %v1462
        %v1464 = vpop.f32.mrb[0].mxu0
        %1465 = vmatprep.mubr.bf16.mxu0 %v635
        %1466 = vmatmul.mubr.bf16.gmra.mrb[0].mxu0 %v634
        %v1467 = vpop.f32.mrb[0].mxu0
        %v1468 = vadd.f32 %v1307, %v1467
        %v1469 = vpop.f32.mrb[0].mxu0
        %v1470 = vpop.f32.mrb[0].mxu0
        %v1471 = vadd.f32 %v1310, %v1470
        %v1472 = vpop.f32.mrb[0].mxu0
        %1473 = vmatprep.mubr.bf16.mxu0 %v643
        %1474 = vmatmul.mubr.bf16.gmra.mrb[0].mxu0 %v642
        %v1475 = vpop.f32.mrb[0].mxu0
        %v1476 = vadd.f32 %v1315, %v1475
        %v1477 = vpop.f32.mrb[0].mxu0
        %v1478 = vpop.f32.mrb[0].mxu0
        %v1479 = vadd.f32 %v1318, %v1478
        %v1480 = vpop.f32.mrb[0].mxu0
        %1481 = vdwg.mxu0
        %1482 = vmatprep.subr.bf16.mxu0 0
        %1483 = vmatpush1.bf16.msra.mxu0 %v1064
        %1484 = vmatprep.subr.bf16.mxu0 0
        %1485 = vmatpush1.bf16.msra.mxu0 %v1065
        %1486 = vmatprep.subr.bf16.mxu0 0
        %1487 = vmatpush1.bf16.msra.mxu0 %v1066
        %1488 = vmatprep.subr.bf16.mxu0 0
        %1489 = vmatpush1.bf16.msra.mxu0 %v1067
        %1490 = vmatprep.subr.bf16.mxu0 0
        %1491 = vmatpush1.bf16.msra.mxu0 %v1068
        %1492 = vmatprep.subr.bf16.mxu0 0
        %1493 = vmatpush1.bf16.msra.mxu0 %v1069
        %1494 = vmatprep.subr.bf16.mxu0 0
        %1495 = vmatpush1.bf16.msra.mxu0 %v1070
        %1496 = vmatprep.subr.bf16.mxu0 0
        %1497 = vmatpush1.bf16.msra.mxu0 %v1071
        %1498 = vmatprep.subr.bf16.mxu0 0
        %1499 = vmatpush1.bf16.msra.mxu0 %v1072
        %1500 = vmatprep.subr.bf16.mxu0 0
        %1501 = vmatpush1.bf16.msra.mxu0 %v1073
        %1502 = vmatprep.subr.bf16.mxu0 0
        %1503 = vmatpush1.bf16.msra.mxu0 %v1074
        %1504 = vmatprep.subr.bf16.mxu0 0
        %1505 = vmatpush1.bf16.msra.mxu0 %v1075
        %1506 = vmatprep.subr.bf16.mxu0 0
        %1507 = vmatpush1.bf16.msra.mxu0 %v1076
        %1508 = vmatprep.subr.bf16.mxu0 0
        %1509 = vmatpush1.bf16.msra.mxu0 %v1077
        %1510 = vmatprep.subr.bf16.mxu0 0
        %1511 = vmatpush1.bf16.msra.mxu0 %v1078
        %1512 = vmatprep.subr.bf16.mxu0 0
        %1513 = vmatpush1.bf16.msra.mxu0 %v1079
        %1514 = vmatprep.mubr.bf16.mxu0 %v525
        %1515 = vmatmul.mubr.bf16.gmra.mrb[0].mxu0 %v524
        %v1516 = vpop.f32.mrb[0].mxu0
        %v1517 = vadd.f32 %v1356, %v1516
        %v1518 = vpop.f32.mrb[0].mxu0
        %v1519 = vpop.f32.mrb[0].mxu0
        %v1520 = vadd.f32 %v1359, %v1519
        %v1521 = vpop.f32.mrb[0].mxu0
        %1522 = vmatprep.mubr.bf16.mxu0 %v533
        %1523 = vmatmul.mubr.bf16.gmra.mrb[0].mxu0 %v532
        %v1524 = vpop.f32.mrb[0].mxu0
        %v1525 = vadd.f32 %v1364, %v1524
        %v1526 = vpop.f32.mrb[0].mxu0
        %v1527 = vpop.f32.mrb[0].mxu0
        %v1528 = vadd.f32 %v1367, %v1527
        %v1529 = vpop.f32.mrb[0].mxu0
        %1530 = vmatprep.mubr.bf16.mxu0 %v541
        %1531 = vmatmul.mubr.bf16.gmra.mrb[0].mxu0 %v540
        %v1532 = vpop.f32.mrb[0].mxu0
        %v1533 = vadd.f32 %v1372, %v1532
        %v1534 = vpop.f32.mrb[0].mxu0
        %v1535 = vpop.f32.mrb[0].mxu0
        %v1536 = vadd.f32 %v1375, %v1535
        %v1537 = vpop.f32.mrb[0].mxu0
        %1538 = vmatprep.mubr.bf16.mxu0 %v549
        %1539 = vmatmul.mubr.bf16.gmra.mrb[0].mxu0 %v548
        %v1540 = vpop.f32.mrb[0].mxu0
        %v1541 = vadd.f32 %v1380, %v1540
        %v1542 = vpop.f32.mrb[0].mxu0
        %v1543 = vpop.f32.mrb[0].mxu0
        %v1544 = vadd.f32 %v1383, %v1543
        %v1545 = vpop.f32.mrb[0].mxu0
        %1546 = vmatprep.mubr.bf16.mxu0 %v557
        %1547 = vmatmul.mubr.bf16.gmra.mrb[0].mxu0 %v556
        %v1548 = vpop.f32.mrb[0].mxu0
        %v1549 = vadd.f32 %v1388, %v1548
        %v1550 = vpop.f32.mrb[0].mxu0
        %v1551 = vpop.f32.mrb[0].mxu0
        %v1552 = vadd.f32 %v1391, %v1551
        %v1553 = vpop.f32.mrb[0].mxu0
        %1554 = vmatprep.mubr.bf16.mxu0 %v565
        %1555 = vmatmul.mubr.bf16.gmra.mrb[0].mxu0 %v564
        %v1556 = vpop.f32.mrb[0].mxu0
        %v1557 = vadd.f32 %v1396, %v1556
        %v1558 = vpop.f32.mrb[0].mxu0
        %v1559 = vpop.f32.mrb[0].mxu0
        %v1560 = vadd.f32 %v1399, %v1559
        %v1561 = vpop.f32.mrb[0].mxu0
        %1562 = vmatprep.mubr.bf16.mxu0 %v573
        %1563 = vmatmul.mubr.bf16.gmra.mrb[0].mxu0 %v572
        %v1564 = vpop.f32.mrb[0].mxu0
        %v1565 = vadd.f32 %v1404, %v1564
        %v1566 = vpop.f32.mrb[0].mxu0
        %v1567 = vpop.f32.mrb[0].mxu0
        %v1568 = vadd.f32 %v1407, %v1567
        %v1569 = vpop.f32.mrb[0].mxu0
        %1570 = vmatprep.mubr.bf16.mxu0 %v581
        %1571 = vmatmul.mubr.bf16.gmra.mrb[0].mxu0 %v580
        %v1572 = vpop.f32.mrb[0].mxu0
        %v1573 = vadd.f32 %v1412, %v1572
        %v1574 = vpop.f32.mrb[0].mxu0
        %v1575 = vpop.f32.mrb[0].mxu0
        %v1576 = vadd.f32 %v1415, %v1575
        %v1577 = vpop.f32.mrb[0].mxu0
        %1578 = vmatprep.mubr.bf16.mxu0 %v589
        %1579 = vmatmul.mubr.bf16.gmra.mrb[0].mxu0 %v588
        %v1580 = vpop.f32.mrb[0].mxu0
        %v1581 = vadd.f32 %v1420, %v1580
        %v1582 = vpop.f32.mrb[0].mxu0
        %v1583 = vpop.f32.mrb[0].mxu0
        %v1584 = vadd.f32 %v1423, %v1583
        %v1585 = vpop.f32.mrb[0].mxu0
        %1586 = vmatprep.mubr.bf16.mxu0 %v597
        %1587 = vmatmul.mubr.bf16.gmra.mrb[0].mxu0 %v596
        %v1588 = vpop.f32.mrb[0].mxu0
        %v1589 = vadd.f32 %v1428, %v1588
        %v1590 = vpop.f32.mrb[0].mxu0
        %v1591 = vpop.f32.mrb[0].mxu0
        %v1592 = vadd.f32 %v1431, %v1591
        %v1593 = vpop.f32.mrb[0].mxu0
        %1594 = vmatprep.mubr.bf16.mxu0 %v605
        %1595 = vmatmul.mubr.bf16.gmra.mrb[0].mxu0 %v604
        %v1596 = vpop.f32.mrb[0].mxu0
        %v1597 = vadd.f32 %v1436, %v1596
        %v1598 = vpop.f32.mrb[0].mxu0
        %v1599 = vpop.f32.mrb[0].mxu0
        %v1600 = vadd.f32 %v1439, %v1599
        %v1601 = vpop.f32.mrb[0].mxu0
        %1602 = vmatprep.mubr.bf16.mxu0 %v613
        %1603 = vmatmul.mubr.bf16.gmra.mrb[0].mxu0 %v612
        %v1604 = vpop.f32.mrb[0].mxu0
        %v1605 = vadd.f32 %v1444, %v1604
        %v1606 = vpop.f32.mrb[0].mxu0
        %v1607 = vpop.f32.mrb[0].mxu0
        %v1608 = vadd.f32 %v1447, %v1607
        %v1609 = vpop.f32.mrb[0].mxu0
        %1610 = vmatprep.mubr.bf16.mxu0 %v621
        %1611 = vmatmul.mubr.bf16.gmra.mrb[0].mxu0 %v620
        %v1612 = vpop.f32.mrb[0].mxu0
        %v1613 = vadd.f32 %v1452, %v1612
        %v1614 = vpop.f32.mrb[0].mxu0
        %v1615 = vpop.f32.mrb[0].mxu0
        %v1616 = vadd.f32 %v1455, %v1615
        %v1617 = vpop.f32.mrb[0].mxu0
        %1618 = vmatprep.mubr.bf16.mxu0 %v629
        %1619 = vmatmul.mubr.bf16.gmra.mrb[0].mxu0 %v628
        %v1620 = vpop.f32.mrb[0].mxu0
        %v1621 = vadd.f32 %v1460, %v1620
        %v1622 = vpop.f32.mrb[0].mxu0
        %v1623 = vpop.f32.mrb[0].mxu0
        %v1624 = vadd.f32 %v1463, %v1623
        %v1625 = vpop.f32.mrb[0].mxu0
        %1626 = vmatprep.mubr.bf16.mxu0 %v637
        %1627 = vmatmul.mubr.bf16.gmra.mrb[0].mxu0 %v636
        %v1628 = vpop.f32.mrb[0].mxu0
        %v1629 = vadd.f32 %v1468, %v1628
        %v1630 = vpop.f32.mrb[0].mxu0
        %v1631 = vpop.f32.mrb[0].mxu0
        %v1632 = vadd.f32 %v1471, %v1631
        %v1633 = vpop.f32.mrb[0].mxu0
        %1634 = vmatprep.mubr.bf16.mxu0 %v645
        %1635 = vmatmul.mubr.bf16.gmra.mrb[0].mxu0 %v644
        %v1636 = vpop.f32.mrb[0].mxu0
        %v1637 = vadd.f32 %v1476, %v1636
        %v1638 = vpop.f32.mrb[0].mxu0
        %v1639 = vpop.f32.mrb[0].mxu0
        %v1640 = vadd.f32 %v1479, %v1639
        %v1641 = vpop.f32.mrb[0].mxu0
        %1642 = vdwg.mxu0
        %1643 = vmatprep.subr.bf16.mxu0 0
        %1644 = vmatpush1.bf16.msra.mxu0 %v1080
        %1645 = vmatprep.subr.bf16.mxu0 0
        %1646 = vmatpush1.bf16.msra.mxu0 %v1081
        %1647 = vmatprep.subr.bf16.mxu0 0
        %1648 = vmatpush1.bf16.msra.mxu0 %v1082
        %1649 = vmatprep.subr.bf16.mxu0 0
        %1650 = vmatpush1.bf16.msra.mxu0 %v1083
        %1651 = vmatprep.subr.bf16.mxu0 0
        %1652 = vmatpush1.bf16.msra.mxu0 %v1084
        %1653 = vmatprep.subr.bf16.mxu0 0
        %1654 = vmatpush1.bf16.msra.mxu0 %v1085
        %1655 = vmatprep.subr.bf16.mxu0 0
        %1656 = vmatpush1.bf16.msra.mxu0 %v1086
        %1657 = vmatprep.subr.bf16.mxu0 0
        %1658 = vmatpush1.bf16.msra.mxu0 %v1087
        %1659 = vmatprep.subr.bf16.mxu0 0
        %1660 = vmatpush1.bf16.msra.mxu0 %v1088
        %1661 = vmatprep.subr.bf16.mxu0 0
        %1662 = vmatpush1.bf16.msra.mxu0 %v1089
        %1663 = vmatprep.subr.bf16.mxu0 0
        %1664 = vmatpush1.bf16.msra.mxu0 %v1090
        %1665 = vmatprep.subr.bf16.mxu0 0
        %1666 = vmatpush1.bf16.msra.mxu0 %v1091
        %1667 = vmatprep.subr.bf16.mxu0 0
        %1668 = vmatpush1.bf16.msra.mxu0 %v1092
        %1669 = vmatprep.subr.bf16.mxu0 0
        %1670 = vmatpush1.bf16.msra.mxu0 %v1093
        %1671 = vmatprep.subr.bf16.mxu0 0
        %1672 = vmatpush1.bf16.msra.mxu0 %v1094
        %1673 = vmatprep.subr.bf16.mxu0 0
        %1674 = vmatpush1.bf16.msra.mxu0 %v1095
        %1675 = vmatprep.mubr.bf16.mxu0 %v527
        %1676 = vmatmul.mubr.bf16.gmra.mrb[0].mxu0 %v526
        %v1677 = vpop.f32.mrb[0].mxu0
        %v1678 = vadd.f32 %v1517, %v1677
        %v1679 = vpop.f32.mrb[0].mxu0
        %v1680 = vpop.f32.mrb[0].mxu0
        %v1681 = vadd.f32 %v1520, %v1680
        %v1682 = vpop.f32.mrb[0].mxu0
        %1683 = vmatprep.mubr.bf16.mxu0 %v535
        %1684 = vmatmul.mubr.bf16.gmra.mrb[0].mxu0 %v534
        %v1685 = vpop.f32.mrb[0].mxu0
        %v1686 = vadd.f32 %v1525, %v1685
        %v1687 = vpop.f32.mrb[0].mxu0
        %v1688 = vpop.f32.mrb[0].mxu0
        %v1689 = vadd.f32 %v1528, %v1688
        %v1690 = vpop.f32.mrb[0].mxu0
        %1691 = vmatprep.mubr.bf16.mxu0 %v543
        %1692 = vmatmul.mubr.bf16.gmra.mrb[0].mxu0 %v542
        %v1693 = vpop.f32.mrb[0].mxu0
        %v1694 = vadd.f32 %v1533, %v1693
        %v1695 = vpop.f32.mrb[0].mxu0
        %v1696 = vpop.f32.mrb[0].mxu0
        %v1697 = vadd.f32 %v1536, %v1696
        %v1698 = vpop.f32.mrb[0].mxu0
        %1699 = vmatprep.mubr.bf16.mxu0 %v551
        %1700 = vmatmul.mubr.bf16.gmra.mrb[0].mxu0 %v550
        %v1701 = vpop.f32.mrb[0].mxu0
        %v1702 = vadd.f32 %v1541, %v1701
        %v1703 = vpop.f32.mrb[0].mxu0
        %v1704 = vpop.f32.mrb[0].mxu0
        %v1705 = vadd.f32 %v1544, %v1704
        %v1706 = vpop.f32.mrb[0].mxu0
        %1707 = vmatprep.mubr.bf16.mxu0 %v559
        %1708 = vmatmul.mubr.bf16.gmra.mrb[0].mxu0 %v558
        %v1709 = vpop.f32.mrb[0].mxu0
        %v1710 = vadd.f32 %v1549, %v1709
        %v1711 = vpop.f32.mrb[0].mxu0
        %v1712 = vpop.f32.mrb[0].mxu0
        %v1713 = vadd.f32 %v1552, %v1712
        %v1714 = vpop.f32.mrb[0].mxu0
        %1715 = vmatprep.mubr.bf16.mxu0 %v567
        %1716 = vmatmul.mubr.bf16.gmra.mrb[0].mxu0 %v566
        %v1717 = vpop.f32.mrb[0].mxu0
        %v1718 = vadd.f32 %v1557, %v1717
        %v1719 = vpop.f32.mrb[0].mxu0
        %v1720 = vpop.f32.mrb[0].mxu0
        %v1721 = vadd.f32 %v1560, %v1720
        %v1722 = vpop.f32.mrb[0].mxu0
        %1723 = vmatprep.mubr.bf16.mxu0 %v575
        %1724 = vmatmul.mubr.bf16.gmra.mrb[0].mxu0 %v574
        %v1725 = vpop.f32.mrb[0].mxu0
        %v1726 = vadd.f32 %v1565, %v1725
        %v1727 = vpop.f32.mrb[0].mxu0
        %v1728 = vpop.f32.mrb[0].mxu0
        %v1729 = vadd.f32 %v1568, %v1728
        %v1730 = vpop.f32.mrb[0].mxu0
        %1731 = vmatprep.mubr.bf16.mxu0 %v583
        %1732 = vmatmul.mubr.bf16.gmra.mrb[0].mxu0 %v582
        %v1733 = vpop.f32.mrb[0].mxu0
        %v1734 = vadd.f32 %v1573, %v1733
        %v1735 = vpop.f32.mrb[0].mxu0
        %v1736 = vpop.f32.mrb[0].mxu0
        %v1737 = vadd.f32 %v1576, %v1736
        %v1738 = vpop.f32.mrb[0].mxu0
        %1739 = vmatprep.mubr.bf16.mxu0 %v591
        %1740 = vmatmul.mubr.bf16.gmra.mrb[0].mxu0 %v590
        %v1741 = vpop.f32.mrb[0].mxu0
        %v1742 = vadd.f32 %v1581, %v1741
        %v1743 = vpop.f32.mrb[0].mxu0
        %v1744 = vpop.f32.mrb[0].mxu0
        %v1745 = vadd.f32 %v1584, %v1744
        %v1746 = vpop.f32.mrb[0].mxu0
        %1747 = vmatprep.mubr.bf16.mxu0 %v599
        %1748 = vmatmul.mubr.bf16.gmra.mrb[0].mxu0 %v598
        %v1749 = vpop.f32.mrb[0].mxu0
        %v1750 = vadd.f32 %v1589, %v1749
        %v1751 = vpop.f32.mrb[0].mxu0
        %v1752 = vpop.f32.mrb[0].mxu0
        %v1753 = vadd.f32 %v1592, %v1752
        %v1754 = vpop.f32.mrb[0].mxu0
        %1755 = vmatprep.mubr.bf16.mxu0 %v607
        %1756 = vmatmul.mubr.bf16.gmra.mrb[0].mxu0 %v606
        %v1757 = vpop.f32.mrb[0].mxu0
        %v1758 = vadd.f32 %v1597, %v1757
        %v1759 = vpop.f32.mrb[0].mxu0
        %v1760 = vpop.f32.mrb[0].mxu0
        %v1761 = vadd.f32 %v1600, %v1760
        %v1762 = vpop.f32.mrb[0].mxu0
        %1763 = vmatprep.mubr.bf16.mxu0 %v615
        %1764 = vmatmul.mubr.bf16.gmra.mrb[0].mxu0 %v614
        %v1765 = vpop.f32.mrb[0].mxu0
        %v1766 = vadd.f32 %v1605, %v1765
        %v1767 = vpop.f32.mrb[0].mxu0
        %v1768 = vpop.f32.mrb[0].mxu0
        %v1769 = vadd.f32 %v1608, %v1768
        %v1770 = vpop.f32.mrb[0].mxu0
        %1771 = vmatprep.mubr.bf16.mxu0 %v623
        %1772 = vmatmul.mubr.bf16.gmra.mrb[0].mxu0 %v622
        %v1773 = vpop.f32.mrb[0].mxu0
        %v1774 = vadd.f32 %v1613, %v1773
        %v1775 = vpop.f32.mrb[0].mxu0
        %v1776 = vpop.f32.mrb[0].mxu0
        %v1777 = vadd.f32 %v1616, %v1776
        %v1778 = vpop.f32.mrb[0].mxu0
        %1779 = vmatprep.mubr.bf16.mxu0 %v631
        %1780 = vmatmul.mubr.bf16.gmra.mrb[0].mxu0 %v630
        %v1781 = vpop.f32.mrb[0].mxu0
        %v1782 = vadd.f32 %v1621, %v1781
        %v1783 = vpop.f32.mrb[0].mxu0
        %v1784 = vpop.f32.mrb[0].mxu0
        %v1785 = vadd.f32 %v1624, %v1784
        %v1786 = vpop.f32.mrb[0].mxu0
        %1787 = vmatprep.mubr.bf16.mxu0 %v639
        %1788 = vmatmul.mubr.bf16.gmra.mrb[0].mxu0 %v638
        %v1789 = vpop.f32.mrb[0].mxu0
        %v1790 = vadd.f32 %v1629, %v1789
        %v1791 = vpop.f32.mrb[0].mxu0
        %v1792 = vpop.f32.mrb[0].mxu0
        %v1793 = vadd.f32 %v1632, %v1792
        %v1794 = vpop.f32.mrb[0].mxu0
        %1795 = vmatprep.mubr.bf16.mxu0 %v647
        %1796 = vmatmul.mubr.bf16.gmra.mrb[0].mxu0 %v646
        %v1797 = vpop.f32.mrb[0].mxu0
        %v1798 = vadd.f32 %v1637, %v1797
        %v1799 = vpop.f32.mrb[0].mxu0
        %v1800 = vpop.f32.mrb[0].mxu0
        %v1801 = vadd.f32 %v1640, %v1800
        %v1802 = vpop.f32.mrb[0].mxu0
        %1803 = vdwg.mxu0
        %v1804 = vmax.f32 %v1678, 0.0
        %v1805 = vmax.f32 %v1681, 0.0
        %v1806 = vmax.f32 %v1686, 0.0
        %v1807 = vmax.f32 %v1689, 0.0
        %v1808 = vmax.f32 %v1694, 0.0
        %v1809 = vmax.f32 %v1697, 0.0
        %v1810 = vmax.f32 %v1702, 0.0
        %v1811 = vmax.f32 %v1705, 0.0
        %v1812 = vmax.f32 %v1710, 0.0
        %v1813 = vmax.f32 %v1713, 0.0
        %v1814 = vmax.f32 %v1718, 0.0
        %v1815 = vmax.f32 %v1721, 0.0
        %v1816 = vmax.f32 %v1726, 0.0
        %v1817 = vmax.f32 %v1729, 0.0
        %v1818 = vmax.f32 %v1734, 0.0
        %v1819 = vmax.f32 %v1737, 0.0
        %v1820 = vmax.f32 %v1742, 0.0
        %v1821 = vmax.f32 %v1745, 0.0
        %v1822 = vmax.f32 %v1750, 0.0
        %v1823 = vmax.f32 %v1753, 0.0
        %v1824 = vmax.f32 %v1758, 0.0
        %v1825 = vmax.f32 %v1761, 0.0
        %v1826 = vmax.f32 %v1766, 0.0
        %v1827 = vmax.f32 %v1769, 0.0
        %v1828 = vmax.f32 %v1774, 0.0
        %v1829 = vmax.f32 %v1777, 0.0
        %v1830 = vmax.f32 %v1782, 0.0
        %v1831 = vmax.f32 %v1785, 0.0
        %v1832 = vmax.f32 %v1790, 0.0
        %v1833 = vmax.f32 %v1793, 0.0
        %v1834 = vmax.f32 %v1798, 0.0
        %v1835 = vmax.f32 %v1801, 0.0
        %v1836 = vpack.c.bf16 %v1805, %v1804
        %v1837 = vpack.c.bf16 %v1807, %v1806
        %v1838 = vpack.c.bf16 %v1809, %v1808
        %v1839 = vpack.c.bf16 %v1811, %v1810
        %v1840 = vpack.c.bf16 %v1813, %v1812
        %v1841 = vpack.c.bf16 %v1815, %v1814
        %v1842 = vpack.c.bf16 %v1817, %v1816
        %v1843 = vpack.c.bf16 %v1819, %v1818
        %v1844 = vpack.c.bf16 %v1821, %v1820
        %v1845 = vpack.c.bf16 %v1823, %v1822
        %v1846 = vpack.c.bf16 %v1825, %v1824
        %v1847 = vpack.c.bf16 %v1827, %v1826
        %v1848 = vpack.c.bf16 %v1829, %v1828
        %v1849 = vpack.c.bf16 %v1831, %v1830
        %v1850 = vpack.c.bf16 %v1833, %v1832
        %v1851 = vpack.c.bf16 %v1835, %v1834
        %v1852 = vld [vmem:[#allocation7] sm:$0xff]
        %v1853 = vld [vmem:[#allocation7 + $0x8] sm:$0xff]
        %v1854 = vld [vmem:[#allocation7 + $0x10] sm:$0xff]
        %v1855 = vld [vmem:[#allocation7 + $0x18] sm:$0xff]
        %v1856 = vld [vmem:[#allocation7 + $0x20] sm:$0xff]
        %v1857 = vld [vmem:[#allocation7 + $0x28] sm:$0xff]
        %v1858 = vld [vmem:[#allocation7 + $0x30] sm:$0xff]
        %v1859 = vld [vmem:[#allocation7 + $0x38] sm:$0xff]
        %v1860 = vld [vmem:[#allocation7 + $0x40] sm:$0xff]
        %v1861 = vld [vmem:[#allocation7 + $0x48] sm:$0xff]
        %v1862 = vld [vmem:[#allocation7 + $0x50] sm:$0xff]
        %v1863 = vld [vmem:[#allocation7 + $0x58] sm:$0xff]
        %v1864 = vld [vmem:[#allocation7 + $0x60] sm:$0xff]
        %v1865 = vld [vmem:[#allocation7 + $0x68] sm:$0xff]
        %v1866 = vld [vmem:[#allocation7 + $0x70] sm:$0xff]
        %v1867 = vld [vmem:[#allocation7 + $0x78] sm:$0xff]
        %v1884 = vunpack.c.l.b16 %v1852
        %v1885 = vunpack.c.h.b16 %v1852
        %v1886 = vunpack.c.l.b16 %v1853
        %v1887 = vunpack.c.h.b16 %v1853
        %v1888 = vunpack.c.l.b16 %v1854
        %v1889 = vunpack.c.h.b16 %v1854
        %v1890 = vunpack.c.l.b16 %v1855
        %v1891 = vunpack.c.h.b16 %v1855
        %v1892 = vunpack.c.l.b16 %v1856
        %v1893 = vunpack.c.h.b16 %v1856
        %v1894 = vunpack.c.l.b16 %v1857
        %v1895 = vunpack.c.h.b16 %v1857
        %v1896 = vunpack.c.l.b16 %v1858
        %v1897 = vunpack.c.h.b16 %v1858
        %v1898 = vunpack.c.l.b16 %v1859
        %v1899 = vunpack.c.h.b16 %v1859
        %v1900 = vunpack.c.l.b16 %v1860
        %v1901 = vunpack.c.h.b16 %v1860
        %v1902 = vunpack.c.l.b16 %v1861
        %v1903 = vunpack.c.h.b16 %v1861
        %v1904 = vunpack.c.l.b16 %v1862
        %v1905 = vunpack.c.h.b16 %v1862
        %v1906 = vunpack.c.l.b16 %v1863
        %v1907 = vunpack.c.h.b16 %v1863
        %v1908 = vunpack.c.l.b16 %v1864
        %v1909 = vunpack.c.h.b16 %v1864
        %v1910 = vunpack.c.l.b16 %v1865
        %v1911 = vunpack.c.h.b16 %v1865
        %v1912 = vunpack.c.l.b16 %v1866
        %v1913 = vunpack.c.h.b16 %v1866
        %v1914 = vunpack.c.l.b16 %v1867
        %v1915 = vunpack.c.h.b16 %v1867
        %v1916 = vpack.c.b16 %v1886, %v1884
        %v1917 = vpack.c.b16 %v1887, %v1885
        %v1918 = vpack.c.b16 %v1890, %v1888
        %v1919 = vpack.c.b16 %v1891, %v1889
        %v1920 = vpack.c.b16 %v1894, %v1892
        %v1921 = vpack.c.b16 %v1895, %v1893
        %v1922 = vpack.c.b16 %v1898, %v1896
        %v1923 = vpack.c.b16 %v1899, %v1897
        %v1924 = vpack.c.b16 %v1902, %v1900
        %v1925 = vpack.c.b16 %v1903, %v1901
        %v1926 = vpack.c.b16 %v1906, %v1904
        %v1927 = vpack.c.b16 %v1907, %v1905
        %v1928 = vpack.c.b16 %v1910, %v1908
        %v1929 = vpack.c.b16 %v1911, %v1909
        %v1930 = vpack.c.b16 %v1914, %v1912
        %v1931 = vpack.c.b16 %v1915, %v1913
        %1948 = vmatprep.subr.bf16.mxu0 %v1917
        %1949 = vmatpush1.bf16.msra.mxu0 %v1916
        %1950 = vmatprep.subr.bf16.mxu0 %v1919
        %1951 = vmatpush1.bf16.msra.mxu0 %v1918
        %1952 = vmatprep.subr.bf16.mxu0 %v1921
        %1953 = vmatpush1.bf16.msra.mxu0 %v1920
        %1954 = vmatprep.subr.bf16.mxu0 %v1923
        %1955 = vmatpush1.bf16.msra.mxu0 %v1922
        %1956 = vmatprep.subr.bf16.mxu0 %v1925
        %1957 = vmatpush1.bf16.msra.mxu0 %v1924
        %1958 = vmatprep.subr.bf16.mxu0 %v1927
        %1959 = vmatpush1.bf16.msra.mxu0 %v1926
        %1960 = vmatprep.subr.bf16.mxu0 %v1929
        %1961 = vmatpush1.bf16.msra.mxu0 %v1928
        %1962 = vmatprep.subr.bf16.mxu0 %v1931
        %1963 = vmatpush1.bf16.msra.mxu0 %v1930
        %1964 = vmatprep.subr.bf16.mxu0 0
        %1965 = vmatpush1.bf16.msra.mxu0 0
        %1966 = vmatprep.subr.bf16.mxu0 0
        %1967 = vmatpush1.bf16.msra.mxu0 0
        %1968 = vmatprep.subr.bf16.mxu0 0
        %1969 = vmatpush1.bf16.msra.mxu0 0
        %1970 = vmatprep.subr.bf16.mxu0 0
        %1971 = vmatpush1.bf16.msra.mxu0 0
        %1972 = vmatprep.subr.bf16.mxu0 0
        %1973 = vmatpush1.bf16.msra.mxu0 0
        %1974 = vmatprep.subr.bf16.mxu0 0
        %1975 = vmatpush1.bf16.msra.mxu0 0
        %1976 = vmatprep.subr.bf16.mxu0 0
        %1977 = vmatpush1.bf16.msra.mxu0 0
        %1978 = vmatprep.subr.bf16.mxu0 0
        %1979 = vmatpush1.bf16.msra.mxu0 0
        %1980 = vmatprep.mubr.bf16.mxu0 0
        %1981 = vmatmul.mubr.bf16.gmra.mrb[0].mxu0 %v1836
        %v1982 = vpop.f32.mrb[0].mxu0
        %v1983 = vadd.f32 0.0, %v1982
        %v1984 = vpop.f32.mrb[0].mxu0
        %v1985 = vadd.f32 0.0, %v1984
        %v1986 = vpop.f32.mrb[0].mxu0
        %v1987 = vadd.f32 0.0, %v1986
        %v1988 = vpop.f32.mrb[0].mxu0
        %v1989 = vadd.f32 0.0, %v1988
        %1990 = vmatprep.mubr.bf16.mxu0 0
        %1991 = vmatmul.mubr.bf16.gmra.mrb[0].mxu0 %v1837
        %v1992 = vpop.f32.mrb[0].mxu0
        %v1993 = vadd.f32 0.0, %v1992
        %v1994 = vpop.f32.mrb[0].mxu0
        %v1995 = vadd.f32 0.0, %v1994
        %v1996 = vpop.f32.mrb[0].mxu0
        %v1997 = vadd.f32 0.0, %v1996
        %v1998 = vpop.f32.mrb[0].mxu0
        %v1999 = vadd.f32 0.0, %v1998
        %2000 = vmatprep.mubr.bf16.mxu0 0
        %2001 = vmatmul.mubr.bf16.gmra.mrb[0].mxu0 %v1838
        %v2002 = vpop.f32.mrb[0].mxu0
        %v2003 = vadd.f32 0.0, %v2002
        %v2004 = vpop.f32.mrb[0].mxu0
        %v2005 = vadd.f32 0.0, %v2004
        %v2006 = vpop.f32.mrb[0].mxu0
        %v2007 = vadd.f32 0.0, %v2006
        %v2008 = vpop.f32.mrb[0].mxu0
        %v2009 = vadd.f32 0.0, %v2008
        %2010 = vmatprep.mubr.bf16.mxu0 0
        %2011 = vmatmul.mubr.bf16.gmra.mrb[0].mxu0 %v1839
        %v2012 = vpop.f32.mrb[0].mxu0
        %v2013 = vadd.f32 0.0, %v2012
        %v2014 = vpop.f32.mrb[0].mxu0
        %v2015 = vadd.f32 0.0, %v2014
        %v2016 = vpop.f32.mrb[0].mxu0
        %v2017 = vadd.f32 0.0, %v2016
        %v2018 = vpop.f32.mrb[0].mxu0
        %v2019 = vadd.f32 0.0, %v2018
        %2020 = vmatprep.mubr.bf16.mxu0 0
        %2021 = vmatmul.mubr.bf16.gmra.mrb[0].mxu0 %v1840
        %v2022 = vpop.f32.mrb[0].mxu0
        %v2023 = vadd.f32 0.0, %v2022
        %v2024 = vpop.f32.mrb[0].mxu0
        %v2025 = vadd.f32 0.0, %v2024
        %v2026 = vpop.f32.mrb[0].mxu0
        %v2027 = vadd.f32 0.0, %v2026
        %v2028 = vpop.f32.mrb[0].mxu0
        %v2029 = vadd.f32 0.0, %v2028
        %2030 = vmatprep.mubr.bf16.mxu0 0
        %2031 = vmatmul.mubr.bf16.gmra.mrb[0].mxu0 %v1841
        %v2032 = vpop.f32.mrb[0].mxu0
        %v2033 = vadd.f32 0.0, %v2032
        %v2034 = vpop.f32.mrb[0].mxu0
        %v2035 = vadd.f32 0.0, %v2034
        %v2036 = vpop.f32.mrb[0].mxu0
        %v2037 = vadd.f32 0.0, %v2036
        %v2038 = vpop.f32.mrb[0].mxu0
        %v2039 = vadd.f32 0.0, %v2038
        %2040 = vmatprep.mubr.bf16.mxu0 0
        %2041 = vmatmul.mubr.bf16.gmra.mrb[0].mxu0 %v1842
        %v2042 = vpop.f32.mrb[0].mxu0
        %v2043 = vadd.f32 0.0, %v2042
        %v2044 = vpop.f32.mrb[0].mxu0
        %v2045 = vadd.f32 0.0, %v2044
        %v2046 = vpop.f32.mrb[0].mxu0
        %v2047 = vadd.f32 0.0, %v2046
        %v2048 = vpop.f32.mrb[0].mxu0
        %v2049 = vadd.f32 0.0, %v2048
        %2050 = vmatprep.mubr.bf16.mxu0 0
        %2051 = vmatmul.mubr.bf16.gmra.mrb[0].mxu0 %v1843
        %v2052 = vpop.f32.mrb[0].mxu0
        %v2053 = vadd.f32 0.0, %v2052
        %v2054 = vpop.f32.mrb[0].mxu0
        %v2055 = vadd.f32 0.0, %v2054
        %v2056 = vpop.f32.mrb[0].mxu0
        %v2057 = vadd.f32 0.0, %v2056
        %v2058 = vpop.f32.mrb[0].mxu0
        %v2059 = vadd.f32 0.0, %v2058
        %2060 = vmatprep.mubr.bf16.mxu0 0
        %2061 = vmatmul.mubr.bf16.gmra.mrb[0].mxu0 %v1844
        %v2062 = vpop.f32.mrb[0].mxu0
        %v2063 = vadd.f32 0.0, %v2062
        %v2064 = vpop.f32.mrb[0].mxu0
        %v2065 = vadd.f32 0.0, %v2064
        %v2066 = vpop.f32.mrb[0].mxu0
        %v2067 = vadd.f32 0.0, %v2066
        %v2068 = vpop.f32.mrb[0].mxu0
        %v2069 = vadd.f32 0.0, %v2068
        %2070 = vmatprep.mubr.bf16.mxu0 0
        %2071 = vmatmul.mubr.bf16.gmra.mrb[0].mxu0 %v1845
        %v2072 = vpop.f32.mrb[0].mxu0
        %v2073 = vadd.f32 0.0, %v2072
        %v2074 = vpop.f32.mrb[0].mxu0
        %v2075 = vadd.f32 0.0, %v2074
        %v2076 = vpop.f32.mrb[0].mxu0
        %v2077 = vadd.f32 0.0, %v2076
        %v2078 = vpop.f32.mrb[0].mxu0
        %v2079 = vadd.f32 0.0, %v2078
        %2080 = vmatprep.mubr.bf16.mxu0 0
        %2081 = vmatmul.mubr.bf16.gmra.mrb[0].mxu0 %v1846
        %v2082 = vpop.f32.mrb[0].mxu0
        %v2083 = vadd.f32 0.0, %v2082
        %v2084 = vpop.f32.mrb[0].mxu0
        %v2085 = vadd.f32 0.0, %v2084
        %v2086 = vpop.f32.mrb[0].mxu0
        %v2087 = vadd.f32 0.0, %v2086
        %v2088 = vpop.f32.mrb[0].mxu0
        %v2089 = vadd.f32 0.0, %v2088
        %2090 = vmatprep.mubr.bf16.mxu0 0
        %2091 = vmatmul.mubr.bf16.gmra.mrb[0].mxu0 %v1847
        %v2092 = vpop.f32.mrb[0].mxu0
        %v2093 = vadd.f32 0.0, %v2092
        %v2094 = vpop.f32.mrb[0].mxu0
        %v2095 = vadd.f32 0.0, %v2094
        %v2096 = vpop.f32.mrb[0].mxu0
        %v2097 = vadd.f32 0.0, %v2096
        %v2098 = vpop.f32.mrb[0].mxu0
        %v2099 = vadd.f32 0.0, %v2098
        %2100 = vmatprep.mubr.bf16.mxu0 0
        %2101 = vmatmul.mubr.bf16.gmra.mrb[0].mxu0 %v1848
        %v2102 = vpop.f32.mrb[0].mxu0
        %v2103 = vadd.f32 0.0, %v2102
        %v2104 = vpop.f32.mrb[0].mxu0
        %v2105 = vadd.f32 0.0, %v2104
        %v2106 = vpop.f32.mrb[0].mxu0
        %v2107 = vadd.f32 0.0, %v2106
        %v2108 = vpop.f32.mrb[0].mxu0
        %v2109 = vadd.f32 0.0, %v2108
        %2110 = vmatprep.mubr.bf16.mxu0 0
        %2111 = vmatmul.mubr.bf16.gmra.mrb[0].mxu0 %v1849
        %v2112 = vpop.f32.mrb[0].mxu0
        %v2113 = vadd.f32 0.0, %v2112
        %v2114 = vpop.f32.mrb[0].mxu0
        %v2115 = vadd.f32 0.0, %v2114
        %v2116 = vpop.f32.mrb[0].mxu0
        %v2117 = vadd.f32 0.0, %v2116
        %v2118 = vpop.f32.mrb[0].mxu0
        %v2119 = vadd.f32 0.0, %v2118
        %2120 = vmatprep.mubr.bf16.mxu0 0
        %2121 = vmatmul.mubr.bf16.gmra.mrb[0].mxu0 %v1850
        %v2122 = vpop.f32.mrb[0].mxu0
        %v2123 = vadd.f32 0.0, %v2122
        %v2124 = vpop.f32.mrb[0].mxu0
        %v2125 = vadd.f32 0.0, %v2124
        %v2126 = vpop.f32.mrb[0].mxu0
        %v2127 = vadd.f32 0.0, %v2126
        %v2128 = vpop.f32.mrb[0].mxu0
        %v2129 = vadd.f32 0.0, %v2128
        %2130 = vmatprep.mubr.bf16.mxu0 0
        %2131 = vmatmul.mubr.bf16.gmra.mrb[0].mxu0 %v1851
        %v2132 = vpop.f32.mrb[0].mxu0
        %v2133 = vadd.f32 0.0, %v2132
        %v2134 = vpop.f32.mrb[0].mxu0
        %v2135 = vadd.f32 0.0, %v2134
        %v2136 = vpop.f32.mrb[0].mxu0
        %v2137 = vadd.f32 0.0, %v2136
        %v2138 = vpop.f32.mrb[0].mxu0
        %v2139 = vadd.f32 0.0, %v2138
        %2140 = vdwg.mxu0
        %v2141 = vmax.f32 %v1983, 0.0
        %v2142 = vmax.f32 %v1985, 0.0
        %v2143 = vmax.f32 %v1987, 0.0
        %v2144 = vmax.f32 %v1989, 0.0
        %v2145 = vmax.f32 %v1993, 0.0
        %v2146 = vmax.f32 %v1995, 0.0
        %v2147 = vmax.f32 %v1997, 0.0
        %v2148 = vmax.f32 %v1999, 0.0
        %v2149 = vmax.f32 %v2003, 0.0
        %v2150 = vmax.f32 %v2005, 0.0
        %v2151 = vmax.f32 %v2007, 0.0
        %v2152 = vmax.f32 %v2009, 0.0
        %v2153 = vmax.f32 %v2013, 0.0
        %v2154 = vmax.f32 %v2015, 0.0
        %v2155 = vmax.f32 %v2017, 0.0
        %v2156 = vmax.f32 %v2019, 0.0
        %v2157 = vmax.f32 %v2023, 0.0
        %v2158 = vmax.f32 %v2025, 0.0
        %v2159 = vmax.f32 %v2027, 0.0
        %v2160 = vmax.f32 %v2029, 0.0
        %v2161 = vmax.f32 %v2033, 0.0
        %v2162 = vmax.f32 %v2035, 0.0
        %v2163 = vmax.f32 %v2037, 0.0
        %v2164 = vmax.f32 %v2039, 0.0
        %v2165 = vmax.f32 %v2043, 0.0
        %v2166 = vmax.f32 %v2045, 0.0
        %v2167 = vmax.f32 %v2047, 0.0
        %v2168 = vmax.f32 %v2049, 0.0
        %v2169 = vmax.f32 %v2053, 0.0
        %v2170 = vmax.f32 %v2055, 0.0
        %v2171 = vmax.f32 %v2057, 0.0
        %v2172 = vmax.f32 %v2059, 0.0
        %v2173 = vmax.f32 %v2063, 0.0
        %v2174 = vmax.f32 %v2065, 0.0
        %v2175 = vmax.f32 %v2067, 0.0
        %v2176 = vmax.f32 %v2069, 0.0
        %v2177 = vmax.f32 %v2073, 0.0
        %v2178 = vmax.f32 %v2075, 0.0
        %v2179 = vmax.f32 %v2077, 0.0
        %v2180 = vmax.f32 %v2079, 0.0
        %v2181 = vmax.f32 %v2083, 0.0
        %v2182 = vmax.f32 %v2085, 0.0
        %v2183 = vmax.f32 %v2087, 0.0
        %v2184 = vmax.f32 %v2089, 0.0
        %v2185 = vmax.f32 %v2093, 0.0
        %v2186 = vmax.f32 %v2095, 0.0
        %v2187 = vmax.f32 %v2097, 0.0
        %v2188 = vmax.f32 %v2099, 0.0
        %v2189 = vmax.f32 %v2103, 0.0
        %v2190 = vmax.f32 %v2105, 0.0
        %v2191 = vmax.f32 %v2107, 0.0
        %v2192 = vmax.f32 %v2109, 0.0
        %v2193 = vmax.f32 %v2113, 0.0
        %v2194 = vmax.f32 %v2115, 0.0
        %v2195 = vmax.f32 %v2117, 0.0
        %v2196 = vmax.f32 %v2119, 0.0
        %v2197 = vmax.f32 %v2123, 0.0
        %v2198 = vmax.f32 %v2125, 0.0
        %v2199 = vmax.f32 %v2127, 0.0
        %v2200 = vmax.f32 %v2129, 0.0
        %v2201 = vmax.f32 %v2133, 0.0
        %v2202 = vmax.f32 %v2135, 0.0
        %v2203 = vmax.f32 %v2137, 0.0
        %v2204 = vmax.f32 %v2139, 0.0
        %v2205 = vpack.c.bf16 %v2143, %v2141
        %v2206 = vpack.c.bf16 %v2144, %v2142
        %v2207 = vpack.c.bf16 %v2147, %v2145
        %v2208 = vpack.c.bf16 %v2148, %v2146
        %v2209 = vpack.c.bf16 %v2151, %v2149
        %v2210 = vpack.c.bf16 %v2152, %v2150
        %v2211 = vpack.c.bf16 %v2155, %v2153
        %v2212 = vpack.c.bf16 %v2156, %v2154
        %v2213 = vpack.c.bf16 %v2159, %v2157
        %v2214 = vpack.c.bf16 %v2160, %v2158
        %v2215 = vpack.c.bf16 %v2163, %v2161
        %v2216 = vpack.c.bf16 %v2164, %v2162
        %v2217 = vpack.c.bf16 %v2167, %v2165
        %v2218 = vpack.c.bf16 %v2168, %v2166
        %v2219 = vpack.c.bf16 %v2171, %v2169
        %v2220 = vpack.c.bf16 %v2172, %v2170
        %v2221 = vpack.c.bf16 %v2175, %v2173
        %v2222 = vpack.c.bf16 %v2176, %v2174
        %v2223 = vpack.c.bf16 %v2179, %v2177
        %v2224 = vpack.c.bf16 %v2180, %v2178
        %v2225 = vpack.c.bf16 %v2183, %v2181
        %v2226 = vpack.c.bf16 %v2184, %v2182
        %v2227 = vpack.c.bf16 %v2187, %v2185
        %v2228 = vpack.c.bf16 %v2188, %v2186
        %v2229 = vpack.c.bf16 %v2191, %v2189
        %v2230 = vpack.c.bf16 %v2192, %v2190
        %v2231 = vpack.c.bf16 %v2195, %v2193
        %v2232 = vpack.c.bf16 %v2196, %v2194
        %v2233 = vpack.c.bf16 %v2199, %v2197
        %v2234 = vpack.c.bf16 %v2200, %v2198
        %v2235 = vpack.c.bf16 %v2203, %v2201
        %v2236 = vpack.c.bf16 %v2204, %v2202
        %v2237 = vld [vmem:[#allocation8] sm:$0xff]
        %v2238 = vld [vmem:[#allocation8 + $0x8] sm:$0xff]
        %v2239 = vld [vmem:[#allocation8 + $0x10] sm:$0xff]
        %v2240 = vld [vmem:[#allocation8 + $0x18] sm:$0xff]
        %v2241 = vld [vmem:[#allocation8 + $0x20] sm:$0xff]
        %v2242 = vld [vmem:[#allocation8 + $0x28] sm:$0xff]
        %v2243 = vld [vmem:[#allocation8 + $0x30] sm:$0xff]
        %v2244 = vld [vmem:[#allocation8 + $0x38] sm:$0xff]
        %v2245 = vld [vmem:[#allocation8 + $0x40] sm:$0xff]
        %v2246 = vld [vmem:[#allocation8 + $0x48] sm:$0xff]
        %v2247 = vld [vmem:[#allocation8 + $0x50] sm:$0xff]
        %v2248 = vld [vmem:[#allocation8 + $0x58] sm:$0xff]
        %v2249 = vld [vmem:[#allocation8 + $0x60] sm:$0xff]
        %v2250 = vld [vmem:[#allocation8 + $0x68] sm:$0xff]
        %v2251 = vld [vmem:[#allocation8 + $0x70] sm:$0xff]
        %v2252 = vld [vmem:[#allocation8 + $0x78] sm:$0xff]
        %v2253 = vld [vmem:[#allocation8 + $0x80] sm:$0xff]
        %v2254 = vld [vmem:[#allocation8 + $0x88] sm:$0xff]
        %v2255 = vld [vmem:[#allocation8 + $0x90] sm:$0xff]
        %v2256 = vld [vmem:[#allocation8 + $0x98] sm:$0xff]
        %v2257 = vld [vmem:[#allocation8 + $0xa0] sm:$0xff]
        %v2258 = vld [vmem:[#allocation8 + $0xa8] sm:$0xff]
        %v2259 = vld [vmem:[#allocation8 + $0xb0] sm:$0xff]
        %v2260 = vld [vmem:[#allocation8 + $0xb8] sm:$0xff]
        %v2261 = vld [vmem:[#allocation8 + $0xc0] sm:$0xff]
        %v2262 = vld [vmem:[#allocation8 + $0xc8] sm:$0xff]
        %v2263 = vld [vmem:[#allocation8 + $0xd0] sm:$0xff]
        %v2264 = vld [vmem:[#allocation8 + $0xd8] sm:$0xff]
        %v2265 = vld [vmem:[#allocation8 + $0xe0] sm:$0xff]
        %v2266 = vld [vmem:[#allocation8 + $0xe8] sm:$0xff]
        %v2267 = vld [vmem:[#allocation8 + $0xf0] sm:$0xff]
        %v2268 = vld [vmem:[#allocation8 + $0xf8] sm:$0xff]
        %v2269 = vld [vmem:[#allocation8 + $0x100] sm:$0xff]
        %v2270 = vld [vmem:[#allocation8 + $0x108] sm:$0xff]
        %v2271 = vld [vmem:[#allocation8 + $0x110] sm:$0xff]
        %v2272 = vld [vmem:[#allocation8 + $0x118] sm:$0xff]
        %v2273 = vld [vmem:[#allocation8 + $0x120] sm:$0xff]
        %v2274 = vld [vmem:[#allocation8 + $0x128] sm:$0xff]
        %v2275 = vld [vmem:[#allocation8 + $0x130] sm:$0xff]
        %v2276 = vld [vmem:[#allocation8 + $0x138] sm:$0xff]
        %v2277 = vld [vmem:[#allocation8 + $0x140] sm:$0xff]
        %v2278 = vld [vmem:[#allocation8 + $0x148] sm:$0xff]
        %v2279 = vld [vmem:[#allocation8 + $0x150] sm:$0xff]
        %v2280 = vld [vmem:[#allocation8 + $0x158] sm:$0xff]
        %v2281 = vld [vmem:[#allocation8 + $0x160] sm:$0xff]
        %v2282 = vld [vmem:[#allocation8 + $0x168] sm:$0xff]
        %v2283 = vld [vmem:[#allocation8 + $0x170] sm:$0xff]
        %v2284 = vld [vmem:[#allocation8 + $0x178] sm:$0xff]
        %v2285 = vld [vmem:[#allocation8 + $0x180] sm:$0xff]
        %v2286 = vld [vmem:[#allocation8 + $0x188] sm:$0xff]
        %v2287 = vld [vmem:[#allocation8 + $0x190] sm:$0xff]
        %v2288 = vld [vmem:[#allocation8 + $0x198] sm:$0xff]
        %v2289 = vld [vmem:[#allocation8 + $0x1a0] sm:$0xff]
        %v2290 = vld [vmem:[#allocation8 + $0x1a8] sm:$0xff]
        %v2291 = vld [vmem:[#allocation8 + $0x1b0] sm:$0xff]
        %v2292 = vld [vmem:[#allocation8 + $0x1b8] sm:$0xff]
        %v2293 = vld [vmem:[#allocation8 + $0x1c0] sm:$0xff]
        %v2294 = vld [vmem:[#allocation8 + $0x1c8] sm:$0xff]
        %v2295 = vld [vmem:[#allocation8 + $0x1d0] sm:$0xff]
        %v2296 = vld [vmem:[#allocation8 + $0x1d8] sm:$0xff]
        %v2297 = vld [vmem:[#allocation8 + $0x1e0] sm:$0xff]
        %v2298 = vld [vmem:[#allocation8 + $0x1e8] sm:$0xff]
        %v2299 = vld [vmem:[#allocation8 + $0x1f0] sm:$0xff]
        %v2300 = vld [vmem:[#allocation8 + $0x1f8] sm:$0xff]
        %v2301 = vld [vmem:[#allocation8 + $0x200] sm:$0xff]
        %v2302 = vld [vmem:[#allocation8 + $0x208] sm:$0xff]
        %v2303 = vld [vmem:[#allocation8 + $0x210] sm:$0xff]
        %v2304 = vld [vmem:[#allocation8 + $0x218] sm:$0xff]
        %v2305 = vld [vmem:[#allocation8 + $0x220] sm:$0xff]
        %v2306 = vld [vmem:[#allocation8 + $0x228] sm:$0xff]
        %v2307 = vld [vmem:[#allocation8 + $0x230] sm:$0xff]
        %v2308 = vld [vmem:[#allocation8 + $0x238] sm:$0xff]
        %v2309 = vld [vmem:[#allocation8 + $0x240] sm:$0xff]
        %v2310 = vld [vmem:[#allocation8 + $0x248] sm:$0xff]
        %v2311 = vld [vmem:[#allocation8 + $0x250] sm:$0xff]
        %v2312 = vld [vmem:[#allocation8 + $0x258] sm:$0xff]
        %v2313 = vld [vmem:[#allocation8 + $0x260] sm:$0xff]
        %v2314 = vld [vmem:[#allocation8 + $0x268] sm:$0xff]
        %v2315 = vld [vmem:[#allocation8 + $0x270] sm:$0xff]
        %v2316 = vld [vmem:[#allocation8 + $0x278] sm:$0xff]
        %v2317 = vld [vmem:[#allocation8 + $0x280] sm:$0xff]
        %v2318 = vld [vmem:[#allocation8 + $0x288] sm:$0xff]
        %v2319 = vld [vmem:[#allocation8 + $0x290] sm:$0xff]
        %v2320 = vld [vmem:[#allocation8 + $0x298] sm:$0xff]
        %v2321 = vld [vmem:[#allocation8 + $0x2a0] sm:$0xff]
        %v2322 = vld [vmem:[#allocation8 + $0x2a8] sm:$0xff]
        %v2323 = vld [vmem:[#allocation8 + $0x2b0] sm:$0xff]
        %v2324 = vld [vmem:[#allocation8 + $0x2b8] sm:$0xff]
        %v2325 = vld [vmem:[#allocation8 + $0x2c0] sm:$0xff]
        %v2326 = vld [vmem:[#allocation8 + $0x2c8] sm:$0xff]
        %v2327 = vld [vmem:[#allocation8 + $0x2d0] sm:$0xff]
        %v2328 = vld [vmem:[#allocation8 + $0x2d8] sm:$0xff]
        %v2329 = vld [vmem:[#allocation8 + $0x2e0] sm:$0xff]
        %v2330 = vld [vmem:[#allocation8 + $0x2e8] sm:$0xff]
        %v2331 = vld [vmem:[#allocation8 + $0x2f0] sm:$0xff]
        %v2332 = vld [vmem:[#allocation8 + $0x2f8] sm:$0xff]
        %v2333 = vld [vmem:[#allocation8 + $0x300] sm:$0xff]
        %v2334 = vld [vmem:[#allocation8 + $0x308] sm:$0xff]
        %v2335 = vld [vmem:[#allocation8 + $0x310] sm:$0xff]
        %v2336 = vld [vmem:[#allocation8 + $0x318] sm:$0xff]
        %v2337 = vld [vmem:[#allocation8 + $0x320] sm:$0xff]
        %v2338 = vld [vmem:[#allocation8 + $0x328] sm:$0xff]
        %v2339 = vld [vmem:[#allocation8 + $0x330] sm:$0xff]
        %v2340 = vld [vmem:[#allocation8 + $0x338] sm:$0xff]
        %v2341 = vld [vmem:[#allocation8 + $0x340] sm:$0xff]
        %v2342 = vld [vmem:[#allocation8 + $0x348] sm:$0xff]
        %v2343 = vld [vmem:[#allocation8 + $0x350] sm:$0xff]
        %v2344 = vld [vmem:[#allocation8 + $0x358] sm:$0xff]
        %v2345 = vld [vmem:[#allocation8 + $0x360] sm:$0xff]
        %v2346 = vld [vmem:[#allocation8 + $0x368] sm:$0xff]
        %v2347 = vld [vmem:[#allocation8 + $0x370] sm:$0xff]
        %v2348 = vld [vmem:[#allocation8 + $0x378] sm:$0xff]
        %v2349 = vld [vmem:[#allocation8 + $0x380] sm:$0xff]
        %v2350 = vld [vmem:[#allocation8 + $0x388] sm:$0xff]
        %v2351 = vld [vmem:[#allocation8 + $0x390] sm:$0xff]
        %v2352 = vld [vmem:[#allocation8 + $0x398] sm:$0xff]
        %v2353 = vld [vmem:[#allocation8 + $0x3a0] sm:$0xff]
        %v2354 = vld [vmem:[#allocation8 + $0x3a8] sm:$0xff]
        %v2355 = vld [vmem:[#allocation8 + $0x3b0] sm:$0xff]
        %v2356 = vld [vmem:[#allocation8 + $0x3b8] sm:$0xff]
        %v2357 = vld [vmem:[#allocation8 + $0x3c0] sm:$0xff]
        %v2358 = vld [vmem:[#allocation8 + $0x3c8] sm:$0xff]
        %v2359 = vld [vmem:[#allocation8 + $0x3d0] sm:$0xff]
        %v2360 = vld [vmem:[#allocation8 + $0x3d8] sm:$0xff]
        %v2361 = vld [vmem:[#allocation8 + $0x3e0] sm:$0xff]
        %v2362 = vld [vmem:[#allocation8 + $0x3e8] sm:$0xff]
        %v2363 = vld [vmem:[#allocation8 + $0x3f0] sm:$0xff]
        %v2364 = vld [vmem:[#allocation8 + $0x3f8] sm:$0xff]
        %v2493 = vunpack.c.l.b16 %v2237
        %v2494 = vunpack.c.h.b16 %v2237
        %v2495 = vunpack.c.l.b16 %v2238
        %v2496 = vunpack.c.h.b16 %v2238
        %v2497 = vunpack.c.l.b16 %v2239
        %v2498 = vunpack.c.h.b16 %v2239
        %v2499 = vunpack.c.l.b16 %v2240
        %v2500 = vunpack.c.h.b16 %v2240
        %v2501 = vunpack.c.l.b16 %v2241
        %v2502 = vunpack.c.h.b16 %v2241
        %v2503 = vunpack.c.l.b16 %v2242
        %v2504 = vunpack.c.h.b16 %v2242
        %v2505 = vunpack.c.l.b16 %v2243
        %v2506 = vunpack.c.h.b16 %v2243
        %v2507 = vunpack.c.l.b16 %v2244
        %v2508 = vunpack.c.h.b16 %v2244
        %v2509 = vunpack.c.l.b16 %v2245
        %v2510 = vunpack.c.h.b16 %v2245
        %v2511 = vunpack.c.l.b16 %v2246
        %v2512 = vunpack.c.h.b16 %v2246
        %v2513 = vunpack.c.l.b16 %v2247
        %v2514 = vunpack.c.h.b16 %v2247
        %v2515 = vunpack.c.l.b16 %v2248
        %v2516 = vunpack.c.h.b16 %v2248
        %v2517 = vunpack.c.l.b16 %v2249
        %v2518 = vunpack.c.h.b16 %v2249
        %v2519 = vunpack.c.l.b16 %v2250
        %v2520 = vunpack.c.h.b16 %v2250
        %v2521 = vunpack.c.l.b16 %v2251
        %v2522 = vunpack.c.h.b16 %v2251
        %v2523 = vunpack.c.l.b16 %v2252
        %v2524 = vunpack.c.h.b16 %v2252
        %v2525 = vunpack.c.l.b16 %v2253
        %v2526 = vunpack.c.h.b16 %v2253
        %v2527 = vunpack.c.l.b16 %v2254
        %v2528 = vunpack.c.h.b16 %v2254
        %v2529 = vunpack.c.l.b16 %v2255
        %v2530 = vunpack.c.h.b16 %v2255
        %v2531 = vunpack.c.l.b16 %v2256
        %v2532 = vunpack.c.h.b16 %v2256
        %v2533 = vunpack.c.l.b16 %v2257
        %v2534 = vunpack.c.h.b16 %v2257
        %v2535 = vunpack.c.l.b16 %v2258
        %v2536 = vunpack.c.h.b16 %v2258
        %v2537 = vunpack.c.l.b16 %v2259
        %v2538 = vunpack.c.h.b16 %v2259
        %v2539 = vunpack.c.l.b16 %v2260
        %v2540 = vunpack.c.h.b16 %v2260
        %v2541 = vunpack.c.l.b16 %v2261
        %v2542 = vunpack.c.h.b16 %v2261
        %v2543 = vunpack.c.l.b16 %v2262
        %v2544 = vunpack.c.h.b16 %v2262
        %v2545 = vunpack.c.l.b16 %v2263
        %v2546 = vunpack.c.h.b16 %v2263
        %v2547 = vunpack.c.l.b16 %v2264
        %v2548 = vunpack.c.h.b16 %v2264
        %v2549 = vunpack.c.l.b16 %v2265
        %v2550 = vunpack.c.h.b16 %v2265
        %v2551 = vunpack.c.l.b16 %v2266
        %v2552 = vunpack.c.h.b16 %v2266
        %v2553 = vunpack.c.l.b16 %v2267
        %v2554 = vunpack.c.h.b16 %v2267
        %v2555 = vunpack.c.l.b16 %v2268
        %v2556 = vunpack.c.h.b16 %v2268
        %v2557 = vunpack.c.l.b16 %v2269
        %v2558 = vunpack.c.h.b16 %v2269
        %v2559 = vunpack.c.l.b16 %v2270
        %v2560 = vunpack.c.h.b16 %v2270
        %v2561 = vunpack.c.l.b16 %v2271
        %v2562 = vunpack.c.h.b16 %v2271
        %v2563 = vunpack.c.l.b16 %v2272
        %v2564 = vunpack.c.h.b16 %v2272
        %v2565 = vunpack.c.l.b16 %v2273
        %v2566 = vunpack.c.h.b16 %v2273
        %v2567 = vunpack.c.l.b16 %v2274
        %v2568 = vunpack.c.h.b16 %v2274
        %v2569 = vunpack.c.l.b16 %v2275
        %v2570 = vunpack.c.h.b16 %v2275
        %v2571 = vunpack.c.l.b16 %v2276
        %v2572 = vunpack.c.h.b16 %v2276
        %v2573 = vunpack.c.l.b16 %v2277
        %v2574 = vunpack.c.h.b16 %v2277
        %v2575 = vunpack.c.l.b16 %v2278
        %v2576 = vunpack.c.h.b16 %v2278
        %v2577 = vunpack.c.l.b16 %v2279
        %v2578 = vunpack.c.h.b16 %v2279
        %v2579 = vunpack.c.l.b16 %v2280
        %v2580 = vunpack.c.h.b16 %v2280
        %v2581 = vunpack.c.l.b16 %v2281
        %v2582 = vunpack.c.h.b16 %v2281
        %v2583 = vunpack.c.l.b16 %v2282
        %v2584 = vunpack.c.h.b16 %v2282
        %v2585 = vunpack.c.l.b16 %v2283
        %v2586 = vunpack.c.h.b16 %v2283
        %v2587 = vunpack.c.l.b16 %v2284
        %v2588 = vunpack.c.h.b16 %v2284
        %v2589 = vunpack.c.l.b16 %v2285
        %v2590 = vunpack.c.h.b16 %v2285
        %v2591 = vunpack.c.l.b16 %v2286
        %v2592 = vunpack.c.h.b16 %v2286
        %v2593 = vunpack.c.l.b16 %v2287
        %v2594 = vunpack.c.h.b16 %v2287
        %v2595 = vunpack.c.l.b16 %v2288
        %v2596 = vunpack.c.h.b16 %v2288
        %v2597 = vunpack.c.l.b16 %v2289
        %v2598 = vunpack.c.h.b16 %v2289
        %v2599 = vunpack.c.l.b16 %v2290
        %v2600 = vunpack.c.h.b16 %v2290
        %v2601 = vunpack.c.l.b16 %v2291
        %v2602 = vunpack.c.h.b16 %v2291
        %v2603 = vunpack.c.l.b16 %v2292
        %v2604 = vunpack.c.h.b16 %v2292
        %v2605 = vunpack.c.l.b16 %v2293
        %v2606 = vunpack.c.h.b16 %v2293
        %v2607 = vunpack.c.l.b16 %v2294
        %v2608 = vunpack.c.h.b16 %v2294
        %v2609 = vunpack.c.l.b16 %v2295
        %v2610 = vunpack.c.h.b16 %v2295
        %v2611 = vunpack.c.l.b16 %v2296
        %v2612 = vunpack.c.h.b16 %v2296
        %v2613 = vunpack.c.l.b16 %v2297
        %v2614 = vunpack.c.h.b16 %v2297
        %v2615 = vunpack.c.l.b16 %v2298
        %v2616 = vunpack.c.h.b16 %v2298
        %v2617 = vunpack.c.l.b16 %v2299
        %v2618 = vunpack.c.h.b16 %v2299
        %v2619 = vunpack.c.l.b16 %v2300
        %v2620 = vunpack.c.h.b16 %v2300
        %v2621 = vunpack.c.l.b16 %v2301
        %v2622 = vunpack.c.h.b16 %v2301
        %v2623 = vunpack.c.l.b16 %v2302
        %v2624 = vunpack.c.h.b16 %v2302
        %v2625 = vunpack.c.l.b16 %v2303
        %v2626 = vunpack.c.h.b16 %v2303
        %v2627 = vunpack.c.l.b16 %v2304
        %v2628 = vunpack.c.h.b16 %v2304
        %v2629 = vunpack.c.l.b16 %v2305
        %v2630 = vunpack.c.h.b16 %v2305
        %v2631 = vunpack.c.l.b16 %v2306
        %v2632 = vunpack.c.h.b16 %v2306
        %v2633 = vunpack.c.l.b16 %v2307
        %v2634 = vunpack.c.h.b16 %v2307
        %v2635 = vunpack.c.l.b16 %v2308
        %v2636 = vunpack.c.h.b16 %v2308
        %v2637 = vunpack.c.l.b16 %v2309
        %v2638 = vunpack.c.h.b16 %v2309
        %v2639 = vunpack.c.l.b16 %v2310
        %v2640 = vunpack.c.h.b16 %v2310
        %v2641 = vunpack.c.l.b16 %v2311
        %v2642 = vunpack.c.h.b16 %v2311
        %v2643 = vunpack.c.l.b16 %v2312
        %v2644 = vunpack.c.h.b16 %v2312
        %v2645 = vunpack.c.l.b16 %v2313
        %v2646 = vunpack.c.h.b16 %v2313
        %v2647 = vunpack.c.l.b16 %v2314
        %v2648 = vunpack.c.h.b16 %v2314
        %v2649 = vunpack.c.l.b16 %v2315
        %v2650 = vunpack.c.h.b16 %v2315
        %v2651 = vunpack.c.l.b16 %v2316
        %v2652 = vunpack.c.h.b16 %v2316
        %v2653 = vunpack.c.l.b16 %v2317
        %v2654 = vunpack.c.h.b16 %v2317
        %v2655 = vunpack.c.l.b16 %v2318
        %v2656 = vunpack.c.h.b16 %v2318
        %v2657 = vunpack.c.l.b16 %v2319
        %v2658 = vunpack.c.h.b16 %v2319
        %v2659 = vunpack.c.l.b16 %v2320
        %v2660 = vunpack.c.h.b16 %v2320
        %v2661 = vunpack.c.l.b16 %v2321
        %v2662 = vunpack.c.h.b16 %v2321
        %v2663 = vunpack.c.l.b16 %v2322
        %v2664 = vunpack.c.h.b16 %v2322
        %v2665 = vunpack.c.l.b16 %v2323
        %v2666 = vunpack.c.h.b16 %v2323
        %v2667 = vunpack.c.l.b16 %v2324
        %v2668 = vunpack.c.h.b16 %v2324
        %v2669 = vunpack.c.l.b16 %v2325
        %v2670 = vunpack.c.h.b16 %v2325
        %v2671 = vunpack.c.l.b16 %v2326
        %v2672 = vunpack.c.h.b16 %v2326
        %v2673 = vunpack.c.l.b16 %v2327
        %v2674 = vunpack.c.h.b16 %v2327
        %v2675 = vunpack.c.l.b16 %v2328
        %v2676 = vunpack.c.h.b16 %v2328
        %v2677 = vunpack.c.l.b16 %v2329
        %v2678 = vunpack.c.h.b16 %v2329
        %v2679 = vunpack.c.l.b16 %v2330
        %v2680 = vunpack.c.h.b16 %v2330
        %v2681 = vunpack.c.l.b16 %v2331
        %v2682 = vunpack.c.h.b16 %v2331
        %v2683 = vunpack.c.l.b16 %v2332
        %v2684 = vunpack.c.h.b16 %v2332
        %v2685 = vunpack.c.l.b16 %v2333
        %v2686 = vunpack.c.h.b16 %v2333
        %v2687 = vunpack.c.l.b16 %v2334
        %v2688 = vunpack.c.h.b16 %v2334
        %v2689 = vunpack.c.l.b16 %v2335
        %v2690 = vunpack.c.h.b16 %v2335
        %v2691 = vunpack.c.l.b16 %v2336
        %v2692 = vunpack.c.h.b16 %v2336
        %v2693 = vunpack.c.l.b16 %v2337
        %v2694 = vunpack.c.h.b16 %v2337
        %v2695 = vunpack.c.l.b16 %v2338
        %v2696 = vunpack.c.h.b16 %v2338
        %v2697 = vunpack.c.l.b16 %v2339
        %v2698 = vunpack.c.h.b16 %v2339
        %v2699 = vunpack.c.l.b16 %v2340
        %v2700 = vunpack.c.h.b16 %v2340
        %v2701 = vunpack.c.l.b16 %v2341
        %v2702 = vunpack.c.h.b16 %v2341
        %v2703 = vunpack.c.l.b16 %v2342
        %v2704 = vunpack.c.h.b16 %v2342
        %v2705 = vunpack.c.l.b16 %v2343
        %v2706 = vunpack.c.h.b16 %v2343
        %v2707 = vunpack.c.l.b16 %v2344
        %v2708 = vunpack.c.h.b16 %v2344
        %v2709 = vunpack.c.l.b16 %v2345
        %v2710 = vunpack.c.h.b16 %v2345
        %v2711 = vunpack.c.l.b16 %v2346
        %v2712 = vunpack.c.h.b16 %v2346
        %v2713 = vunpack.c.l.b16 %v2347
        %v2714 = vunpack.c.h.b16 %v2347
        %v2715 = vunpack.c.l.b16 %v2348
        %v2716 = vunpack.c.h.b16 %v2348
        %v2717 = vunpack.c.l.b16 %v2349
        %v2718 = vunpack.c.h.b16 %v2349
        %v2719 = vunpack.c.l.b16 %v2350
        %v2720 = vunpack.c.h.b16 %v2350
        %v2721 = vunpack.c.l.b16 %v2351
        %v2722 = vunpack.c.h.b16 %v2351
        %v2723 = vunpack.c.l.b16 %v2352
        %v2724 = vunpack.c.h.b16 %v2352
        %v2725 = vunpack.c.l.b16 %v2353
        %v2726 = vunpack.c.h.b16 %v2353
        %v2727 = vunpack.c.l.b16 %v2354
        %v2728 = vunpack.c.h.b16 %v2354
        %v2729 = vunpack.c.l.b16 %v2355
        %v2730 = vunpack.c.h.b16 %v2355
        %v2731 = vunpack.c.l.b16 %v2356
        %v2732 = vunpack.c.h.b16 %v2356
        %v2733 = vunpack.c.l.b16 %v2357
        %v2734 = vunpack.c.h.b16 %v2357
        %v2735 = vunpack.c.l.b16 %v2358
        %v2736 = vunpack.c.h.b16 %v2358
        %v2737 = vunpack.c.l.b16 %v2359
        %v2738 = vunpack.c.h.b16 %v2359
        %v2739 = vunpack.c.l.b16 %v2360
        %v2740 = vunpack.c.h.b16 %v2360
        %v2741 = vunpack.c.l.b16 %v2361
        %v2742 = vunpack.c.h.b16 %v2361
        %v2743 = vunpack.c.l.b16 %v2362
        %v2744 = vunpack.c.h.b16 %v2362
        %v2745 = vunpack.c.l.b16 %v2363
        %v2746 = vunpack.c.h.b16 %v2363
        %v2747 = vunpack.c.l.b16 %v2364
        %v2748 = vunpack.c.h.b16 %v2364
        %v2749 = vpack.c.b16 %v2501, %v2493
        %v2750 = vpack.c.b16 %v2502, %v2494
        %v2751 = vpack.c.b16 %v2503, %v2495
        %v2752 = vpack.c.b16 %v2504, %v2496
        %v2753 = vpack.c.b16 %v2505, %v2497
        %v2754 = vpack.c.b16 %v2506, %v2498
        %v2755 = vpack.c.b16 %v2507, %v2499
        %v2756 = vpack.c.b16 %v2508, %v2500
        %v2757 = vpack.c.b16 %v2517, %v2509
        %v2758 = vpack.c.b16 %v2518, %v2510
        %v2759 = vpack.c.b16 %v2519, %v2511
        %v2760 = vpack.c.b16 %v2520, %v2512
        %v2761 = vpack.c.b16 %v2521, %v2513
        %v2762 = vpack.c.b16 %v2522, %v2514
        %v2763 = vpack.c.b16 %v2523, %v2515
        %v2764 = vpack.c.b16 %v2524, %v2516
        %v2765 = vpack.c.b16 %v2533, %v2525
        %v2766 = vpack.c.b16 %v2534, %v2526
        %v2767 = vpack.c.b16 %v2535, %v2527
        %v2768 = vpack.c.b16 %v2536, %v2528
        %v2769 = vpack.c.b16 %v2537, %v2529
        %v2770 = vpack.c.b16 %v2538, %v2530
        %v2771 = vpack.c.b16 %v2539, %v2531
        %v2772 = vpack.c.b16 %v2540, %v2532
        %v2773 = vpack.c.b16 %v2549, %v2541
        %v2774 = vpack.c.b16 %v2550, %v2542
        %v2775 = vpack.c.b16 %v2551, %v2543
        %v2776 = vpack.c.b16 %v2552, %v2544
        %v2777 = vpack.c.b16 %v2553, %v2545
        %v2778 = vpack.c.b16 %v2554, %v2546
        %v2779 = vpack.c.b16 %v2555, %v2547
        %v2780 = vpack.c.b16 %v2556, %v2548
        %v2781 = vpack.c.b16 %v2565, %v2557
        %v2782 = vpack.c.b16 %v2566, %v2558
        %v2783 = vpack.c.b16 %v2567, %v2559
        %v2784 = vpack.c.b16 %v2568, %v2560
        %v2785 = vpack.c.b16 %v2569, %v2561
        %v2786 = vpack.c.b16 %v2570, %v2562
        %v2787 = vpack.c.b16 %v2571, %v2563
        %v2788 = vpack.c.b16 %v2572, %v2564
        %v2789 = vpack.c.b16 %v2581, %v2573
        %v2790 = vpack.c.b16 %v2582, %v2574
        %v2791 = vpack.c.b16 %v2583, %v2575
        %v2792 = vpack.c.b16 %v2584, %v2576
        %v2793 = vpack.c.b16 %v2585, %v2577
        %v2794 = vpack.c.b16 %v2586, %v2578
        %v2795 = vpack.c.b16 %v2587, %v2579
        %v2796 = vpack.c.b16 %v2588, %v2580
        %v2797 = vpack.c.b16 %v2597, %v2589
        %v2798 = vpack.c.b16 %v2598, %v2590
        %v2799 = vpack.c.b16 %v2599, %v2591
        %v2800 = vpack.c.b16 %v2600, %v2592
        %v2801 = vpack.c.b16 %v2601, %v2593
        %v2802 = vpack.c.b16 %v2602, %v2594
        %v2803 = vpack.c.b16 %v2603, %v2595
        %v2804 = vpack.c.b16 %v2604, %v2596
        %v2805 = vpack.c.b16 %v2613, %v2605
        %v2806 = vpack.c.b16 %v2614, %v2606
        %v2807 = vpack.c.b16 %v2615, %v2607
        %v2808 = vpack.c.b16 %v2616, %v2608
        %v2809 = vpack.c.b16 %v2617, %v2609
        %v2810 = vpack.c.b16 %v2618, %v2610
        %v2811 = vpack.c.b16 %v2619, %v2611
        %v2812 = vpack.c.b16 %v2620, %v2612
        %v2813 = vpack.c.b16 %v2629, %v2621
        %v2814 = vpack.c.b16 %v2630, %v2622
        %v2815 = vpack.c.b16 %v2631, %v2623
        %v2816 = vpack.c.b16 %v2632, %v2624
        %v2817 = vpack.c.b16 %v2633, %v2625
        %v2818 = vpack.c.b16 %v2634, %v2626
        %v2819 = vpack.c.b16 %v2635, %v2627
        %v2820 = vpack.c.b16 %v2636, %v2628
        %v2821 = vpack.c.b16 %v2645, %v2637
        %v2822 = vpack.c.b16 %v2646, %v2638
        %v2823 = vpack.c.b16 %v2647, %v2639
        %v2824 = vpack.c.b16 %v2648, %v2640
        %v2825 = vpack.c.b16 %v2649, %v2641
        %v2826 = vpack.c.b16 %v2650, %v2642
        %v2827 = vpack.c.b16 %v2651, %v2643
        %v2828 = vpack.c.b16 %v2652, %v2644
        %v2829 = vpack.c.b16 %v2661, %v2653
        %v2830 = vpack.c.b16 %v2662, %v2654
        %v2831 = vpack.c.b16 %v2663, %v2655
        %v2832 = vpack.c.b16 %v2664, %v2656
        %v2833 = vpack.c.b16 %v2665, %v2657
        %v2834 = vpack.c.b16 %v2666, %v2658
        %v2835 = vpack.c.b16 %v2667, %v2659
        %v2836 = vpack.c.b16 %v2668, %v2660
        %v2837 = vpack.c.b16 %v2677, %v2669
        %v2838 = vpack.c.b16 %v2678, %v2670
        %v2839 = vpack.c.b16 %v2679, %v2671
        %v2840 = vpack.c.b16 %v2680, %v2672
        %v2841 = vpack.c.b16 %v2681, %v2673
        %v2842 = vpack.c.b16 %v2682, %v2674
        %v2843 = vpack.c.b16 %v2683, %v2675
        %v2844 = vpack.c.b16 %v2684, %v2676
        %v2845 = vpack.c.b16 %v2693, %v2685
        %v2846 = vpack.c.b16 %v2694, %v2686
        %v2847 = vpack.c.b16 %v2695, %v2687
        %v2848 = vpack.c.b16 %v2696, %v2688
        %v2849 = vpack.c.b16 %v2697, %v2689
        %v2850 = vpack.c.b16 %v2698, %v2690
        %v2851 = vpack.c.b16 %v2699, %v2691
        %v2852 = vpack.c.b16 %v2700, %v2692
        %v2853 = vpack.c.b16 %v2709, %v2701
        %v2854 = vpack.c.b16 %v2710, %v2702
        %v2855 = vpack.c.b16 %v2711, %v2703
        %v2856 = vpack.c.b16 %v2712, %v2704
        %v2857 = vpack.c.b16 %v2713, %v2705
        %v2858 = vpack.c.b16 %v2714, %v2706
        %v2859 = vpack.c.b16 %v2715, %v2707
        %v2860 = vpack.c.b16 %v2716, %v2708
        %v2861 = vpack.c.b16 %v2725, %v2717
        %v2862 = vpack.c.b16 %v2726, %v2718
        %v2863 = vpack.c.b16 %v2727, %v2719
        %v2864 = vpack.c.b16 %v2728, %v2720
        %v2865 = vpack.c.b16 %v2729, %v2721
        %v2866 = vpack.c.b16 %v2730, %v2722
        %v2867 = vpack.c.b16 %v2731, %v2723
        %v2868 = vpack.c.b16 %v2732, %v2724
        %v2869 = vpack.c.b16 %v2741, %v2733
        %v2870 = vpack.c.b16 %v2742, %v2734
        %v2871 = vpack.c.b16 %v2743, %v2735
        %v2872 = vpack.c.b16 %v2744, %v2736
        %v2873 = vpack.c.b16 %v2745, %v2737
        %v2874 = vpack.c.b16 %v2746, %v2738
        %v2875 = vpack.c.b16 %v2747, %v2739
        %v2876 = vpack.c.b16 %v2748, %v2740
        %3005 = vmatprep.subr.bf16.mxu0 %v2750
        %3006 = vmatpush1.bf16.msra.mxu0 %v2749
        %3007 = vmatprep.subr.bf16.mxu0 %v2758
        %3008 = vmatpush1.bf16.msra.mxu0 %v2757
        %3009 = vmatprep.subr.bf16.mxu0 %v2766
        %3010 = vmatpush1.bf16.msra.mxu0 %v2765
        %3011 = vmatprep.subr.bf16.mxu0 %v2774
        %3012 = vmatpush1.bf16.msra.mxu0 %v2773
        %3013 = vmatprep.subr.bf16.mxu0 %v2782
        %3014 = vmatpush1.bf16.msra.mxu0 %v2781
        %3015 = vmatprep.subr.bf16.mxu0 %v2790
        %3016 = vmatpush1.bf16.msra.mxu0 %v2789
        %3017 = vmatprep.subr.bf16.mxu0 %v2798
        %3018 = vmatpush1.bf16.msra.mxu0 %v2797
        %3019 = vmatprep.subr.bf16.mxu0 %v2806
        %3020 = vmatpush1.bf16.msra.mxu0 %v2805
        %3021 = vmatprep.subr.bf16.mxu0 %v2814
        %3022 = vmatpush1.bf16.msra.mxu0 %v2813
        %3023 = vmatprep.subr.bf16.mxu0 %v2822
        %3024 = vmatpush1.bf16.msra.mxu0 %v2821
        %3025 = vmatprep.subr.bf16.mxu0 %v2830
        %3026 = vmatpush1.bf16.msra.mxu0 %v2829
        %3027 = vmatprep.subr.bf16.mxu0 %v2838
        %3028 = vmatpush1.bf16.msra.mxu0 %v2837
        %3029 = vmatprep.subr.bf16.mxu0 %v2846
        %3030 = vmatpush1.bf16.msra.mxu0 %v2845
        %3031 = vmatprep.subr.bf16.mxu0 %v2854
        %3032 = vmatpush1.bf16.msra.mxu0 %v2853
        %3033 = vmatprep.subr.bf16.mxu0 %v2862
        %3034 = vmatpush1.bf16.msra.mxu0 %v2861
        %3035 = vmatprep.subr.bf16.mxu0 %v2870
        %3036 = vmatpush1.bf16.msra.mxu0 %v2869
        %3037 = vmatprep.mubr.bf16.mxu0 %v2206
        %3038 = vmatmul.mubr.bf16.gmra.mrb[0].mxu0 %v2205
        %v3039 = vpop.f32.mrb[0].mxu0
        %v3040 = vadd.f32 0.0, %v3039
        %v3041 = vpop.f32.mrb[0].mxu0
        %v3042 = vadd.f32 0.0, %v3041
        %v3043 = vpop.f32.mrb[0].mxu0
        %v3044 = vadd.f32 0.0, %v3043
        %v3045 = vpop.f32.mrb[0].mxu0
        %v3046 = vadd.f32 0.0, %v3045
        %3047 = vmatprep.mubr.bf16.mxu0 %v2208
        %3048 = vmatmul.mubr.bf16.gmra.mrb[0].mxu0 %v2207
        %v3049 = vpop.f32.mrb[0].mxu0
        %v3050 = vadd.f32 0.0, %v3049
        %v3051 = vpop.f32.mrb[0].mxu0
        %v3052 = vadd.f32 0.0, %v3051
        %v3053 = vpop.f32.mrb[0].mxu0
        %v3054 = vadd.f32 0.0, %v3053
        %v3055 = vpop.f32.mrb[0].mxu0
        %v3056 = vadd.f32 0.0, %v3055
        %3057 = vmatprep.mubr.bf16.mxu0 %v2210
        %3058 = vmatmul.mubr.bf16.gmra.mrb[0].mxu0 %v2209
        %v3059 = vpop.f32.mrb[0].mxu0
        %v3060 = vadd.f32 0.0, %v3059
        %v3061 = vpop.f32.mrb[0].mxu0
        %v3062 = vadd.f32 0.0, %v3061
        %v3063 = vpop.f32.mrb[0].mxu0
        %v3064 = vadd.f32 0.0, %v3063
        %v3065 = vpop.f32.mrb[0].mxu0
        %v3066 = vadd.f32 0.0, %v3065
        %3067 = vmatprep.mubr.bf16.mxu0 %v2212
        %3068 = vmatmul.mubr.bf16.gmra.mrb[0].mxu0 %v2211
        %v3069 = vpop.f32.mrb[0].mxu0
        %v3070 = vadd.f32 0.0, %v3069
        %v3071 = vpop.f32.mrb[0].mxu0
        %v3072 = vadd.f32 0.0, %v3071
        %v3073 = vpop.f32.mrb[0].mxu0
        %v3074 = vadd.f32 0.0, %v3073
        %v3075 = vpop.f32.mrb[0].mxu0
        %v3076 = vadd.f32 0.0, %v3075
        %3077 = vmatprep.mubr.bf16.mxu0 %v2214
        %3078 = vmatmul.mubr.bf16.gmra.mrb[0].mxu0 %v2213
        %v3079 = vpop.f32.mrb[0].mxu0
        %v3080 = vadd.f32 0.0, %v3079
        %v3081 = vpop.f32.mrb[0].mxu0
        %v3082 = vadd.f32 0.0, %v3081
        %v3083 = vpop.f32.mrb[0].mxu0
        %v3084 = vadd.f32 0.0, %v3083
        %v3085 = vpop.f32.mrb[0].mxu0
        %v3086 = vadd.f32 0.0, %v3085
        %3087 = vmatprep.mubr.bf16.mxu0 %v2216
        %3088 = vmatmul.mubr.bf16.gmra.mrb[0].mxu0 %v2215
        %v3089 = vpop.f32.mrb[0].mxu0
        %v3090 = vadd.f32 0.0, %v3089
        %v3091 = vpop.f32.mrb[0].mxu0
        %v3092 = vadd.f32 0.0, %v3091
        %v3093 = vpop.f32.mrb[0].mxu0
        %v3094 = vadd.f32 0.0, %v3093
        %v3095 = vpop.f32.mrb[0].mxu0
        %v3096 = vadd.f32 0.0, %v3095
        %3097 = vmatprep.mubr.bf16.mxu0 %v2218
        %3098 = vmatmul.mubr.bf16.gmra.mrb[0].mxu0 %v2217
        %v3099 = vpop.f32.mrb[0].mxu0
        %v3100 = vadd.f32 0.0, %v3099
        %v3101 = vpop.f32.mrb[0].mxu0
        %v3102 = vadd.f32 0.0, %v3101
        %v3103 = vpop.f32.mrb[0].mxu0
        %v3104 = vadd.f32 0.0, %v3103
        %v3105 = vpop.f32.mrb[0].mxu0
        %v3106 = vadd.f32 0.0, %v3105
        %3107 = vmatprep.mubr.bf16.mxu0 %v2220
        %3108 = vmatmul.mubr.bf16.gmra.mrb[0].mxu0 %v2219
        %v3109 = vpop.f32.mrb[0].mxu0
        %v3110 = vadd.f32 0.0, %v3109
        %v3111 = vpop.f32.mrb[0].mxu0
        %v3112 = vadd.f32 0.0, %v3111
        %v3113 = vpop.f32.mrb[0].mxu0
        %v3114 = vadd.f32 0.0, %v3113
        %v3115 = vpop.f32.mrb[0].mxu0
        %v3116 = vadd.f32 0.0, %v3115
        %3117 = vmatprep.mubr.bf16.mxu0 %v2222
        %3118 = vmatmul.mubr.bf16.gmra.mrb[0].mxu0 %v2221
        %v3119 = vpop.f32.mrb[0].mxu0
        %v3120 = vadd.f32 0.0, %v3119
        %v3121 = vpop.f32.mrb[0].mxu0
        %v3122 = vadd.f32 0.0, %v3121
        %v3123 = vpop.f32.mrb[0].mxu0
        %v3124 = vadd.f32 0.0, %v3123
        %v3125 = vpop.f32.mrb[0].mxu0
        %v3126 = vadd.f32 0.0, %v3125
        %3127 = vmatprep.mubr.bf16.mxu0 %v2224
        %3128 = vmatmul.mubr.bf16.gmra.mrb[0].mxu0 %v2223
        %v3129 = vpop.f32.mrb[0].mxu0
        %v3130 = vadd.f32 0.0, %v3129
        %v3131 = vpop.f32.mrb[0].mxu0
        %v3132 = vadd.f32 0.0, %v3131
        %v3133 = vpop.f32.mrb[0].mxu0
        %v3134 = vadd.f32 0.0, %v3133
        %v3135 = vpop.f32.mrb[0].mxu0
        %v3136 = vadd.f32 0.0, %v3135
        %3137 = vmatprep.mubr.bf16.mxu0 %v2226
        %3138 = vmatmul.mubr.bf16.gmra.mrb[0].mxu0 %v2225
        %v3139 = vpop.f32.mrb[0].mxu0
        %v3140 = vadd.f32 0.0, %v3139
        %v3141 = vpop.f32.mrb[0].mxu0
        %v3142 = vadd.f32 0.0, %v3141
        %v3143 = vpop.f32.mrb[0].mxu0
        %v3144 = vadd.f32 0.0, %v3143
        %v3145 = vpop.f32.mrb[0].mxu0
        %v3146 = vadd.f32 0.0, %v3145
        %3147 = vmatprep.mubr.bf16.mxu0 %v2228
        %3148 = vmatmul.mubr.bf16.gmra.mrb[0].mxu0 %v2227
        %v3149 = vpop.f32.mrb[0].mxu0
        %v3150 = vadd.f32 0.0, %v3149
        %v3151 = vpop.f32.mrb[0].mxu0
        %v3152 = vadd.f32 0.0, %v3151
        %v3153 = vpop.f32.mrb[0].mxu0
        %v3154 = vadd.f32 0.0, %v3153
        %v3155 = vpop.f32.mrb[0].mxu0
        %v3156 = vadd.f32 0.0, %v3155
        %3157 = vmatprep.mubr.bf16.mxu0 %v2230
        %3158 = vmatmul.mubr.bf16.gmra.mrb[0].mxu0 %v2229
        %v3159 = vpop.f32.mrb[0].mxu0
        %v3160 = vadd.f32 0.0, %v3159
        %v3161 = vpop.f32.mrb[0].mxu0
        %v3162 = vadd.f32 0.0, %v3161
        %v3163 = vpop.f32.mrb[0].mxu0
        %v3164 = vadd.f32 0.0, %v3163
        %v3165 = vpop.f32.mrb[0].mxu0
        %v3166 = vadd.f32 0.0, %v3165
        %3167 = vmatprep.mubr.bf16.mxu0 %v2232
        %3168 = vmatmul.mubr.bf16.gmra.mrb[0].mxu0 %v2231
        %v3169 = vpop.f32.mrb[0].mxu0
        %v3170 = vadd.f32 0.0, %v3169
        %v3171 = vpop.f32.mrb[0].mxu0
        %v3172 = vadd.f32 0.0, %v3171
        %v3173 = vpop.f32.mrb[0].mxu0
        %v3174 = vadd.f32 0.0, %v3173
        %v3175 = vpop.f32.mrb[0].mxu0
        %v3176 = vadd.f32 0.0, %v3175
        %3177 = vmatprep.mubr.bf16.mxu0 %v2234
        %3178 = vmatmul.mubr.bf16.gmra.mrb[0].mxu0 %v2233
        %v3179 = vpop.f32.mrb[0].mxu0
        %v3180 = vadd.f32 0.0, %v3179
        %v3181 = vpop.f32.mrb[0].mxu0
        %v3182 = vadd.f32 0.0, %v3181
        %v3183 = vpop.f32.mrb[0].mxu0
        %v3184 = vadd.f32 0.0, %v3183
        %v3185 = vpop.f32.mrb[0].mxu0
        %v3186 = vadd.f32 0.0, %v3185
        %3187 = vmatprep.mubr.bf16.mxu0 %v2236
        %3188 = vmatmul.mubr.bf16.gmra.mrb[0].mxu0 %v2235
        %v3189 = vpop.f32.mrb[0].mxu0
        %v3190 = vadd.f32 0.0, %v3189
        %v3191 = vpop.f32.mrb[0].mxu0
        %v3192 = vadd.f32 0.0, %v3191
        %v3193 = vpop.f32.mrb[0].mxu0
        %v3194 = vadd.f32 0.0, %v3193
        %v3195 = vpop.f32.mrb[0].mxu0
        %v3196 = vadd.f32 0.0, %v3195
        %3197 = vdwg.mxu0
        %3198 = vmatprep.subr.bf16.mxu0 %v2752
        %3199 = vmatpush1.bf16.msra.mxu0 %v2751
        %3200 = vmatprep.subr.bf16.mxu0 %v2760
        %3201 = vmatpush1.bf16.msra.mxu0 %v2759
        %3202 = vmatprep.subr.bf16.mxu0 %v2768
        %3203 = vmatpush1.bf16.msra.mxu0 %v2767
        %3204 = vmatprep.subr.bf16.mxu0 %v2776
        %3205 = vmatpush1.bf16.msra.mxu0 %v2775
        %3206 = vmatprep.subr.bf16.mxu0 %v2784
        %3207 = vmatpush1.bf16.msra.mxu0 %v2783
        %3208 = vmatprep.subr.bf16.mxu0 %v2792
        %3209 = vmatpush1.bf16.msra.mxu0 %v2791
        %3210 = vmatprep.subr.bf16.mxu0 %v2800
        %3211 = vmatpush1.bf16.msra.mxu0 %v2799
        %3212 = vmatprep.subr.bf16.mxu0 %v2808
        %3213 = vmatpush1.bf16.msra.mxu0 %v2807
        %3214 = vmatprep.subr.bf16.mxu0 %v2816
        %3215 = vmatpush1.bf16.msra.mxu0 %v2815
        %3216 = vmatprep.subr.bf16.mxu0 %v2824
        %3217 = vmatpush1.bf16.msra.mxu0 %v2823
        %3218 = vmatprep.subr.bf16.mxu0 %v2832
        %3219 = vmatpush1.bf16.msra.mxu0 %v2831
        %3220 = vmatprep.subr.bf16.mxu0 %v2840
        %3221 = vmatpush1.bf16.msra.mxu0 %v2839
        %3222 = vmatprep.subr.bf16.mxu0 %v2848
        %3223 = vmatpush1.bf16.msra.mxu0 %v2847
        %3224 = vmatprep.subr.bf16.mxu0 %v2856
        %3225 = vmatpush1.bf16.msra.mxu0 %v2855
        %3226 = vmatprep.subr.bf16.mxu0 %v2864
        %3227 = vmatpush1.bf16.msra.mxu0 %v2863
        %3228 = vmatprep.subr.bf16.mxu0 %v2872
        %3229 = vmatpush1.bf16.msra.mxu0 %v2871
        %3230 = vmatprep.mubr.bf16.mxu0 %v2206
        %3231 = vmatmul.mubr.bf16.gmra.mrb[0].mxu0 %v2205
        %v3232 = vpop.f32.mrb[0].mxu0
        %v3233 = vadd.f32 0.0, %v3232
        %v3234 = vpop.f32.mrb[0].mxu0
        %v3235 = vadd.f32 0.0, %v3234
        %v3236 = vpop.f32.mrb[0].mxu0
        %v3237 = vadd.f32 0.0, %v3236
        %v3238 = vpop.f32.mrb[0].mxu0
        %v3239 = vadd.f32 0.0, %v3238
        %3240 = vmatprep.mubr.bf16.mxu0 %v2208
        %3241 = vmatmul.mubr.bf16.gmra.mrb[0].mxu0 %v2207
        %v3242 = vpop.f32.mrb[0].mxu0
        %v3243 = vadd.f32 0.0, %v3242
        %v3244 = vpop.f32.mrb[0].mxu0
        %v3245 = vadd.f32 0.0, %v3244
        %v3246 = vpop.f32.mrb[0].mxu0
        %v3247 = vadd.f32 0.0, %v3246
        %v3248 = vpop.f32.mrb[0].mxu0
        %v3249 = vadd.f32 0.0, %v3248
        %3250 = vmatprep.mubr.bf16.mxu0 %v2210
        %3251 = vmatmul.mubr.bf16.gmra.mrb[0].mxu0 %v2209
        %v3252 = vpop.f32.mrb[0].mxu0
        %v3253 = vadd.f32 0.0, %v3252
        %v3254 = vpop.f32.mrb[0].mxu0
        %v3255 = vadd.f32 0.0, %v3254
        %v3256 = vpop.f32.mrb[0].mxu0
        %v3257 = vadd.f32 0.0, %v3256
        %v3258 = vpop.f32.mrb[0].mxu0
        %v3259 = vadd.f32 0.0, %v3258
        %3260 = vmatprep.mubr.bf16.mxu0 %v2212
        %3261 = vmatmul.mubr.bf16.gmra.mrb[0].mxu0 %v2211
        %v3262 = vpop.f32.mrb[0].mxu0
        %v3263 = vadd.f32 0.0, %v3262
        %v3264 = vpop.f32.mrb[0].mxu0
        %v3265 = vadd.f32 0.0, %v3264
        %v3266 = vpop.f32.mrb[0].mxu0
        %v3267 = vadd.f32 0.0, %v3266
        %v3268 = vpop.f32.mrb[0].mxu0
        %v3269 = vadd.f32 0.0, %v3268
        %3270 = vmatprep.mubr.bf16.mxu0 %v2214
        %3271 = vmatmul.mubr.bf16.gmra.mrb[0].mxu0 %v2213
        %v3272 = vpop.f32.mrb[0].mxu0
        %v3273 = vadd.f32 0.0, %v3272
        %v3274 = vpop.f32.mrb[0].mxu0
        %v3275 = vadd.f32 0.0, %v3274
        %v3276 = vpop.f32.mrb[0].mxu0
        %v3277 = vadd.f32 0.0, %v3276
        %v3278 = vpop.f32.mrb[0].mxu0
        %v3279 = vadd.f32 0.0, %v3278
        %3280 = vmatprep.mubr.bf16.mxu0 %v2216
        %3281 = vmatmul.mubr.bf16.gmra.mrb[0].mxu0 %v2215
        %v3282 = vpop.f32.mrb[0].mxu0
        %v3283 = vadd.f32 0.0, %v3282
        %v3284 = vpop.f32.mrb[0].mxu0
        %v3285 = vadd.f32 0.0, %v3284
        %v3286 = vpop.f32.mrb[0].mxu0
        %v3287 = vadd.f32 0.0, %v3286
        %v3288 = vpop.f32.mrb[0].mxu0
        %v3289 = vadd.f32 0.0, %v3288
        %3290 = vmatprep.mubr.bf16.mxu0 %v2218
        %3291 = vmatmul.mubr.bf16.gmra.mrb[0].mxu0 %v2217
        %v3292 = vpop.f32.mrb[0].mxu0
        %v3293 = vadd.f32 0.0, %v3292
        %v3294 = vpop.f32.mrb[0].mxu0
        %v3295 = vadd.f32 0.0, %v3294
        %v3296 = vpop.f32.mrb[0].mxu0
        %v3297 = vadd.f32 0.0, %v3296
        %v3298 = vpop.f32.mrb[0].mxu0
        %v3299 = vadd.f32 0.0, %v3298
        %3300 = vmatprep.mubr.bf16.mxu0 %v2220
        %3301 = vmatmul.mubr.bf16.gmra.mrb[0].mxu0 %v2219
        %v3302 = vpop.f32.mrb[0].mxu0
        %v3303 = vadd.f32 0.0, %v3302
        %v3304 = vpop.f32.mrb[0].mxu0
        %v3305 = vadd.f32 0.0, %v3304
        %v3306 = vpop.f32.mrb[0].mxu0
        %v3307 = vadd.f32 0.0, %v3306
        %v3308 = vpop.f32.mrb[0].mxu0
        %v3309 = vadd.f32 0.0, %v3308
        %3310 = vmatprep.mubr.bf16.mxu0 %v2222
        %3311 = vmatmul.mubr.bf16.gmra.mrb[0].mxu0 %v2221
        %v3312 = vpop.f32.mrb[0].mxu0
        %v3313 = vadd.f32 0.0, %v3312
        %v3314 = vpop.f32.mrb[0].mxu0
        %v3315 = vadd.f32 0.0, %v3314
        %v3316 = vpop.f32.mrb[0].mxu0
        %v3317 = vadd.f32 0.0, %v3316
        %v3318 = vpop.f32.mrb[0].mxu0
        %v3319 = vadd.f32 0.0, %v3318
        %3320 = vmatprep.mubr.bf16.mxu0 %v2224
        %3321 = vmatmul.mubr.bf16.gmra.mrb[0].mxu0 %v2223
        %v3322 = vpop.f32.mrb[0].mxu0
        %v3323 = vadd.f32 0.0, %v3322
        %v3324 = vpop.f32.mrb[0].mxu0
        %v3325 = vadd.f32 0.0, %v3324
        %v3326 = vpop.f32.mrb[0].mxu0
        %v3327 = vadd.f32 0.0, %v3326
        %v3328 = vpop.f32.mrb[0].mxu0
        %v3329 = vadd.f32 0.0, %v3328
        %3330 = vmatprep.mubr.bf16.mxu0 %v2226
        %3331 = vmatmul.mubr.bf16.gmra.mrb[0].mxu0 %v2225
        %v3332 = vpop.f32.mrb[0].mxu0
        %v3333 = vadd.f32 0.0, %v3332
        %v3334 = vpop.f32.mrb[0].mxu0
        %v3335 = vadd.f32 0.0, %v3334
        %v3336 = vpop.f32.mrb[0].mxu0
        %v3337 = vadd.f32 0.0, %v3336
        %v3338 = vpop.f32.mrb[0].mxu0
        %v3339 = vadd.f32 0.0, %v3338
        %3340 = vmatprep.mubr.bf16.mxu0 %v2228
        %3341 = vmatmul.mubr.bf16.gmra.mrb[0].mxu0 %v2227
        %v3342 = vpop.f32.mrb[0].mxu0
        %v3343 = vadd.f32 0.0, %v3342
        %v3344 = vpop.f32.mrb[0].mxu0
        %v3345 = vadd.f32 0.0, %v3344
        %v3346 = vpop.f32.mrb[0].mxu0
        %v3347 = vadd.f32 0.0, %v3346
        %v3348 = vpop.f32.mrb[0].mxu0
        %v3349 = vadd.f32 0.0, %v3348
        %3350 = vmatprep.mubr.bf16.mxu0 %v2230
        %3351 = vmatmul.mubr.bf16.gmra.mrb[0].mxu0 %v2229
        %v3352 = vpop.f32.mrb[0].mxu0
        %v3353 = vadd.f32 0.0, %v3352
        %v3354 = vpop.f32.mrb[0].mxu0
        %v3355 = vadd.f32 0.0, %v3354
        %v3356 = vpop.f32.mrb[0].mxu0
        %v3357 = vadd.f32 0.0, %v3356
        %v3358 = vpop.f32.mrb[0].mxu0
        %v3359 = vadd.f32 0.0, %v3358
        %3360 = vmatprep.mubr.bf16.mxu0 %v2232
        %3361 = vmatmul.mubr.bf16.gmra.mrb[0].mxu0 %v2231
        %v3362 = vpop.f32.mrb[0].mxu0
        %v3363 = vadd.f32 0.0, %v3362
        %v3364 = vpop.f32.mrb[0].mxu0
        %v3365 = vadd.f32 0.0, %v3364
        %v3366 = vpop.f32.mrb[0].mxu0
        %v3367 = vadd.f32 0.0, %v3366
        %v3368 = vpop.f32.mrb[0].mxu0
        %v3369 = vadd.f32 0.0, %v3368
        %3370 = vmatprep.mubr.bf16.mxu0 %v2234
        %3371 = vmatmul.mubr.bf16.gmra.mrb[0].mxu0 %v2233
        %v3372 = vpop.f32.mrb[0].mxu0
        %v3373 = vadd.f32 0.0, %v3372
        %v3374 = vpop.f32.mrb[0].mxu0
        %v3375 = vadd.f32 0.0, %v3374
        %v3376 = vpop.f32.mrb[0].mxu0
        %v3377 = vadd.f32 0.0, %v3376
        %v3378 = vpop.f32.mrb[0].mxu0
        %v3379 = vadd.f32 0.0, %v3378
        %3380 = vmatprep.mubr.bf16.mxu0 %v2236
        %3381 = vmatmul.mubr.bf16.gmra.mrb[0].mxu0 %v2235
        %v3382 = vpop.f32.mrb[0].mxu0
        %v3383 = vadd.f32 0.0, %v3382
        %v3384 = vpop.f32.mrb[0].mxu0
        %v3385 = vadd.f32 0.0, %v3384
        %v3386 = vpop.f32.mrb[0].mxu0
        %v3387 = vadd.f32 0.0, %v3386
        %v3388 = vpop.f32.mrb[0].mxu0
        %v3389 = vadd.f32 0.0, %v3388
        %3390 = vdwg.mxu0
        %3391 = vmatprep.subr.bf16.mxu0 %v2754
        %3392 = vmatpush1.bf16.msra.mxu0 %v2753
        %3393 = vmatprep.subr.bf16.mxu0 %v2762
        %3394 = vmatpush1.bf16.msra.mxu0 %v2761
        %3395 = vmatprep.subr.bf16.mxu0 %v2770
        %3396 = vmatpush1.bf16.msra.mxu0 %v2769
        %3397 = vmatprep.subr.bf16.mxu0 %v2778
        %3398 = vmatpush1.bf16.msra.mxu0 %v2777
        %3399 = vmatprep.subr.bf16.mxu0 %v2786
        %3400 = vmatpush1.bf16.msra.mxu0 %v2785
        %3401 = vmatprep.subr.bf16.mxu0 %v2794
        %3402 = vmatpush1.bf16.msra.mxu0 %v2793
        %3403 = vmatprep.subr.bf16.mxu0 %v2802
        %3404 = vmatpush1.bf16.msra.mxu0 %v2801
        %3405 = vmatprep.subr.bf16.mxu0 %v2810
        %3406 = vmatpush1.bf16.msra.mxu0 %v2809
        %3407 = vmatprep.subr.bf16.mxu0 %v2818
        %3408 = vmatpush1.bf16.msra.mxu0 %v2817
        %3409 = vmatprep.subr.bf16.mxu0 %v2826
        %3410 = vmatpush1.bf16.msra.mxu0 %v2825
        %3411 = vmatprep.subr.bf16.mxu0 %v2834
        %3412 = vmatpush1.bf16.msra.mxu0 %v2833
        %3413 = vmatprep.subr.bf16.mxu0 %v2842
        %3414 = vmatpush1.bf16.msra.mxu0 %v2841
        %3415 = vmatprep.subr.bf16.mxu0 %v2850
        %3416 = vmatpush1.bf16.msra.mxu0 %v2849
        %3417 = vmatprep.subr.bf16.mxu0 %v2858
        %3418 = vmatpush1.bf16.msra.mxu0 %v2857
        %3419 = vmatprep.subr.bf16.mxu0 %v2866
        %3420 = vmatpush1.bf16.msra.mxu0 %v2865
        %3421 = vmatprep.subr.bf16.mxu0 %v2874
        %3422 = vmatpush1.bf16.msra.mxu0 %v2873
        %3423 = vmatprep.mubr.bf16.mxu0 %v2206
        %3424 = vmatmul.mubr.bf16.gmra.mrb[0].mxu0 %v2205
        %v3425 = vpop.f32.mrb[0].mxu0
        %v3426 = vadd.f32 0.0, %v3425
        %v3427 = vpop.f32.mrb[0].mxu0
        %v3428 = vadd.f32 0.0, %v3427
        %v3429 = vpop.f32.mrb[0].mxu0
        %v3430 = vadd.f32 0.0, %v3429
        %v3431 = vpop.f32.mrb[0].mxu0
        %v3432 = vadd.f32 0.0, %v3431
        %3433 = vmatprep.mubr.bf16.mxu0 %v2208
        %3434 = vmatmul.mubr.bf16.gmra.mrb[0].mxu0 %v2207
        %v3435 = vpop.f32.mrb[0].mxu0
        %v3436 = vadd.f32 0.0, %v3435
        %v3437 = vpop.f32.mrb[0].mxu0
        %v3438 = vadd.f32 0.0, %v3437
        %v3439 = vpop.f32.mrb[0].mxu0
        %v3440 = vadd.f32 0.0, %v3439
        %v3441 = vpop.f32.mrb[0].mxu0
        %v3442 = vadd.f32 0.0, %v3441
        %3443 = vmatprep.mubr.bf16.mxu0 %v2210
        %3444 = vmatmul.mubr.bf16.gmra.mrb[0].mxu0 %v2209
        %v3445 = vpop.f32.mrb[0].mxu0
        %v3446 = vadd.f32 0.0, %v3445
        %v3447 = vpop.f32.mrb[0].mxu0
        %v3448 = vadd.f32 0.0, %v3447
        %v3449 = vpop.f32.mrb[0].mxu0
        %v3450 = vadd.f32 0.0, %v3449
        %v3451 = vpop.f32.mrb[0].mxu0
        %v3452 = vadd.f32 0.0, %v3451
        %3453 = vmatprep.mubr.bf16.mxu0 %v2212
        %3454 = vmatmul.mubr.bf16.gmra.mrb[0].mxu0 %v2211
        %v3455 = vpop.f32.mrb[0].mxu0
        %v3456 = vadd.f32 0.0, %v3455
        %v3457 = vpop.f32.mrb[0].mxu0
        %v3458 = vadd.f32 0.0, %v3457
        %v3459 = vpop.f32.mrb[0].mxu0
        %v3460 = vadd.f32 0.0, %v3459
        %v3461 = vpop.f32.mrb[0].mxu0
        %v3462 = vadd.f32 0.0, %v3461
        %3463 = vmatprep.mubr.bf16.mxu0 %v2214
        %3464 = vmatmul.mubr.bf16.gmra.mrb[0].mxu0 %v2213
        %v3465 = vpop.f32.mrb[0].mxu0
        %v3466 = vadd.f32 0.0, %v3465
        %v3467 = vpop.f32.mrb[0].mxu0
        %v3468 = vadd.f32 0.0, %v3467
        %v3469 = vpop.f32.mrb[0].mxu0
        %v3470 = vadd.f32 0.0, %v3469
        %v3471 = vpop.f32.mrb[0].mxu0
        %v3472 = vadd.f32 0.0, %v3471
        %3473 = vmatprep.mubr.bf16.mxu0 %v2216
        %3474 = vmatmul.mubr.bf16.gmra.mrb[0].mxu0 %v2215
        %v3475 = vpop.f32.mrb[0].mxu0
        %v3476 = vadd.f32 0.0, %v3475
        %v3477 = vpop.f32.mrb[0].mxu0
        %v3478 = vadd.f32 0.0, %v3477
        %v3479 = vpop.f32.mrb[0].mxu0
        %v3480 = vadd.f32 0.0, %v3479
        %v3481 = vpop.f32.mrb[0].mxu0
        %v3482 = vadd.f32 0.0, %v3481
        %3483 = vmatprep.mubr.bf16.mxu0 %v2218
        %3484 = vmatmul.mubr.bf16.gmra.mrb[0].mxu0 %v2217
        %v3485 = vpop.f32.mrb[0].mxu0
        %v3486 = vadd.f32 0.0, %v3485
        %v3487 = vpop.f32.mrb[0].mxu0
        %v3488 = vadd.f32 0.0, %v3487
        %v3489 = vpop.f32.mrb[0].mxu0
        %v3490 = vadd.f32 0.0, %v3489
        %v3491 = vpop.f32.mrb[0].mxu0
        %v3492 = vadd.f32 0.0, %v3491
        %3493 = vmatprep.mubr.bf16.mxu0 %v2220
        %3494 = vmatmul.mubr.bf16.gmra.mrb[0].mxu0 %v2219
        %v3495 = vpop.f32.mrb[0].mxu0
        %v3496 = vadd.f32 0.0, %v3495
        %v3497 = vpop.f32.mrb[0].mxu0
        %v3498 = vadd.f32 0.0, %v3497
        %v3499 = vpop.f32.mrb[0].mxu0
        %v3500 = vadd.f32 0.0, %v3499
        %v3501 = vpop.f32.mrb[0].mxu0
        %v3502 = vadd.f32 0.0, %v3501
        %3503 = vmatprep.mubr.bf16.mxu0 %v2222
        %3504 = vmatmul.mubr.bf16.gmra.mrb[0].mxu0 %v2221
        %v3505 = vpop.f32.mrb[0].mxu0
        %v3506 = vadd.f32 0.0, %v3505
        %v3507 = vpop.f32.mrb[0].mxu0
        %v3508 = vadd.f32 0.0, %v3507
        %v3509 = vpop.f32.mrb[0].mxu0
        %v3510 = vadd.f32 0.0, %v3509
        %v3511 = vpop.f32.mrb[0].mxu0
        %v3512 = vadd.f32 0.0, %v3511
        %3513 = vmatprep.mubr.bf16.mxu0 %v2224
        %3514 = vmatmul.mubr.bf16.gmra.mrb[0].mxu0 %v2223
        %v3515 = vpop.f32.mrb[0].mxu0
        %v3516 = vadd.f32 0.0, %v3515
        %v3517 = vpop.f32.mrb[0].mxu0
        %v3518 = vadd.f32 0.0, %v3517
        %v3519 = vpop.f32.mrb[0].mxu0
        %v3520 = vadd.f32 0.0, %v3519
        %v3521 = vpop.f32.mrb[0].mxu0
        %v3522 = vadd.f32 0.0, %v3521
        %3523 = vmatprep.mubr.bf16.mxu0 %v2226
        %3524 = vmatmul.mubr.bf16.gmra.mrb[0].mxu0 %v2225
        %v3525 = vpop.f32.mrb[0].mxu0
        %v3526 = vadd.f32 0.0, %v3525
        %v3527 = vpop.f32.mrb[0].mxu0
        %v3528 = vadd.f32 0.0, %v3527
        %v3529 = vpop.f32.mrb[0].mxu0
        %v3530 = vadd.f32 0.0, %v3529
        %v3531 = vpop.f32.mrb[0].mxu0
        %v3532 = vadd.f32 0.0, %v3531
        %3533 = vmatprep.mubr.bf16.mxu0 %v2228
        %3534 = vmatmul.mubr.bf16.gmra.mrb[0].mxu0 %v2227
        %v3535 = vpop.f32.mrb[0].mxu0
        %v3536 = vadd.f32 0.0, %v3535
        %v3537 = vpop.f32.mrb[0].mxu0
        %v3538 = vadd.f32 0.0, %v3537
        %v3539 = vpop.f32.mrb[0].mxu0
        %v3540 = vadd.f32 0.0, %v3539
        %v3541 = vpop.f32.mrb[0].mxu0
        %v3542 = vadd.f32 0.0, %v3541
        %3543 = vmatprep.mubr.bf16.mxu0 %v2230
        %3544 = vmatmul.mubr.bf16.gmra.mrb[0].mxu0 %v2229
        %v3545 = vpop.f32.mrb[0].mxu0
        %v3546 = vadd.f32 0.0, %v3545
        %v3547 = vpop.f32.mrb[0].mxu0
        %v3548 = vadd.f32 0.0, %v3547
        %v3549 = vpop.f32.mrb[0].mxu0
        %v3550 = vadd.f32 0.0, %v3549
        %v3551 = vpop.f32.mrb[0].mxu0
        %v3552 = vadd.f32 0.0, %v3551
        %3553 = vmatprep.mubr.bf16.mxu0 %v2232
        %3554 = vmatmul.mubr.bf16.gmra.mrb[0].mxu0 %v2231
        %v3555 = vpop.f32.mrb[0].mxu0
        %v3556 = vadd.f32 0.0, %v3555
        %v3557 = vpop.f32.mrb[0].mxu0
        %v3558 = vadd.f32 0.0, %v3557
        %v3559 = vpop.f32.mrb[0].mxu0
        %v3560 = vadd.f32 0.0, %v3559
        %v3561 = vpop.f32.mrb[0].mxu0
        %v3562 = vadd.f32 0.0, %v3561
        %3563 = vmatprep.mubr.bf16.mxu0 %v2234
        %3564 = vmatmul.mubr.bf16.gmra.mrb[0].mxu0 %v2233
        %v3565 = vpop.f32.mrb[0].mxu0
        %v3566 = vadd.f32 0.0, %v3565
        %v3567 = vpop.f32.mrb[0].mxu0
        %v3568 = vadd.f32 0.0, %v3567
        %v3569 = vpop.f32.mrb[0].mxu0
        %v3570 = vadd.f32 0.0, %v3569
        %v3571 = vpop.f32.mrb[0].mxu0
        %v3572 = vadd.f32 0.0, %v3571
        %3573 = vmatprep.mubr.bf16.mxu0 %v2236
        %3574 = vmatmul.mubr.bf16.gmra.mrb[0].mxu0 %v2235
        %v3575 = vpop.f32.mrb[0].mxu0
        %v3576 = vadd.f32 0.0, %v3575
        %v3577 = vpop.f32.mrb[0].mxu0
        %v3578 = vadd.f32 0.0, %v3577
        %v3579 = vpop.f32.mrb[0].mxu0
        %v3580 = vadd.f32 0.0, %v3579
        %v3581 = vpop.f32.mrb[0].mxu0
        %v3582 = vadd.f32 0.0, %v3581
        %3583 = vdwg.mxu0
        %3584 = vmatprep.subr.bf16.mxu0 %v2756
        %3585 = vmatpush1.bf16.msra.mxu0 %v2755
        %3586 = vmatprep.subr.bf16.mxu0 %v2764
        %3587 = vmatpush1.bf16.msra.mxu0 %v2763
        %3588 = vmatprep.subr.bf16.mxu0 %v2772
        %3589 = vmatpush1.bf16.msra.mxu0 %v2771
        %3590 = vmatprep.subr.bf16.mxu0 %v2780
        %3591 = vmatpush1.bf16.msra.mxu0 %v2779
        %3592 = vmatprep.subr.bf16.mxu0 %v2788
        %3593 = vmatpush1.bf16.msra.mxu0 %v2787
        %3594 = vmatprep.subr.bf16.mxu0 %v2796
        %3595 = vmatpush1.bf16.msra.mxu0 %v2795
        %3596 = vmatprep.subr.bf16.mxu0 %v2804
        %3597 = vmatpush1.bf16.msra.mxu0 %v2803
        %3598 = vmatprep.subr.bf16.mxu0 %v2812
        %3599 = vmatpush1.bf16.msra.mxu0 %v2811
        %3600 = vmatprep.subr.bf16.mxu0 %v2820
        %3601 = vmatpush1.bf16.msra.mxu0 %v2819
        %3602 = vmatprep.subr.bf16.mxu0 %v2828
        %3603 = vmatpush1.bf16.msra.mxu0 %v2827
        %3604 = vmatprep.subr.bf16.mxu0 %v2836
        %3605 = vmatpush1.bf16.msra.mxu0 %v2835
        %3606 = vmatprep.subr.bf16.mxu0 %v2844
        %3607 = vmatpush1.bf16.msra.mxu0 %v2843
        %3608 = vmatprep.subr.bf16.mxu0 %v2852
        %3609 = vmatpush1.bf16.msra.mxu0 %v2851
        %3610 = vmatprep.subr.bf16.mxu0 %v2860
        %3611 = vmatpush1.bf16.msra.mxu0 %v2859
        %3612 = vmatprep.subr.bf16.mxu0 %v2868
        %3613 = vmatpush1.bf16.msra.mxu0 %v2867
        %3614 = vmatprep.subr.bf16.mxu0 %v2876
        %3615 = vmatpush1.bf16.msra.mxu0 %v2875
        %3616 = vmatprep.mubr.bf16.mxu0 %v2206
        %3617 = vmatmul.mubr.bf16.gmra.mrb[0].mxu0 %v2205
        %v3618 = vpop.f32.mrb[0].mxu0
        %v3619 = vadd.f32 0.0, %v3618
        %v3620 = vpop.f32.mrb[0].mxu0
        %v3621 = vadd.f32 0.0, %v3620
        %v3622 = vpop.f32.mrb[0].mxu0
        %v3623 = vadd.f32 0.0, %v3622
        %v3624 = vpop.f32.mrb[0].mxu0
        %v3625 = vadd.f32 0.0, %v3624
        %3626 = vmatprep.mubr.bf16.mxu0 %v2208
        %3627 = vmatmul.mubr.bf16.gmra.mrb[0].mxu0 %v2207
        %v3628 = vpop.f32.mrb[0].mxu0
        %v3629 = vadd.f32 0.0, %v3628
        %v3630 = vpop.f32.mrb[0].mxu0
        %v3631 = vadd.f32 0.0, %v3630
        %v3632 = vpop.f32.mrb[0].mxu0
        %v3633 = vadd.f32 0.0, %v3632
        %v3634 = vpop.f32.mrb[0].mxu0
        %v3635 = vadd.f32 0.0, %v3634
        %3636 = vmatprep.mubr.bf16.mxu0 %v2210
        %3637 = vmatmul.mubr.bf16.gmra.mrb[0].mxu0 %v2209
        %v3638 = vpop.f32.mrb[0].mxu0
        %v3639 = vadd.f32 0.0, %v3638
        %v3640 = vpop.f32.mrb[0].mxu0
        %v3641 = vadd.f32 0.0, %v3640
        %v3642 = vpop.f32.mrb[0].mxu0
        %v3643 = vadd.f32 0.0, %v3642
        %v3644 = vpop.f32.mrb[0].mxu0
        %v3645 = vadd.f32 0.0, %v3644
        %3646 = vmatprep.mubr.bf16.mxu0 %v2212
        %3647 = vmatmul.mubr.bf16.gmra.mrb[0].mxu0 %v2211
        %v3648 = vpop.f32.mrb[0].mxu0
        %v3649 = vadd.f32 0.0, %v3648
        %v3650 = vpop.f32.mrb[0].mxu0
        %v3651 = vadd.f32 0.0, %v3650
        %v3652 = vpop.f32.mrb[0].mxu0
        %v3653 = vadd.f32 0.0, %v3652
        %v3654 = vpop.f32.mrb[0].mxu0
        %v3655 = vadd.f32 0.0, %v3654
        %3656 = vmatprep.mubr.bf16.mxu0 %v2214
        %3657 = vmatmul.mubr.bf16.gmra.mrb[0].mxu0 %v2213
        %v3658 = vpop.f32.mrb[0].mxu0
        %v3659 = vadd.f32 0.0, %v3658
        %v3660 = vpop.f32.mrb[0].mxu0
        %v3661 = vadd.f32 0.0, %v3660
        %v3662 = vpop.f32.mrb[0].mxu0
        %v3663 = vadd.f32 0.0, %v3662
        %v3664 = vpop.f32.mrb[0].mxu0
        %v3665 = vadd.f32 0.0, %v3664
        %3666 = vmatprep.mubr.bf16.mxu0 %v2216
        %3667 = vmatmul.mubr.bf16.gmra.mrb[0].mxu0 %v2215
        %v3668 = vpop.f32.mrb[0].mxu0
        %v3669 = vadd.f32 0.0, %v3668
        %v3670 = vpop.f32.mrb[0].mxu0
        %v3671 = vadd.f32 0.0, %v3670
        %v3672 = vpop.f32.mrb[0].mxu0
        %v3673 = vadd.f32 0.0, %v3672
        %v3674 = vpop.f32.mrb[0].mxu0
        %v3675 = vadd.f32 0.0, %v3674
        %3676 = vmatprep.mubr.bf16.mxu0 %v2218
        %3677 = vmatmul.mubr.bf16.gmra.mrb[0].mxu0 %v2217
        %v3678 = vpop.f32.mrb[0].mxu0
        %v3679 = vadd.f32 0.0, %v3678
        %v3680 = vpop.f32.mrb[0].mxu0
        %v3681 = vadd.f32 0.0, %v3680
        %v3682 = vpop.f32.mrb[0].mxu0
        %v3683 = vadd.f32 0.0, %v3682
        %v3684 = vpop.f32.mrb[0].mxu0
        %v3685 = vadd.f32 0.0, %v3684
        %3686 = vmatprep.mubr.bf16.mxu0 %v2220
        %3687 = vmatmul.mubr.bf16.gmra.mrb[0].mxu0 %v2219
        %v3688 = vpop.f32.mrb[0].mxu0
        %v3689 = vadd.f32 0.0, %v3688
        %v3690 = vpop.f32.mrb[0].mxu0
        %v3691 = vadd.f32 0.0, %v3690
        %v3692 = vpop.f32.mrb[0].mxu0
        %v3693 = vadd.f32 0.0, %v3692
        %v3694 = vpop.f32.mrb[0].mxu0
        %v3695 = vadd.f32 0.0, %v3694
        %3696 = vmatprep.mubr.bf16.mxu0 %v2222
        %3697 = vmatmul.mubr.bf16.gmra.mrb[0].mxu0 %v2221
        %v3698 = vpop.f32.mrb[0].mxu0
        %v3699 = vadd.f32 0.0, %v3698
        %v3700 = vpop.f32.mrb[0].mxu0
        %v3701 = vadd.f32 0.0, %v3700
        %v3702 = vpop.f32.mrb[0].mxu0
        %v3703 = vadd.f32 0.0, %v3702
        %v3704 = vpop.f32.mrb[0].mxu0
        %v3705 = vadd.f32 0.0, %v3704
        %3706 = vmatprep.mubr.bf16.mxu0 %v2224
        %3707 = vmatmul.mubr.bf16.gmra.mrb[0].mxu0 %v2223
        %v3708 = vpop.f32.mrb[0].mxu0
        %v3709 = vadd.f32 0.0, %v3708
        %v3710 = vpop.f32.mrb[0].mxu0
        %v3711 = vadd.f32 0.0, %v3710
        %v3712 = vpop.f32.mrb[0].mxu0
        %v3713 = vadd.f32 0.0, %v3712
        %v3714 = vpop.f32.mrb[0].mxu0
        %v3715 = vadd.f32 0.0, %v3714
        %3716 = vmatprep.mubr.bf16.mxu0 %v2226
        %3717 = vmatmul.mubr.bf16.gmra.mrb[0].mxu0 %v2225
        %v3718 = vpop.f32.mrb[0].mxu0
        %v3719 = vadd.f32 0.0, %v3718
        %v3720 = vpop.f32.mrb[0].mxu0
        %v3721 = vadd.f32 0.0, %v3720
        %v3722 = vpop.f32.mrb[0].mxu0
        %v3723 = vadd.f32 0.0, %v3722
        %v3724 = vpop.f32.mrb[0].mxu0
        %v3725 = vadd.f32 0.0, %v3724
        %3726 = vmatprep.mubr.bf16.mxu0 %v2228
        %3727 = vmatmul.mubr.bf16.gmra.mrb[0].mxu0 %v2227
        %v3728 = vpop.f32.mrb[0].mxu0
        %v3729 = vadd.f32 0.0, %v3728
        %v3730 = vpop.f32.mrb[0].mxu0
        %v3731 = vadd.f32 0.0, %v3730
        %v3732 = vpop.f32.mrb[0].mxu0
        %v3733 = vadd.f32 0.0, %v3732
        %v3734 = vpop.f32.mrb[0].mxu0
        %v3735 = vadd.f32 0.0, %v3734
        %3736 = vmatprep.mubr.bf16.mxu0 %v2230
        %3737 = vmatmul.mubr.bf16.gmra.mrb[0].mxu0 %v2229
        %v3738 = vpop.f32.mrb[0].mxu0
        %v3739 = vadd.f32 0.0, %v3738
        %v3740 = vpop.f32.mrb[0].mxu0
        %v3741 = vadd.f32 0.0, %v3740
        %v3742 = vpop.f32.mrb[0].mxu0
        %v3743 = vadd.f32 0.0, %v3742
        %v3744 = vpop.f32.mrb[0].mxu0
        %v3745 = vadd.f32 0.0, %v3744
        %3746 = vmatprep.mubr.bf16.mxu0 %v2232
        %3747 = vmatmul.mubr.bf16.gmra.mrb[0].mxu0 %v2231
        %v3748 = vpop.f32.mrb[0].mxu0
        %v3749 = vadd.f32 0.0, %v3748
        %v3750 = vpop.f32.mrb[0].mxu0
        %v3751 = vadd.f32 0.0, %v3750
        %v3752 = vpop.f32.mrb[0].mxu0
        %v3753 = vadd.f32 0.0, %v3752
        %v3754 = vpop.f32.mrb[0].mxu0
        %v3755 = vadd.f32 0.0, %v3754
        %3756 = vmatprep.mubr.bf16.mxu0 %v2234
        %3757 = vmatmul.mubr.bf16.gmra.mrb[0].mxu0 %v2233
        %v3758 = vpop.f32.mrb[0].mxu0
        %v3759 = vadd.f32 0.0, %v3758
        %v3760 = vpop.f32.mrb[0].mxu0
        %v3761 = vadd.f32 0.0, %v3760
        %v3762 = vpop.f32.mrb[0].mxu0
        %v3763 = vadd.f32 0.0, %v3762
        %v3764 = vpop.f32.mrb[0].mxu0
        %v3765 = vadd.f32 0.0, %v3764
        %3766 = vmatprep.mubr.bf16.mxu0 %v2236
        %3767 = vmatmul.mubr.bf16.gmra.mrb[0].mxu0 %v2235
        %v3768 = vpop.f32.mrb[0].mxu0
        %v3769 = vadd.f32 0.0, %v3768
        %v3770 = vpop.f32.mrb[0].mxu0
        %v3771 = vadd.f32 0.0, %v3770
        %v3772 = vpop.f32.mrb[0].mxu0
        %v3773 = vadd.f32 0.0, %v3772
        %v3774 = vpop.f32.mrb[0].mxu0
        %v3775 = vadd.f32 0.0, %v3774
        %3776 = vdwg.mxu0
        %v3777 = vmax.f32 %v3040, 0.0
        %v3778 = vmax.f32 %v3042, 0.0
        %v3779 = vmax.f32 %v3233, 0.0
        %v3780 = vmax.f32 %v3235, 0.0
        %v3781 = vmax.f32 %v3426, 0.0
        %v3782 = vmax.f32 %v3428, 0.0
        %v3783 = vmax.f32 %v3619, 0.0
        %v3784 = vmax.f32 %v3621, 0.0
        %v3785 = vmax.f32 %v3044, 0.0
        %v3786 = vmax.f32 %v3046, 0.0
        %v3787 = vmax.f32 %v3237, 0.0
        %v3788 = vmax.f32 %v3239, 0.0
        %v3789 = vmax.f32 %v3430, 0.0
        %v3790 = vmax.f32 %v3432, 0.0
        %v3791 = vmax.f32 %v3623, 0.0
        %v3792 = vmax.f32 %v3625, 0.0
        %v3793 = vmax.f32 %v3050, 0.0
        %v3794 = vmax.f32 %v3052, 0.0
        %v3795 = vmax.f32 %v3243, 0.0
        %v3796 = vmax.f32 %v3245, 0.0
        %v3797 = vmax.f32 %v3436, 0.0
        %v3798 = vmax.f32 %v3438, 0.0
        %v3799 = vmax.f32 %v3629, 0.0
        %v3800 = vmax.f32 %v3631, 0.0
        %v3801 = vmax.f32 %v3054, 0.0
        %v3802 = vmax.f32 %v3056, 0.0
        %v3803 = vmax.f32 %v3247, 0.0
        %v3804 = vmax.f32 %v3249, 0.0
        %v3805 = vmax.f32 %v3440, 0.0
        %v3806 = vmax.f32 %v3442, 0.0
        %v3807 = vmax.f32 %v3633, 0.0
        %v3808 = vmax.f32 %v3635, 0.0
        %v3809 = vmax.f32 %v3060, 0.0
        %v3810 = vmax.f32 %v3062, 0.0
        %v3811 = vmax.f32 %v3253, 0.0
        %v3812 = vmax.f32 %v3255, 0.0
        %v3813 = vmax.f32 %v3446, 0.0
        %v3814 = vmax.f32 %v3448, 0.0
        %v3815 = vmax.f32 %v3639, 0.0
        %v3816 = vmax.f32 %v3641, 0.0
        %v3817 = vmax.f32 %v3064, 0.0
        %v3818 = vmax.f32 %v3066, 0.0
        %v3819 = vmax.f32 %v3257, 0.0
        %v3820 = vmax.f32 %v3259, 0.0
        %v3821 = vmax.f32 %v3450, 0.0
        %v3822 = vmax.f32 %v3452, 0.0
        %v3823 = vmax.f32 %v3643, 0.0
        %v3824 = vmax.f32 %v3645, 0.0
        %v3825 = vmax.f32 %v3070, 0.0
        %v3826 = vmax.f32 %v3072, 0.0
        %v3827 = vmax.f32 %v3263, 0.0
        %v3828 = vmax.f32 %v3265, 0.0
        %v3829 = vmax.f32 %v3456, 0.0
        %v3830 = vmax.f32 %v3458, 0.0
        %v3831 = vmax.f32 %v3649, 0.0
        %v3832 = vmax.f32 %v3651, 0.0
        %v3833 = vmax.f32 %v3074, 0.0
        %v3834 = vmax.f32 %v3076, 0.0
        %v3835 = vmax.f32 %v3267, 0.0
        %v3836 = vmax.f32 %v3269, 0.0
        %v3837 = vmax.f32 %v3460, 0.0
        %v3838 = vmax.f32 %v3462, 0.0
        %v3839 = vmax.f32 %v3653, 0.0
        %v3840 = vmax.f32 %v3655, 0.0
        %v3841 = vmax.f32 %v3080, 0.0
        %v3842 = vmax.f32 %v3082, 0.0
        %v3843 = vmax.f32 %v3273, 0.0
        %v3844 = vmax.f32 %v3275, 0.0
        %v3845 = vmax.f32 %v3466, 0.0
        %v3846 = vmax.f32 %v3468, 0.0
        %v3847 = vmax.f32 %v3659, 0.0
        %v3848 = vmax.f32 %v3661, 0.0
        %v3849 = vmax.f32 %v3084, 0.0
        %v3850 = vmax.f32 %v3086, 0.0
        %v3851 = vmax.f32 %v3277, 0.0
        %v3852 = vmax.f32 %v3279, 0.0
        %v3853 = vmax.f32 %v3470, 0.0
        %v3854 = vmax.f32 %v3472, 0.0
        %v3855 = vmax.f32 %v3663, 0.0
        %v3856 = vmax.f32 %v3665, 0.0
        %v3857 = vmax.f32 %v3090, 0.0
        %v3858 = vmax.f32 %v3092, 0.0
        %v3859 = vmax.f32 %v3283, 0.0
        %v3860 = vmax.f32 %v3285, 0.0
        %v3861 = vmax.f32 %v3476, 0.0
        %v3862 = vmax.f32 %v3478, 0.0
        %v3863 = vmax.f32 %v3669, 0.0
        %v3864 = vmax.f32 %v3671, 0.0
        %v3865 = vmax.f32 %v3094, 0.0
        %v3866 = vmax.f32 %v3096, 0.0
        %v3867 = vmax.f32 %v3287, 0.0
        %v3868 = vmax.f32 %v3289, 0.0
        %v3869 = vmax.f32 %v3480, 0.0
        %v3870 = vmax.f32 %v3482, 0.0
        %v3871 = vmax.f32 %v3673, 0.0
        %v3872 = vmax.f32 %v3675, 0.0
        %v3873 = vmax.f32 %v3100, 0.0
        %v3874 = vmax.f32 %v3102, 0.0
        %v3875 = vmax.f32 %v3293, 0.0
        %v3876 = vmax.f32 %v3295, 0.0
        %v3877 = vmax.f32 %v3486, 0.0
        %v3878 = vmax.f32 %v3488, 0.0
        %v3879 = vmax.f32 %v3679, 0.0
        %v3880 = vmax.f32 %v3681, 0.0
        %v3881 = vmax.f32 %v3104, 0.0
        %v3882 = vmax.f32 %v3106, 0.0
        %v3883 = vmax.f32 %v3297, 0.0
        %v3884 = vmax.f32 %v3299, 0.0
        %v3885 = vmax.f32 %v3490, 0.0
        %v3886 = vmax.f32 %v3492, 0.0
        %v3887 = vmax.f32 %v3683, 0.0
        %v3888 = vmax.f32 %v3685, 0.0
        %v3889 = vmax.f32 %v3110, 0.0
        %v3890 = vmax.f32 %v3112, 0.0
        %v3891 = vmax.f32 %v3303, 0.0
        %v3892 = vmax.f32 %v3305, 0.0
        %v3893 = vmax.f32 %v3496, 0.0
        %v3894 = vmax.f32 %v3498, 0.0
        %v3895 = vmax.f32 %v3689, 0.0
        %v3896 = vmax.f32 %v3691, 0.0
        %v3897 = vmax.f32 %v3114, 0.0
        %v3898 = vmax.f32 %v3116, 0.0
        %v3899 = vmax.f32 %v3307, 0.0
        %v3900 = vmax.f32 %v3309, 0.0
        %v3901 = vmax.f32 %v3500, 0.0
        %v3902 = vmax.f32 %v3502, 0.0
        %v3903 = vmax.f32 %v3693, 0.0
        %v3904 = vmax.f32 %v3695, 0.0
        %v3905 = vmax.f32 %v3120, 0.0
        %v3906 = vmax.f32 %v3122, 0.0
        %v3907 = vmax.f32 %v3313, 0.0
        %v3908 = vmax.f32 %v3315, 0.0
        %v3909 = vmax.f32 %v3506, 0.0
        %v3910 = vmax.f32 %v3508, 0.0
        %v3911 = vmax.f32 %v3699, 0.0
        %v3912 = vmax.f32 %v3701, 0.0
        %v3913 = vmax.f32 %v3124, 0.0
        %v3914 = vmax.f32 %v3126, 0.0
        %v3915 = vmax.f32 %v3317, 0.0
        %v3916 = vmax.f32 %v3319, 0.0
        %v3917 = vmax.f32 %v3510, 0.0
        %v3918 = vmax.f32 %v3512, 0.0
        %v3919 = vmax.f32 %v3703, 0.0
        %v3920 = vmax.f32 %v3705, 0.0
        %v3921 = vmax.f32 %v3130, 0.0
        %v3922 = vmax.f32 %v3132, 0.0
        %v3923 = vmax.f32 %v3323, 0.0
        %v3924 = vmax.f32 %v3325, 0.0
        %v3925 = vmax.f32 %v3516, 0.0
        %v3926 = vmax.f32 %v3518, 0.0
        %v3927 = vmax.f32 %v3709, 0.0
        %v3928 = vmax.f32 %v3711, 0.0
        %v3929 = vmax.f32 %v3134, 0.0
        %v3930 = vmax.f32 %v3136, 0.0
        %v3931 = vmax.f32 %v3327, 0.0
        %v3932 = vmax.f32 %v3329, 0.0
        %v3933 = vmax.f32 %v3520, 0.0
        %v3934 = vmax.f32 %v3522, 0.0
        %v3935 = vmax.f32 %v3713, 0.0
        %v3936 = vmax.f32 %v3715, 0.0
        %v3937 = vmax.f32 %v3140, 0.0
        %v3938 = vmax.f32 %v3142, 0.0
        %v3939 = vmax.f32 %v3333, 0.0
        %v3940 = vmax.f32 %v3335, 0.0
        %v3941 = vmax.f32 %v3526, 0.0
        %v3942 = vmax.f32 %v3528, 0.0
        %v3943 = vmax.f32 %v3719, 0.0
        %v3944 = vmax.f32 %v3721, 0.0
        %v3945 = vmax.f32 %v3144, 0.0
        %v3946 = vmax.f32 %v3146, 0.0
        %v3947 = vmax.f32 %v3337, 0.0
        %v3948 = vmax.f32 %v3339, 0.0
        %v3949 = vmax.f32 %v3530, 0.0
        %v3950 = vmax.f32 %v3532, 0.0
        %v3951 = vmax.f32 %v3723, 0.0
        %v3952 = vmax.f32 %v3725, 0.0
        %v3953 = vmax.f32 %v3150, 0.0
        %v3954 = vmax.f32 %v3152, 0.0
        %v3955 = vmax.f32 %v3343, 0.0
        %v3956 = vmax.f32 %v3345, 0.0
        %v3957 = vmax.f32 %v3536, 0.0
        %v3958 = vmax.f32 %v3538, 0.0
        %v3959 = vmax.f32 %v3729, 0.0
        %v3960 = vmax.f32 %v3731, 0.0
        %v3961 = vmax.f32 %v3154, 0.0
        %v3962 = vmax.f32 %v3156, 0.0
        %v3963 = vmax.f32 %v3347, 0.0
        %v3964 = vmax.f32 %v3349, 0.0
        %v3965 = vmax.f32 %v3540, 0.0
        %v3966 = vmax.f32 %v3542, 0.0
        %v3967 = vmax.f32 %v3733, 0.0
        %v3968 = vmax.f32 %v3735, 0.0
        %v3969 = vmax.f32 %v3160, 0.0
        %v3970 = vmax.f32 %v3162, 0.0
        %v3971 = vmax.f32 %v3353, 0.0
        %v3972 = vmax.f32 %v3355, 0.0
        %v3973 = vmax.f32 %v3546, 0.0
        %v3974 = vmax.f32 %v3548, 0.0
        %v3975 = vmax.f32 %v3739, 0.0
        %v3976 = vmax.f32 %v3741, 0.0
        %v3977 = vmax.f32 %v3164, 0.0
        %v3978 = vmax.f32 %v3166, 0.0
        %v3979 = vmax.f32 %v3357, 0.0
        %v3980 = vmax.f32 %v3359, 0.0
        %v3981 = vmax.f32 %v3550, 0.0
        %v3982 = vmax.f32 %v3552, 0.0
        %v3983 = vmax.f32 %v3743, 0.0
        %v3984 = vmax.f32 %v3745, 0.0
        %v3985 = vmax.f32 %v3170, 0.0
        %v3986 = vmax.f32 %v3172, 0.0
        %v3987 = vmax.f32 %v3363, 0.0
        %v3988 = vmax.f32 %v3365, 0.0
        %v3989 = vmax.f32 %v3556, 0.0
        %v3990 = vmax.f32 %v3558, 0.0
        %v3991 = vmax.f32 %v3749, 0.0
        %v3992 = vmax.f32 %v3751, 0.0
        %v3993 = vmax.f32 %v3174, 0.0
        %v3994 = vmax.f32 %v3176, 0.0
        %v3995 = vmax.f32 %v3367, 0.0
        %v3996 = vmax.f32 %v3369, 0.0
        %v3997 = vmax.f32 %v3560, 0.0
        %v3998 = vmax.f32 %v3562, 0.0
        %v3999 = vmax.f32 %v3753, 0.0
        %v4000 = vmax.f32 %v3755, 0.0
        %v4001 = vmax.f32 %v3180, 0.0
        %v4002 = vmax.f32 %v3182, 0.0
        %v4003 = vmax.f32 %v3373, 0.0
        %v4004 = vmax.f32 %v3375, 0.0
        %v4005 = vmax.f32 %v3566, 0.0
        %v4006 = vmax.f32 %v3568, 0.0
        %v4007 = vmax.f32 %v3759, 0.0
        %v4008 = vmax.f32 %v3761, 0.0
        %v4009 = vmax.f32 %v3184, 0.0
        %v4010 = vmax.f32 %v3186, 0.0
        %v4011 = vmax.f32 %v3377, 0.0
        %v4012 = vmax.f32 %v3379, 0.0
        %v4013 = vmax.f32 %v3570, 0.0
        %v4014 = vmax.f32 %v3572, 0.0
        %v4015 = vmax.f32 %v3763, 0.0
        %v4016 = vmax.f32 %v3765, 0.0
        %v4017 = vmax.f32 %v3190, 0.0
        %v4018 = vmax.f32 %v3192, 0.0
        %v4019 = vmax.f32 %v3383, 0.0
        %v4020 = vmax.f32 %v3385, 0.0
        %v4021 = vmax.f32 %v3576, 0.0
        %v4022 = vmax.f32 %v3578, 0.0
        %v4023 = vmax.f32 %v3769, 0.0
        %v4024 = vmax.f32 %v3771, 0.0
        %v4025 = vmax.f32 %v3194, 0.0
        %v4026 = vmax.f32 %v3196, 0.0
        %v4027 = vmax.f32 %v3387, 0.0
        %v4028 = vmax.f32 %v3389, 0.0
        %v4029 = vmax.f32 %v3580, 0.0
        %v4030 = vmax.f32 %v3582, 0.0
        %v4031 = vmax.f32 %v3773, 0.0
        %v4032 = vmax.f32 %v3775, 0.0
        %4033 = vst [vmem:[%s260] sm:$0xff] %v3777
        %4034 = vst [vmem:[%s260 + $0x8] sm:$0xff] %v3778
        %4035 = vst [vmem:[%s260 + $0x10] sm:$0xff] %v3779
        %4036 = vst [vmem:[%s260 + $0x18] sm:$0xff] %v3780
        %4037 = vst [vmem:[%s260 + $0x20] sm:$0xff] %v3781
        %4038 = vst [vmem:[%s260 + $0x28] sm:$0xff] %v3782
        %4039 = vst [vmem:[%s260 + $0x30] sm:$0xff] %v3783
        %4040 = vst [vmem:[%s260 + $0x38] sm:$0xff] %v3784
        %4041 = vst [vmem:[%s260 + $0x40] sm:$0xff] %v3785
        %4042 = vst [vmem:[%s260 + $0x48] sm:$0xff] %v3786
        %4043 = vst [vmem:[%s260 + $0x50] sm:$0xff] %v3787
        %4044 = vst [vmem:[%s260 + $0x58] sm:$0xff] %v3788
        %4045 = vst [vmem:[%s260 + $0x60] sm:$0xff] %v3789
        %4046 = vst [vmem:[%s260 + $0x68] sm:$0xff] %v3790
        %4047 = vst [vmem:[%s260 + $0x70] sm:$0xff] %v3791
        %4048 = vst [vmem:[%s260 + $0x78] sm:$0xff] %v3792
        %4049 = vst [vmem:[%s260 + $0x80] sm:$0xff] %v3793
        %4050 = vst [vmem:[%s260 + $0x88] sm:$0xff] %v3794
        %4051 = vst [vmem:[%s260 + $0x90] sm:$0xff] %v3795
        %4052 = vst [vmem:[%s260 + $0x98] sm:$0xff] %v3796
        %4053 = vst [vmem:[%s260 + $0xa0] sm:$0xff] %v3797
        %4054 = vst [vmem:[%s260 + $0xa8] sm:$0xff] %v3798
        %4055 = vst [vmem:[%s260 + $0xb0] sm:$0xff] %v3799
        %4056 = vst [vmem:[%s260 + $0xb8] sm:$0xff] %v3800
        %4057 = vst [vmem:[%s260 + $0xc0] sm:$0xff] %v3801
        %4058 = vst [vmem:[%s260 + $0xc8] sm:$0xff] %v3802
        %4059 = vst [vmem:[%s260 + $0xd0] sm:$0xff] %v3803
        %4060 = vst [vmem:[%s260 + $0xd8] sm:$0xff] %v3804
        %4061 = vst [vmem:[%s260 + $0xe0] sm:$0xff] %v3805
        %4062 = vst [vmem:[%s260 + $0xe8] sm:$0xff] %v3806
        %4063 = vst [vmem:[%s260 + $0xf0] sm:$0xff] %v3807
        %4064 = vst [vmem:[%s260 + $0xf8] sm:$0xff] %v3808
        %4065 = vst [vmem:[%s260 + $0x100] sm:$0xff] %v3809
        %4066 = vst [vmem:[%s260 + $0x108] sm:$0xff] %v3810
        %4067 = vst [vmem:[%s260 + $0x110] sm:$0xff] %v3811
        %4068 = vst [vmem:[%s260 + $0x118] sm:$0xff] %v3812
        %4069 = vst [vmem:[%s260 + $0x120] sm:$0xff] %v3813
        %4070 = vst [vmem:[%s260 + $0x128] sm:$0xff] %v3814
        %4071 = vst [vmem:[%s260 + $0x130] sm:$0xff] %v3815
        %4072 = vst [vmem:[%s260 + $0x138] sm:$0xff] %v3816
        %4073 = vst [vmem:[%s260 + $0x140] sm:$0xff] %v3817
        %4074 = vst [vmem:[%s260 + $0x148] sm:$0xff] %v3818
        %4075 = vst [vmem:[%s260 + $0x150] sm:$0xff] %v3819
        %4076 = vst [vmem:[%s260 + $0x158] sm:$0xff] %v3820
        %4077 = vst [vmem:[%s260 + $0x160] sm:$0xff] %v3821
        %4078 = vst [vmem:[%s260 + $0x168] sm:$0xff] %v3822
        %4079 = vst [vmem:[%s260 + $0x170] sm:$0xff] %v3823
        %4080 = vst [vmem:[%s260 + $0x178] sm:$0xff] %v3824
        %4081 = vst [vmem:[%s260 + $0x180] sm:$0xff] %v3825
        %4082 = vst [vmem:[%s260 + $0x188] sm:$0xff] %v3826
        %4083 = vst [vmem:[%s260 + $0x190] sm:$0xff] %v3827
        %4084 = vst [vmem:[%s260 + $0x198] sm:$0xff] %v3828
        %4085 = vst [vmem:[%s260 + $0x1a0] sm:$0xff] %v3829
        %4086 = vst [vmem:[%s260 + $0x1a8] sm:$0xff] %v3830
        %4087 = vst [vmem:[%s260 + $0x1b0] sm:$0xff] %v3831
        %4088 = vst [vmem:[%s260 + $0x1b8] sm:$0xff] %v3832
        %4089 = vst [vmem:[%s260 + $0x1c0] sm:$0xff] %v3833
        %4090 = vst [vmem:[%s260 + $0x1c8] sm:$0xff] %v3834
        %4091 = vst [vmem:[%s260 + $0x1d0] sm:$0xff] %v3835
        %4092 = vst [vmem:[%s260 + $0x1d8] sm:$0xff] %v3836
        %4093 = vst [vmem:[%s260 + $0x1e0] sm:$0xff] %v3837
        %4094 = vst [vmem:[%s260 + $0x1e8] sm:$0xff] %v3838
        %4095 = vst [vmem:[%s260 + $0x1f0] sm:$0xff] %v3839
        %4096 = vst [vmem:[%s260 + $0x1f8] sm:$0xff] %v3840
        %4097 = vst [vmem:[%s260 + $0x200] sm:$0xff] %v3841
        %4098 = vst [vmem:[%s260 + $0x208] sm:$0xff] %v3842
        %4099 = vst [vmem:[%s260 + $0x210] sm:$0xff] %v3843
        %4100 = vst [vmem:[%s260 + $0x218] sm:$0xff] %v3844
        %4101 = vst [vmem:[%s260 + $0x220] sm:$0xff] %v3845
        %4102 = vst [vmem:[%s260 + $0x228] sm:$0xff] %v3846
        %4103 = vst [vmem:[%s260 + $0x230] sm:$0xff] %v3847
        %4104 = vst [vmem:[%s260 + $0x238] sm:$0xff] %v3848
        %4105 = vst [vmem:[%s260 + $0x240] sm:$0xff] %v3849
        %4106 = vst [vmem:[%s260 + $0x248] sm:$0xff] %v3850
        %4107 = vst [vmem:[%s260 + $0x250] sm:$0xff] %v3851
        %4108 = vst [vmem:[%s260 + $0x258] sm:$0xff] %v3852
        %4109 = vst [vmem:[%s260 + $0x260] sm:$0xff] %v3853
        %4110 = vst [vmem:[%s260 + $0x268] sm:$0xff] %v3854
        %4111 = vst [vmem:[%s260 + $0x270] sm:$0xff] %v3855
        %4112 = vst [vmem:[%s260 + $0x278] sm:$0xff] %v3856
        %4113 = vst [vmem:[%s260 + $0x280] sm:$0xff] %v3857
        %4114 = vst [vmem:[%s260 + $0x288] sm:$0xff] %v3858
        %4115 = vst [vmem:[%s260 + $0x290] sm:$0xff] %v3859
        %4116 = vst [vmem:[%s260 + $0x298] sm:$0xff] %v3860
        %4117 = vst [vmem:[%s260 + $0x2a0] sm:$0xff] %v3861
        %4118 = vst [vmem:[%s260 + $0x2a8] sm:$0xff] %v3862
        %4119 = vst [vmem:[%s260 + $0x2b0] sm:$0xff] %v3863
        %4120 = vst [vmem:[%s260 + $0x2b8] sm:$0xff] %v3864
        %4121 = vst [vmem:[%s260 + $0x2c0] sm:$0xff] %v3865
        %4122 = vst [vmem:[%s260 + $0x2c8] sm:$0xff] %v3866
        %4123 = vst [vmem:[%s260 + $0x2d0] sm:$0xff] %v3867
        %4124 = vst [vmem:[%s260 + $0x2d8] sm:$0xff] %v3868
        %4125 = vst [vmem:[%s260 + $0x2e0] sm:$0xff] %v3869
        %4126 = vst [vmem:[%s260 + $0x2e8] sm:$0xff] %v3870
        %4127 = vst [vmem:[%s260 + $0x2f0] sm:$0xff] %v3871
        %4128 = vst [vmem:[%s260 + $0x2f8] sm:$0xff] %v3872
        %4129 = vst [vmem:[%s260 + $0x300] sm:$0xff] %v3873
        %4130 = vst [vmem:[%s260 + $0x308] sm:$0xff] %v3874
        %4131 = vst [vmem:[%s260 + $0x310] sm:$0xff] %v3875
        %4132 = vst [vmem:[%s260 + $0x318] sm:$0xff] %v3876
        %4133 = vst [vmem:[%s260 + $0x320] sm:$0xff] %v3877
        %4134 = vst [vmem:[%s260 + $0x328] sm:$0xff] %v3878
        %4135 = vst [vmem:[%s260 + $0x330] sm:$0xff] %v3879
        %4136 = vst [vmem:[%s260 + $0x338] sm:$0xff] %v3880
        %4137 = vst [vmem:[%s260 + $0x340] sm:$0xff] %v3881
        %4138 = vst [vmem:[%s260 + $0x348] sm:$0xff] %v3882
        %4139 = vst [vmem:[%s260 + $0x350] sm:$0xff] %v3883
        %4140 = vst [vmem:[%s260 + $0x358] sm:$0xff] %v3884
        %4141 = vst [vmem:[%s260 + $0x360] sm:$0xff] %v3885
        %4142 = vst [vmem:[%s260 + $0x368] sm:$0xff] %v3886
        %4143 = vst [vmem:[%s260 + $0x370] sm:$0xff] %v3887
        %4144 = vst [vmem:[%s260 + $0x378] sm:$0xff] %v3888
        %4145 = vst [vmem:[%s260 + $0x380] sm:$0xff] %v3889
        %4146 = vst [vmem:[%s260 + $0x388] sm:$0xff] %v3890
        %4147 = vst [vmem:[%s260 + $0x390] sm:$0xff] %v3891
        %4148 = vst [vmem:[%s260 + $0x398] sm:$0xff] %v3892
        %4149 = vst [vmem:[%s260 + $0x3a0] sm:$0xff] %v3893
        %4150 = vst [vmem:[%s260 + $0x3a8] sm:$0xff] %v3894
        %4151 = vst [vmem:[%s260 + $0x3b0] sm:$0xff] %v3895
        %4152 = vst [vmem:[%s260 + $0x3b8] sm:$0xff] %v3896
        %4153 = vst [vmem:[%s260 + $0x3c0] sm:$0xff] %v3897
        %4154 = vst [vmem:[%s260 + $0x3c8] sm:$0xff] %v3898
        %4155 = vst [vmem:[%s260 + $0x3d0] sm:$0xff] %v3899
        %4156 = vst [vmem:[%s260 + $0x3d8] sm:$0xff] %v3900
        %4157 = vst [vmem:[%s260 + $0x3e0] sm:$0xff] %v3901
        %4158 = vst [vmem:[%s260 + $0x3e8] sm:$0xff] %v3902
        %4159 = vst [vmem:[%s260 + $0x3f0] sm:$0xff] %v3903
        %4160 = vst [vmem:[%s260 + $0x3f8] sm:$0xff] %v3904
        %4161 = vst [vmem:[%s260 + $0x400] sm:$0xff] %v3905
        %4162 = vst [vmem:[%s260 + $0x408] sm:$0xff] %v3906
        %4163 = vst [vmem:[%s260 + $0x410] sm:$0xff] %v3907
        %4164 = vst [vmem:[%s260 + $0x418] sm:$0xff] %v3908
        %4165 = vst [vmem:[%s260 + $0x420] sm:$0xff] %v3909
        %4166 = vst [vmem:[%s260 + $0x428] sm:$0xff] %v3910
        %4167 = vst [vmem:[%s260 + $0x430] sm:$0xff] %v3911
        %4168 = vst [vmem:[%s260 + $0x438] sm:$0xff] %v3912
        %4169 = vst [vmem:[%s260 + $0x440] sm:$0xff] %v3913
        %4170 = vst [vmem:[%s260 + $0x448] sm:$0xff] %v3914
        %4171 = vst [vmem:[%s260 + $0x450] sm:$0xff] %v3915
        %4172 = vst [vmem:[%s260 + $0x458] sm:$0xff] %v3916
        %4173 = vst [vmem:[%s260 + $0x460] sm:$0xff] %v3917
        %4174 = vst [vmem:[%s260 + $0x468] sm:$0xff] %v3918
        %4175 = vst [vmem:[%s260 + $0x470] sm:$0xff] %v3919
        %4176 = vst [vmem:[%s260 + $0x478] sm:$0xff] %v3920
        %4177 = vst [vmem:[%s260 + $0x480] sm:$0xff] %v3921
        %4178 = vst [vmem:[%s260 + $0x488] sm:$0xff] %v3922
        %4179 = vst [vmem:[%s260 + $0x490] sm:$0xff] %v3923
        %4180 = vst [vmem:[%s260 + $0x498] sm:$0xff] %v3924
        %4181 = vst [vmem:[%s260 + $0x4a0] sm:$0xff] %v3925
        %4182 = vst [vmem:[%s260 + $0x4a8] sm:$0xff] %v3926
        %4183 = vst [vmem:[%s260 + $0x4b0] sm:$0xff] %v3927
        %4184 = vst [vmem:[%s260 + $0x4b8] sm:$0xff] %v3928
        %4185 = vst [vmem:[%s260 + $0x4c0] sm:$0xff] %v3929
        %4186 = vst [vmem:[%s260 + $0x4c8] sm:$0xff] %v3930
        %4187 = vst [vmem:[%s260 + $0x4d0] sm:$0xff] %v3931
        %4188 = vst [vmem:[%s260 + $0x4d8] sm:$0xff] %v3932
        %4189 = vst [vmem:[%s260 + $0x4e0] sm:$0xff] %v3933
        %4190 = vst [vmem:[%s260 + $0x4e8] sm:$0xff] %v3934
        %4191 = vst [vmem:[%s260 + $0x4f0] sm:$0xff] %v3935
        %4192 = vst [vmem:[%s260 + $0x4f8] sm:$0xff] %v3936
        %4193 = vst [vmem:[%s260 + $0x500] sm:$0xff] %v3937
        %4194 = vst [vmem:[%s260 + $0x508] sm:$0xff] %v3938
        %4195 = vst [vmem:[%s260 + $0x510] sm:$0xff] %v3939
        %4196 = vst [vmem:[%s260 + $0x518] sm:$0xff] %v3940
        %4197 = vst [vmem:[%s260 + $0x520] sm:$0xff] %v3941
        %4198 = vst [vmem:[%s260 + $0x528] sm:$0xff] %v3942
        %4199 = vst [vmem:[%s260 + $0x530] sm:$0xff] %v3943
        %4200 = vst [vmem:[%s260 + $0x538] sm:$0xff] %v3944
        %4201 = vst [vmem:[%s260 + $0x540] sm:$0xff] %v3945
        %4202 = vst [vmem:[%s260 + $0x548] sm:$0xff] %v3946
        %4203 = vst [vmem:[%s260 + $0x550] sm:$0xff] %v3947
        %4204 = vst [vmem:[%s260 + $0x558] sm:$0xff] %v3948
        %4205 = vst [vmem:[%s260 + $0x560] sm:$0xff] %v3949
        %4206 = vst [vmem:[%s260 + $0x568] sm:$0xff] %v3950
        %4207 = vst [vmem:[%s260 + $0x570] sm:$0xff] %v3951
        %4208 = vst [vmem:[%s260 + $0x578] sm:$0xff] %v3952
        %4209 = vst [vmem:[%s260 + $0x580] sm:$0xff] %v3953
        %4210 = vst [vmem:[%s260 + $0x588] sm:$0xff] %v3954
        %4211 = vst [vmem:[%s260 + $0x590] sm:$0xff] %v3955
        %4212 = vst [vmem:[%s260 + $0x598] sm:$0xff] %v3956
        %4213 = vst [vmem:[%s260 + $0x5a0] sm:$0xff] %v3957
        %4214 = vst [vmem:[%s260 + $0x5a8] sm:$0xff] %v3958
        %4215 = vst [vmem:[%s260 + $0x5b0] sm:$0xff] %v3959
        %4216 = vst [vmem:[%s260 + $0x5b8] sm:$0xff] %v3960
        %4217 = vst [vmem:[%s260 + $0x5c0] sm:$0xff] %v3961
        %4218 = vst [vmem:[%s260 + $0x5c8] sm:$0xff] %v3962
        %4219 = vst [vmem:[%s260 + $0x5d0] sm:$0xff] %v3963
        %4220 = vst [vmem:[%s260 + $0x5d8] sm:$0xff] %v3964
        %4221 = vst [vmem:[%s260 + $0x5e0] sm:$0xff] %v3965
        %4222 = vst [vmem:[%s260 + $0x5e8] sm:$0xff] %v3966
        %4223 = vst [vmem:[%s260 + $0x5f0] sm:$0xff] %v3967
        %4224 = vst [vmem:[%s260 + $0x5f8] sm:$0xff] %v3968
        %4225 = vst [vmem:[%s260 + $0x600] sm:$0xff] %v3969
        %4226 = vst [vmem:[%s260 + $0x608] sm:$0xff] %v3970
        %4227 = vst [vmem:[%s260 + $0x610] sm:$0xff] %v3971
        %4228 = vst [vmem:[%s260 + $0x618] sm:$0xff] %v3972
        %4229 = vst [vmem:[%s260 + $0x620] sm:$0xff] %v3973
        %4230 = vst [vmem:[%s260 + $0x628] sm:$0xff] %v3974
        %4231 = vst [vmem:[%s260 + $0x630] sm:$0xff] %v3975
        %4232 = vst [vmem:[%s260 + $0x638] sm:$0xff] %v3976
        %4233 = vst [vmem:[%s260 + $0x640] sm:$0xff] %v3977
        %4234 = vst [vmem:[%s260 + $0x648] sm:$0xff] %v3978
        %4235 = vst [vmem:[%s260 + $0x650] sm:$0xff] %v3979
        %4236 = vst [vmem:[%s260 + $0x658] sm:$0xff] %v3980
        %4237 = vst [vmem:[%s260 + $0x660] sm:$0xff] %v3981
        %4238 = vst [vmem:[%s260 + $0x668] sm:$0xff] %v3982
        %4239 = vst [vmem:[%s260 + $0x670] sm:$0xff] %v3983
        %4240 = vst [vmem:[%s260 + $0x678] sm:$0xff] %v3984
        %4241 = vst [vmem:[%s260 + $0x680] sm:$0xff] %v3985
        %4242 = vst [vmem:[%s260 + $0x688] sm:$0xff] %v3986
        %4243 = vst [vmem:[%s260 + $0x690] sm:$0xff] %v3987
        %4244 = vst [vmem:[%s260 + $0x698] sm:$0xff] %v3988
        %4245 = vst [vmem:[%s260 + $0x6a0] sm:$0xff] %v3989
        %4246 = vst [vmem:[%s260 + $0x6a8] sm:$0xff] %v3990
        %4247 = vst [vmem:[%s260 + $0x6b0] sm:$0xff] %v3991
        %4248 = vst [vmem:[%s260 + $0x6b8] sm:$0xff] %v3992
        %4249 = vst [vmem:[%s260 + $0x6c0] sm:$0xff] %v3993
        %4250 = vst [vmem:[%s260 + $0x6c8] sm:$0xff] %v3994
        %4251 = vst [vmem:[%s260 + $0x6d0] sm:$0xff] %v3995
        %4252 = vst [vmem:[%s260 + $0x6d8] sm:$0xff] %v3996
        %4253 = vst [vmem:[%s260 + $0x6e0] sm:$0xff] %v3997
        %4254 = vst [vmem:[%s260 + $0x6e8] sm:$0xff] %v3998
        %4255 = vst [vmem:[%s260 + $0x6f0] sm:$0xff] %v3999
        %4256 = vst [vmem:[%s260 + $0x6f8] sm:$0xff] %v4000
        %4257 = vst [vmem:[%s260 + $0x700] sm:$0xff] %v4001
        %4258 = vst [vmem:[%s260 + $0x708] sm:$0xff] %v4002
        %4259 = vst [vmem:[%s260 + $0x710] sm:$0xff] %v4003
        %4260 = vst [vmem:[%s260 + $0x718] sm:$0xff] %v4004
        %4261 = vst [vmem:[%s260 + $0x720] sm:$0xff] %v4005
        %4262 = vst [vmem:[%s260 + $0x728] sm:$0xff] %v4006
        %4263 = vst [vmem:[%s260 + $0x730] sm:$0xff] %v4007
        %4264 = vst [vmem:[%s260 + $0x738] sm:$0xff] %v4008
        %4265 = vst [vmem:[%s260 + $0x740] sm:$0xff] %v4009
        %4266 = vst [vmem:[%s260 + $0x748] sm:$0xff] %v4010
        %4267 = vst [vmem:[%s260 + $0x750] sm:$0xff] %v4011
        %4268 = vst [vmem:[%s260 + $0x758] sm:$0xff] %v4012
        %4269 = vst [vmem:[%s260 + $0x760] sm:$0xff] %v4013
        %4270 = vst [vmem:[%s260 + $0x768] sm:$0xff] %v4014
        %4271 = vst [vmem:[%s260 + $0x770] sm:$0xff] %v4015
        %4272 = vst [vmem:[%s260 + $0x778] sm:$0xff] %v4016
        %4273 = vst [vmem:[%s260 + $0x780] sm:$0xff] %v4017
        %4274 = vst [vmem:[%s260 + $0x788] sm:$0xff] %v4018
        %4275 = vst [vmem:[%s260 + $0x790] sm:$0xff] %v4019
        %4276 = vst [vmem:[%s260 + $0x798] sm:$0xff] %v4020
        %4277 = vst [vmem:[%s260 + $0x7a0] sm:$0xff] %v4021
        %4278 = vst [vmem:[%s260 + $0x7a8] sm:$0xff] %v4022
        %4279 = vst [vmem:[%s260 + $0x7b0] sm:$0xff] %v4023
        %4280 = vst [vmem:[%s260 + $0x7b8] sm:$0xff] %v4024
        %4281 = vst [vmem:[%s260 + $0x7c0] sm:$0xff] %v4025
        %4282 = vst [vmem:[%s260 + $0x7c8] sm:$0xff] %v4026
        %4283 = vst [vmem:[%s260 + $0x7d0] sm:$0xff] %v4027
        %4284 = vst [vmem:[%s260 + $0x7d8] sm:$0xff] %v4028
        %4285 = vst [vmem:[%s260 + $0x7e0] sm:$0xff] %v4029
        %4286 = vst [vmem:[%s260 + $0x7e8] sm:$0xff] %v4030
        %4287 = vst [vmem:[%s260 + $0x7f0] sm:$0xff] %v4031
        %4288 = vst [vmem:[%s260 + $0x7f8] sm:$0xff] %v4032
        %s4289 = sand.u32 %s120, 1
        %s4290 = scalar_lea.sflag [#allocation4], %s4289
        %s4291 = sand.u32 %s120, 1
        %s4292 = smul.addr %s4291, 2048
        %s4293 = scalar_lea.vmem [#allocation10], %s4292
        // Predicated region
        $region53: #{tpu_custom_call.1} parent=35 // pred_check
          %p4294 = pneg %p130
        $region54: #{tpu_custom_call.1} parent=35 // pred_check_branch
          %4296 = sbr.rel (%p4294) target = $region56
        $region55: #{tpu_custom_call.1} parent=35 // pred_region
          %s4297 = smul.u32 32, %s23
          %s4299 = ssub.s32 32768, 32768
          %4300 = vsyncadd %s4290, %s4299
          %s4301 = smul.addr %s4297, 8
          %s4302 = smul.addr %s4301, 128
          %s4303 = scalar_lea.hbm %s4, %s4302
          %s4304 = sshll.u32 %s4293, 4
          %s4305 = int_to_ptr.vmem [resolvable:$true] %s4304
          %4310 = dma.vmem_to_hbm [thread:$0]  %s4305, 32768, %s4303, %s4290, 1024, 1024, 64
        $region56: #{tpu_custom_call.1} parent=35 // pred_fallthru
          _
      $region36: #{tpu_custom_call.1} parent=5 // pred_fallthru
        _
      %p4311 = scmp.le.s32.totalorder 2, %s18
      // Predicated region
      $region57: #{tpu_custom_call.1} parent=5 // pred_check
        %p4312 = pneg %p4311
      $region58: #{tpu_custom_call.1} parent=5 // pred_check_branch
        %4314 = sbr.rel (%p4312) target = $region60
      $region59: #{tpu_custom_call.1} parent=5 // pred_region
        %s4315 = ssub.s32 %s18, 2
        // Predicated region
        $region61: #{tpu_custom_call.1} parent=59 // pred_check
          %p4316 = pneg %p136
        $region62: #{tpu_custom_call.1} parent=59 // pred_check_branch
          %4318 = sbr.rel (%p4316) target = $region64
        $region63: #{tpu_custom_call.1} parent=59 // pred_region
          %s4319 = sand.u32 %s121, 1
          %s4320 = scalar_lea.sflag [#allocation4], %s4319
          %s4321 = sand.u32 %s121, 1
          %s4322 = smul.addr %s4321, 2048
          %s4323 = scalar_lea.vmem [#allocation10], %s4322
          %4324 = dma.done %s4320, 32768
        $region64: #{tpu_custom_call.1} parent=59 // pred_fallthru
          _
      $region60: #{tpu_custom_call.1} parent=5 // pred_fallthru
        _
    $region6: #{tpu_custom_call.1} parent=1 // loop_footer
      %s22 = sadd.s32 1, %s18
    $region7: #{tpu_custom_call.1} parent=1 // loop_footer_branch
      %17 = sbr.rel target = $region3
    $region8: #{tpu_custom_call.1} parent=1 // loop_exit
      _
    %4325 = vsyncpa [#allocation3], 1
    %s4326 = scalar_lea.sflag [#allocation3], 1
    %4327 = vsyncpa %s4326, 1
    %4328 = vsyncpa [#allocation6], 1
    %4329 = vsyncpa [#allocation9], 1
    %4330 = vsyncpa [#allocation4], 1
    %s4331 = scalar_lea.sflag [#allocation4], 1
    %4332 = vsyncpa %s4331, 1

</llo_original>
